<compile_context>
chip_gen: v5e
topology: v5e:2x2
jax: 0.10.0
libtpu: 0.0.40
codegen_flags: <defaults>
</compile_context>

<pallas_src>
import functools
import math

import jax
import jax.numpy as jnp
from jax.experimental import pallas as pl
from jax.experimental.pallas import tpu as pltpu


# ----------------------------------------------------------------------------
# Helpers
# ----------------------------------------------------------------------------
def _round_up(x, m):
    return ((x + m - 1) // m) * m


def _cparams(sem):
    return pltpu.CompilerParams(dimension_semantics=sem,
                                vmem_limit_bytes=32 * 1024 * 1024)


def _gelu_f32(x):
    # TODO(synk): HF BERT's default GELU is erf-based; tanh approximation is
    # used here (erf lowering in Mosaic is not guaranteed on all generations).
    c = 0.7978845608028654
    return 0.5 * x * (1.0 + jnp.tanh(c * (x + 0.044715 * x * x * x)))


def _layernorm_f32(y, g, b, eps):
    mu = jnp.mean(y, axis=-1, keepdims=True)
    yc = y - mu
    var = jnp.mean(yc * yc, axis=-1, keepdims=True)
    return yc * jax.lax.rsqrt(var + eps) * g + b


# ----------------------------------------------------------------------------
# Kernel A: merged per-point MLP (geom + app, block-diagonal weight) + ReLU
#           + per-object max-pool.  All f32 (coords never cast to bf16).
# ----------------------------------------------------------------------------
def _pointmlp_pool_kernel(x_ref, w_ref, b_ref, o_ref, *, K, P):
    x = x_ref[0]                                               # (N, 16) f32
    y = jnp.dot(x, w_ref[...], preferred_element_type=jnp.float32) + b_ref[...]
    y = jnp.maximum(y, 0.0)
    o_ref[0] = jnp.max(y.reshape(K, P, y.shape[-1]), axis=1)   # (K, C)


def pallas_pointmlp_maxpool(x, w, b, K):
    """x: (B, N, 16) f32 -> (B, K, C) f32 (relu(x@w+b) max-pooled per object)."""
    B, N, d_in = x.shape
    P = N // K
    C = w.shape[1]
    return pl.pallas_call(
        functools.partial(_pointmlp_pool_kernel, K=K, P=P),
        out_shape=jax.ShapeDtypeStruct((B, K, C), jnp.float32),
        grid=(B,),
        in_specs=[
            pl.BlockSpec((1, N, d_in), lambda bi: (bi, 0, 0)),
            pl.BlockSpec((d_in, C), lambda bi: (0, 0)),
            pl.BlockSpec((1, C), lambda bi: (0, 0)),
        ],
        out_specs=pl.BlockSpec((1, K, C), lambda bi: (bi, 0, 0)),
        compiler_params=_cparams(("parallel",)),
    )(x, w, b)


# ----------------------------------------------------------------------------
# Kernel B: spatial embedding + geo_ffn + app_ffn fused (tiny, f32).
# ----------------------------------------------------------------------------
def _fusion_embed_kernel(pool_ref, spat_ref, wsp_ref, bsp_ref,
                         wgeo_ref, bgeo_ref, wapp_ref, bapp_ref,
                         geo_ref, app_ref, *, geo_d):
    pooled = pool_ref[0]                                       # (K, geo_d+app_d)
    spat = spat_ref[0]                                         # (K, 8)
    sp = jnp.maximum(
        jnp.dot(spat, wsp_ref[...], preferred_element_type=jnp.float32)
        + bsp_ref[...], 0.0)                                   # (K, app_d)
    geo_in = jnp.concatenate([pooled[:, :geo_d], sp], axis=-1)
    geo = jnp.maximum(
        jnp.dot(geo_in, wgeo_ref[...], preferred_element_type=jnp.float32)
        + bgeo_ref[...], 0.0)
    app = jnp.maximum(
        jnp.dot(pooled[:, geo_d:], wapp_ref[...],
                preferred_element_type=jnp.float32) + bapp_ref[...], 0.0)
    geo_ref[0] = geo
    app_ref[0] = app


def pallas_fusion_embed(pooled, spat, params, cfg):
    B, K, C = pooled.shape
    H = cfg["hidden"]
    geo_d = cfg["geo_dim"]
    app_d = cfg["app_dim"]
    return pl.pallas_call(
        functools.partial(_fusion_embed_kernel, geo_d=geo_d),
        out_shape=(jax.ShapeDtypeStruct((B, K, H), jnp.float32),
                   jax.ShapeDtypeStruct((B, K, H), jnp.float32)),
        grid=(B,),
        in_specs=[
            pl.BlockSpec((1, K, C), lambda bi: (bi, 0, 0)),
            pl.BlockSpec((1, K, 8), lambda bi: (bi, 0, 0)),
            pl.BlockSpec((8, app_d), lambda bi: (0, 0)),
            pl.BlockSpec((1, app_d), lambda bi: (0, 0)),
            pl.BlockSpec((geo_d + app_d, H), lambda bi: (0, 0)),
            pl.BlockSpec((1, H), lambda bi: (0, 0)),
            pl.BlockSpec((app_d, H), lambda bi: (0, 0)),
            pl.BlockSpec((1, H), lambda bi: (0, 0)),
        ],
        out_specs=(pl.BlockSpec((1, K, H), lambda bi: (bi, 0, 0)),
                   pl.BlockSpec((1, K, H), lambda bi: (bi, 0, 0))),
        compiler_params=_cparams(("parallel",)),
    )(pooled, spat, params["sp_w"], params["sp_b"],
      params["geo_w"], params["geo_b"], params["app_w"], params["app_b"])


# ----------------------------------------------------------------------------
# Kernel C: the whole BERT encoder in ONE pallas_call.
#   grid = (B, L); residual stream kept in an f32 VMEM scratch across the
#   "arbitrary" L axis; embedding-LN fused at l == 0; output written at the
#   last layer only (output block index constant over L).
# ----------------------------------------------------------------------------
def _encoder_kernel(x0_ref, bias_ref,
                    wqkv_ref, bqkv_ref, wo_ref, bo_ref, g1_ref, be1_ref,
                    w1_ref, bf1_ref, w2_ref, bf2_ref, g2_ref, be2_ref,
                    eg_ref, eb_ref,
                    out_ref, h_sc, *, n_heads, head_d, eps):
    l = pl.program_id(1)

    @pl.when(l == 0)
    def _():
        # embedding LayerNorm -> f32 residual stream in VMEM scratch
        h_sc[...] = _layernorm_f32(x0_ref[0], eg_ref[...], eb_ref[...], eps)

    h = h_sc[...]                                              # (S, H) f32
    hb = h.astype(jnp.bfloat16)
    hdim = n_heads * head_d

    # --- fused QKV projection: one (S,H)@(H,3H) bf16 MXU GEMM -------------
    # (1/sqrt(head_d) is already folded into the Q columns of Wqkv at init.)
    qkv = jnp.dot(hb, wqkv_ref[0],
                  preferred_element_type=jnp.float32) + bqkv_ref[0]

    bias = bias_ref[0]                                         # (1, S) additive

    # --- attention: per-head scores/softmax, contexts concatenated on lanes,
    #     then ONE K=128 output-projection GEMM against the full Wo ---------
    ctxs = []
    for hh in range(n_heads):
        lo = hh * head_d
        q = qkv[:, lo:lo + head_d].astype(jnp.bfloat16)
        k = qkv[:, hdim + lo:hdim + lo + head_d].astype(jnp.bfloat16)
        v = qkv[:, 2 * hdim + lo:2 * hdim + lo + head_d].astype(jnp.bfloat16)
        # contract the head_dim axis directly (no transpose)
        s = jax.lax.dot_general(q, k, (((1,), (1,)), ((), ())),
                                preferred_element_type=jnp.float32)
        s = s + bias
        s = s - jnp.max(s, axis=-1, keepdims=True)
        p = jnp.exp(s)
        p = p / jnp.sum(p, axis=-1, keepdims=True)             # exact softmax
        ctxs.append(jnp.dot(p.astype(jnp.bfloat16), v,
                            preferred_element_type=jnp.float32))
    ctx = jnp.concatenate(ctxs, axis=-1)                       # (S, H)

    attn = jnp.dot(ctx.astype(jnp.bfloat16), wo_ref[0],
                   preferred_element_type=jnp.float32) + bo_ref[0]
    y = _layernorm_f32(h + attn, g1_ref[0], be1_ref[0], eps)

    # --- FFN: (S,H)@(H,F) + GELU + (S,F)@(F,H); intermediate never leaves
    #     VMEM.  TODO(synk): at real BERT sizes (H=768, F=3072) tile the F
    #     axis with an extra "arbitrary" grid dim to fit v7x's 64 MiB VMEM. --
    t = jnp.dot(y.astype(jnp.bfloat16), w1_ref[0],
                preferred_element_type=jnp.float32) + bf1_ref[0]
    t = _gelu_f32(t)
    z = jnp.dot(t.astype(jnp.bfloat16), w2_ref[0],
                preferred_element_type=jnp.float32) + bf2_ref[0]
    z = _layernorm_f32(y + z, g2_ref[0], be2_ref[0], eps)

    h_sc[...] = z

    @pl.when(l == pl.num_programs(1) - 1)
    def _():
        out_ref[0] = z.astype(out_ref.dtype)


def pallas_bert_encoder(h0, mask_bias, params, cfg):
    """h0: (B, S_pad, H) f32 pre-LN embeddings -> (B, S_pad, H) f32."""
    B, S, H = h0.shape
    Lnum = cfg["layers"]
    n_heads = cfg["heads"]
    head_d = H // n_heads
    F = cfg["ffn"]

    def wspec(shape):
        return pl.BlockSpec((1,) + shape, lambda b, l: (l, 0, 0))

    def bcast(shape):
        return pl.BlockSpec(shape, lambda b, l: (0,) * len(shape))

    return pl.pallas_call(
        functools.partial(_encoder_kernel, n_heads=n_heads, head_d=head_d,
                          eps=1e-12),
        out_shape=jax.ShapeDtypeStruct((B, S, H), jnp.float32),
        grid=(B, Lnum),
        in_specs=[
            pl.BlockSpec((1, S, H), lambda b, l: (b, 0, 0)),     # embeddings
            pl.BlockSpec((1, 1, S), lambda b, l: (b, 0, 0)),     # mask bias
            wspec((H, 3 * H)), wspec((1, 3 * H)),                # Wqkv, bqkv
            wspec((H, H)), wspec((1, H)),                        # Wo, bo
            wspec((1, H)), wspec((1, H)),                        # LN1 g, b
            wspec((H, F)), wspec((1, F)),                        # W1, b1
            wspec((F, H)), wspec((1, H)),                        # W2, b2
            wspec((1, H)), wspec((1, H)),                        # LN2 g, b
            bcast((1, H)), bcast((1, H)),                        # emb LN g, b
        ],
        out_specs=pl.BlockSpec((1, S, H), lambda b, l: (b, 0, 0)),
        scratch_shapes=[pltpu.VMEM((S, H), jnp.float32)],
        compiler_params=_cparams(("parallel", "arbitrary")),
    )(h0, mask_bias,
      params["wqkv"], params["bqkv"], params["wo"], params["bo"],
      params["ln1_g"], params["ln1_b"],
      params["w1"], params["bf1"], params["w2"], params["bf2"],
      params["ln2_g"], params["ln2_b"],
      params["emb_ln_g"], params["emb_ln_b"])


# ----------------------------------------------------------------------------
# Parameter init (deterministic, synthetic)
# ----------------------------------------------------------------------------
def init_params(key, cfg):
    H = cfg["hidden"]
    F = cfg["ffn"]
    Lnum = cfg["layers"]
    geo_d = cfg["geo_dim"]
    app_d = cfg["app_dim"]
    head_d = H // cfg["heads"]
    vocab = cfg["vocab"]

    keys = iter(jax.random.split(key, 512))

    def nrm(shape, scale=0.02):
        return scale * jax.random.normal(next(keys), shape, dtype=jnp.float32)

    # merged block-diagonal per-point MLP (geom 3->geo_d, app 6->app_d),
    # input feature dim padded to 16 lanes; stays f32.
    w_pt = jnp.zeros((16, geo_d + app_d), jnp.float32)
    w_pt = w_pt.at[0:3, :geo_d].set(nrm((3, geo_d)))
    w_pt = w_pt.at[8:14, geo_d:].set(nrm((6, app_d)))
    b_pt = jnp.zeros((1, geo_d + app_d), jnp.float32)

    # stacked per-layer transformer weights (leading L axis), MXU weights bf16.
    scale_q = 1.0 / math.sqrt(head_d)
    stacks = {k: [] for k in ["wqkv", "bqkv", "wo", "bo", "ln1_g", "ln1_b",
                              "w1", "bf1", "w2", "bf2", "ln2_g", "ln2_b"]}
    for _ in range(Lnum):
        wq, wk, wv = nrm((H, H)), nrm((H, H)), nrm((H, H))
        # fold 1/sqrt(head_d) into the Q columns -> no per-head scaling in-kernel
        stacks["wqkv"].append(jnp.concatenate([wq * scale_q, wk, wv], axis=1))
        stacks["bqkv"].append(jnp.zeros((1, 3 * H), jnp.float32))
        stacks["wo"].append(nrm((H, H)))
        stacks["bo"].append(jnp.zeros((1, H), jnp.float32))
        stacks["ln1_g"].append(jnp.ones((1, H), jnp.float32))
        stacks["ln1_b"].append(jnp.zeros((1, H), jnp.float32))
        stacks["w1"].append(nrm((H, F)))
        stacks["bf1"].append(jnp.zeros((1, F), jnp.float32))
        stacks["w2"].append(nrm((F, H)))
        stacks["bf2"].append(jnp.zeros((1, H), jnp.float32))
        stacks["ln2_g"].append(jnp.ones((1, H), jnp.float32))
        stacks["ln2_b"].append(jnp.zeros((1, H), jnp.float32))
    bf16_keys = {"wqkv", "wo", "w1", "w2"}
    layer_params = {
        k: jnp.stack(v).astype(jnp.bfloat16 if k in bf16_keys else jnp.float32)
        for k, v in stacks.items()}

    params = {
        # TODO(synk): GeometryEncoder / AppearanceEncoder internals are not in
        # the reference; synthetic per-point MLP + max-pool encoders are used.
        "pt_w": w_pt, "pt_b": b_pt,
        "sp_w": jnp.concatenate([nrm((6, app_d)),
                                 jnp.zeros((2, app_d), jnp.float32)], axis=0),
        "sp_b": jnp.zeros((1, app_d), jnp.float32),
        "geo_w": nrm((geo_d + app_d, H)),
        "geo_b": jnp.zeros((1, H), jnp.float32),
        "app_w": nrm((app_d, H)),
        "app_b": jnp.zeros((1, H), jnp.float32),
        "cls_token": nrm((1, 1, H), 1.0),
        # synthetic BERT weights (not a pretrained checkpoint)
        "word_emb": nrm((vocab, H)),
        "pos_emb": nrm((cfg["max_pos"], H)),
        "type_emb": nrm((2, H)),
        "emb_ln_g": jnp.ones((1, H), jnp.float32),
        "emb_ln_b": jnp.zeros((1, H), jnp.float32),
        "pool_w": nrm((H, H)),
        "pool_b": jnp.zeros((H,), jnp.float32),
        "cls_w": nrm((H, cfg["num_classes"])),
        "cls_b": jnp.zeros((cfg["num_classes"],), jnp.float32),
    }
    params.update(layer_params)
    return params


# ----------------------------------------------------------------------------
# Forward pass
# ----------------------------------------------------------------------------
def three_dl_bert_forward(params, pointcloud, scene_range, input_ids,
                          attention_mask, cfg):
    B, N, _ = pointcloud.shape
    H = cfg["hidden"]
    K = cfg["num_objects"]
    P = N // K

    xyz = pointcloud[..., :3]
    lo_r = scene_range[:, :3][:, None, :]
    hi_r = scene_range[:, 3:][:, None, :]
    xyz_n = (xyz - lo_r) / (hi_r - lo_r + 1e-6)

    # -------- merged geometry+appearance per-point encoder (one kernel) -----
    pt_in = jnp.zeros((B, N, 16), jnp.float32)
    pt_in = pt_in.at[..., 0:3].set(xyz_n)
    pt_in = pt_in.at[..., 8:14].set(pointcloud)
    pooled_feats = pallas_pointmlp_maxpool(
        pt_in, params["pt_w"], params["pt_b"], K)            # (B,K,geo_d+app_d)

    # per-object spatial stats (tiny elementwise/reduce ops; plain XLA)
    obj_xyz = xyz_n.reshape(B, K, P, 3)
    center = jnp.mean(obj_xyz, axis=2)
    extent = jnp.max(obj_xyz, axis=2) - jnp.min(obj_xyz, axis=2)
    spat = jnp.concatenate([center, extent], axis=-1)        # (B,K,6)
    spat = jnp.pad(spat, ((0, 0), (0, 0), (0, 2)))           # lane-pad to 8

    # spatial embedding + geo_ffn + app_ffn fused (one kernel)
    geo_emb, app_emb = pallas_fusion_embed(pooled_feats, spat, params, cfg)

    # -------- fuse into the linguistic sequence -----------------------------
    token_emb = jnp.take(params["word_emb"], input_ids, axis=0)      # (B,L,H)
    cls_emb = jnp.broadcast_to(params["cls_token"], (B, 1, H))
    sep_emb = jnp.broadcast_to(
        params["word_emb"][cfg["sep_id"]][None, None, :], (B, 1, H))
    seq = jnp.concatenate([cls_emb, geo_emb, app_emb, sep_emb, token_emb],
                          axis=1)                                    # (B,S,H)

    modal_mask = jnp.ones((B, 1 + K + K + 1), dtype=attention_mask.dtype)
    seq_mask = jnp.concatenate([modal_mask, attention_mask], axis=1)

    # pad S once (review item 4); padded keys are masked, padded rows unused
    S = seq.shape[1]
    S_pad = max(_round_up(S, 16), 16)
    seq = jnp.pad(seq, ((0, 0), (0, S_pad - S), (0, 0)))
    seq_mask = jnp.pad(seq_mask, ((0, 0), (0, S_pad - S)))
    mask_bias = ((1.0 - seq_mask.astype(jnp.float32)) * -1e9)[:, None, :]

    # embeddings sum; the embedding LayerNorm is fused inside the encoder.
    # (HF BertModel defaults token_type_ids to zeros for inputs_embeds.)
    h0 = seq + params["pos_emb"][:S_pad][None] + params["type_emb"][0][None, None]

    h = pallas_bert_encoder(h0, mask_bias, params, cfg)              # (B,S_pad,H)

    # pooler + classifier: (2,128) matmuls / 5-lane output -> plain XLA
    pooled_cls = jnp.tanh(h[:, 0, :] @ params["pool_w"] + params["pool_b"])
    logits = pooled_cls @ params["cls_w"] + params["cls_b"]
    return logits


# ----------------------------------------------------------------------------
# Example run
# ----------------------------------------------------------------------------
if __name__ == "__main__":
    cfg = dict(
        hidden=128, heads=2, ffn=256, layers=2,
        vocab=100, max_pos=64, sep_id=3,
        num_objects=8, geo_dim=128, app_dim=128, num_classes=5,
    )

    key = jax.random.PRNGKey(0)
    k_param, k_pc, k_ids = jax.random.split(key, 3)

    B, N, Ltext = 2, 128, 8
    params = init_params(k_param, cfg)

    pointcloud = jax.random.uniform(k_pc, (B, N, 6), dtype=jnp.float32)
    xyz = pointcloud[..., :3]
    scene_range = jnp.concatenate(
        [jnp.min(xyz, axis=1), jnp.max(xyz, axis=1)], axis=-1)       # (B,6)
    input_ids = jax.random.randint(k_ids, (B, Ltext), 0, cfg["vocab"],
                                   dtype=jnp.int32)
    lengths = jnp.array([[8], [6]], dtype=jnp.int32)
    attention_mask = (jnp.arange(Ltext)[None, :] < lengths).astype(jnp.int32)

    fwd = jax.jit(functools.partial(three_dl_bert_forward, cfg=cfg))
    logits = fwd(params, pointcloud, scene_range, input_ids, attention_mask)
    jax.block_until_ready(logits)
    assert logits.shape == (B, cfg["num_classes"])
    print("KERNEL_OK")
</pallas_src>

<mosaic_0001>
module attributes {stable_mosaic.version = 11 : i64} {
  func.func @_pointmlp_pool_kernel(%arg0: i32, %arg1: memref<1x128x16xf32, #tpu.memory_space<vmem>>, %arg2: memref<16x256xf32, #tpu.memory_space<vmem>>, %arg3: memref<1x256xf32, #tpu.memory_space<vmem>>, %arg4: memref<1x8x256xf32, #tpu.memory_space<vmem>>) attributes {dimension_semantics = [#tpu.dimension_semantics<parallel>], iteration_bounds = array<i64: 2>, scalar_prefetch = 0 : i64, scratch_operands = 0 : i64, tpu.core_type = #tpu.core_type<tc>, window_params = [{transform_indices = @transform_0, window_bounds = array<i64: 1, 128, 16>}, {pipeline_mode = #tpu.pipeline_mode<synchronous>, transform_indices = @transform_1, window_bounds = array<i64: 16, 256>}, {pipeline_mode = #tpu.pipeline_mode<synchronous>, transform_indices = @transform_2, window_bounds = array<i64: 1, 256>}, {transform_indices = @transform_3, window_bounds = array<i64: 1, 8, 256>}]} {
    %c0 = arith.constant 0 : index
    %c0_0 = arith.constant 0 : index
    %c0_1 = arith.constant 0 : index
    %0 = vector.load %arg1[%c0, %c0_0, %c0_1] : memref<1x128x16xf32, #tpu.memory_space<vmem>>, vector<1x128x16xf32>
    %1 = vector.shape_cast %0 : vector<1x128x16xf32> to vector<128x16xf32>
    %c0_2 = arith.constant 0 : index
    %c0_3 = arith.constant 0 : index
    %2 = vector.load %arg2[%c0_2, %c0_3] : memref<16x256xf32, #tpu.memory_space<vmem>>, vector<16x256xf32>
    %cst = arith.constant dense<0.000000e+00> : vector<128x256xf32>
    %3 = tpu.matmul %1, %2, %cst {dimension_numbers = #tpu.dot_dimension_numbers<[1], [0], [0], [1], [0, 0, 1, 1], [], []>} : vector<128x16xf32>, vector<16x256xf32>, vector<128x256xf32> -> vector<128x256xf32>
    %c0_4 = arith.constant 0 : index
    %c0_5 = arith.constant 0 : index
    %4 = vector.load %arg3[%c0_4, %c0_5] : memref<1x256xf32, #tpu.memory_space<vmem>>, vector<1x256xf32>
    %5 = vector.broadcast %4 : vector<1x256xf32> to vector<128x256xf32>
    %6 = arith.addf %3, %5 : vector<128x256xf32>
    %cst_6 = arith.constant 0.000000e+00 : f32
    %7 = vector.broadcast %cst_6 : f32 to vector<128x256xf32>
    %8 = arith.maximumf %6, %7 : vector<128x256xf32>
    %9 = vector.shape_cast %8 : vector<128x256xf32> to vector<8x16x256xf32>
    %cst_7 = arith.constant dense<0xFF800000> : vector<8x256xf32>
    %10 = vector.multi_reduction <maximumf>, %9, %cst_7 [1] : vector<8x16x256xf32> to vector<8x256xf32>
    %c0_8 = arith.constant 0 : index
    %c0_9 = arith.constant 0 : index
    %c0_10 = arith.constant 0 : index
    %11 = vector.load %arg4[%c0_8, %c0_9, %c0_10] : memref<1x8x256xf32, #tpu.memory_space<vmem>>, vector<1x8x256xf32>
    %12 = vector.shape_cast %11 : vector<1x8x256xf32> to vector<8x256xf32>
    %13 = vector.shape_cast %10 : vector<8x256xf32> to vector<1x8x256xf32>
    tpu.vector_store %arg4[%c0_8, %c0_9, %c0_10], %13 {strides = array<i32>} : memref<1x8x256xf32, #tpu.memory_space<vmem>>, vector<1x8x256xf32>,
    return
  }
  func.func @transform_0(%arg0: i32) -> (i32, i32, i32) {
    %c0_i32 = arith.constant 0 : i32
    %c0_i32_0 = arith.constant 0 : i32
    %c0_i32_1 = arith.constant 0 : i32
    return %arg0, %c0_i32, %c0_i32_0 : i32, i32, i32
  }
  func.func @transform_1(%arg0: i32) -> (i32, i32) {
    %c0_i32 = arith.constant 0 : i32
    %c0_i32_0 = arith.constant 0 : i32
    %c0_i32_1 = arith.constant 0 : i32
    return %c0_i32, %c0_i32_0 : i32, i32
  }
  func.func @transform_2(%arg0: i32) -> (i32, i32) {
    %c0_i32 = arith.constant 0 : i32
    %c0_i32_0 = arith.constant 0 : i32
    %c0_i32_1 = arith.constant 0 : i32
    return %c0_i32, %c0_i32_0 : i32, i32
  }
  func.func @transform_3(%arg0: i32) -> (i32, i32, i32) {
    %c0_i32 = arith.constant 0 : i32
    %c0_i32_0 = arith.constant 0 : i32
    %c0_i32_1 = arith.constant 0 : i32
    return %arg0, %c0_i32, %c0_i32_0 : i32, i32, i32
  }
}

module attributes {stable_mosaic.version = 11 : i64} {
  func.func @_fusion_embed_kernel(%arg0: i32, %arg1: memref<1x8x256xf32, #tpu.memory_space<vmem>>, %arg2: memref<1x8x8xf32, #tpu.memory_space<vmem>>, %arg3: memref<8x128xf32, #tpu.memory_space<vmem>>, %arg4: memref<1x128xf32, #tpu.memory_space<vmem>>, %arg5: memref<256x128xf32, #tpu.memory_space<vmem>>, %arg6: memref<1x128xf32, #tpu.memory_space<vmem>>, %arg7: memref<128x128xf32, #tpu.memory_space<vmem>>, %arg8: memref<1x128xf32, #tpu.memory_space<vmem>>, %arg9: memref<1x8x128xf32, #tpu.memory_space<vmem>>, %arg10: memref<1x8x128xf32, #tpu.memory_space<vmem>>) attributes {dimension_semantics = [#tpu.dimension_semantics<parallel>], iteration_bounds = array<i64: 2>, scalar_prefetch = 0 : i64, scratch_operands = 0 : i64, tpu.core_type = #tpu.core_type<tc>, window_params = [{transform_indices = @transform_0, window_bounds = array<i64: 1, 8, 256>}, {transform_indices = @transform_1, window_bounds = array<i64: 1, 8, 8>}, {pipeline_mode = #tpu.pipeline_mode<synchronous>, transform_indices = @transform_2, window_bounds = array<i64: 8, 128>}, {pipeline_mode = #tpu.pipeline_mode<synchronous>, transform_indices = @transform_3, window_bounds = array<i64: 1, 128>}, {pipeline_mode = #tpu.pipeline_mode<synchronous>, transform_indices = @transform_4, window_bounds = array<i64: 256, 128>}, {pipeline_mode = #tpu.pipeline_mode<synchronous>, transform_indices = @transform_5, window_bounds = array<i64: 1, 128>}, {pipeline_mode = #tpu.pipeline_mode<synchronous>, transform_indices = @transform_6, window_bounds = array<i64: 128, 128>}, {pipeline_mode = #tpu.pipeline_mode<synchronous>, transform_indices = @transform_7, window_bounds = array<i64: 1, 128>}, {transform_indices = @transform_8, window_bounds = array<i64: 1, 8, 128>}, {transform_indices = @transform_9, window_bounds = array<i64: 1, 8, 128>}]} {
    %c0 = arith.constant 0 : index
    %c0_0 = arith.constant 0 : index
    %c0_1 = arith.constant 0 : index
    %0 = vector.load %arg1[%c0, %c0_0, %c0_1] : memref<1x8x256xf32, #tpu.memory_space<vmem>>, vector<1x8x256xf32>
    %1 = vector.shape_cast %0 : vector<1x8x256xf32> to vector<8x256xf32>
    %c0_2 = arith.constant 0 : index
    %c0_3 = arith.constant 0 : index
    %c0_4 = arith.constant 0 : index
    %2 = vector.load %arg2[%c0_2, %c0_3, %c0_4] : memref<1x8x8xf32, #tpu.memory_space<vmem>>, vector<1x8x8xf32>
    %3 = vector.shape_cast %2 : vector<1x8x8xf32> to vector<8x8xf32>
    %c0_5 = arith.constant 0 : index
    %c0_6 = arith.constant 0 : index
    %4 = vector.load %arg3[%c0_5, %c0_6] : memref<8x128xf32, #tpu.memory_space<vmem>>, vector<8x128xf32>
    %cst = arith.constant dense<0.000000e+00> : vector<8x128xf32>
    %5 = tpu.matmul %3, %4, %cst {dimension_numbers = #tpu.dot_dimension_numbers<[1], [0], [0], [1], [0, 0, 1, 1], [], []>} : vector<8x8xf32>, vector<8x128xf32>, vector<8x128xf32> -> vector<8x128xf32>
    %c0_7 = arith.constant 0 : index
    %c0_8 = arith.constant 0 : index
    %6 = vector.load %arg4[%c0_7, %c0_8] : memref<1x128xf32, #tpu.memory_space<vmem>>, vector<1x128xf32>
    %7 = vector.broadcast %6 : vector<1x128xf32> to vector<8x128xf32>
    %8 = arith.addf %5, %7 : vector<8x128xf32>
    %cst_9 = arith.constant 0.000000e+00 : f32
    %9 = vector.broadcast %cst_9 : f32 to vector<8x128xf32>
    %10 = arith.maximumf %8, %9 : vector<8x128xf32>
    %11 = vector.extract_strided_slice %1 {offsets = [0, 0], sizes = [8, 128], strides = [1, 1]} : vector<8x256xf32> to vector<8x128xf32>
    %12 = tpu.concatenate %11, %10 in 1 : vector<8x128xf32>, vector<8x128xf32> -> vector<8x256xf32>
    %c0_10 = arith.constant 0 : index
    %c0_11 = arith.constant 0 : index
    %13 = vector.load %arg5[%c0_10, %c0_11] : memref<256x128xf32, #tpu.memory_space<vmem>>, vector<256x128xf32>
    %cst_12 = arith.constant dense<0.000000e+00> : vector<8x128xf32>
    %14 = tpu.matmul %12, %13, %cst_12 {dimension_numbers = #tpu.dot_dimension_numbers<[1], [0], [0], [1], [0, 0, 1, 1], [], []>} : vector<8x256xf32>, vector<256x128xf32>, vector<8x128xf32> -> vector<8x128xf32>
    %c0_13 = arith.constant 0 : index
    %c0_14 = arith.constant 0 : index
    %15 = vector.load %arg6[%c0_13, %c0_14] : memref<1x128xf32, #tpu.memory_space<vmem>>, vector<1x128xf32>
    %16 = vector.broadcast %15 : vector<1x128xf32> to vector<8x128xf32>
    %17 = arith.addf %14, %16 : vector<8x128xf32>
    %cst_15 = arith.constant 0.000000e+00 : f32
    %18 = vector.broadcast %cst_15 : f32 to vector<8x128xf32>
    %19 = arith.maximumf %17, %18 : vector<8x128xf32>
    %20 = vector.extract_strided_slice %1 {offsets = [0, 128], sizes = [8, 128], strides = [1, 1]} : vector<8x256xf32> to vector<8x128xf32>
    %c0_16 = arith.constant 0 : index
    %c0_17 = arith.constant 0 : index
    %21 = vector.load %arg7[%c0_16, %c0_17] : memref<128x128xf32, #tpu.memory_space<vmem>>, vector<128x128xf32>
    %cst_18 = arith.constant dense<0.000000e+00> : vector<8x128xf32>
    %22 = tpu.matmul %20, %21, %cst_18 {dimension_numbers = #tpu.dot_dimension_numbers<[1], [0], [0], [1], [0, 0, 1, 1], [], []>} : vector<8x128xf32>, vector<128x128xf32>, vector<8x128xf32> -> vector<8x128xf32>
    %c0_19 = arith.constant 0 : index
    %c0_20 = arith.constant 0 : index
    %23 = vector.load %arg8[%c0_19, %c0_20] : memref<1x128xf32, #tpu.memory_space<vmem>>, vector<1x128xf32>
    %24 = vector.broadcast %23 : vector<1x128xf32> to vector<8x128xf32>
    %25 = arith.addf %22, %24 : vector<8x128xf32>
    %cst_21 = arith.constant 0.000000e+00 : f32
    %26 = vector.broadcast %cst_21 : f32 to vector<8x128xf32>
    %27 = arith.maximumf %25, %26 : vector<8x128xf32>
    %c0_22 = arith.constant 0 : index
    %c0_23 = arith.constant 0 : index
    %c0_24 = arith.constant 0 : index
    %28 = vector.load %arg9[%c0_22, %c0_23, %c0_24] : memref<1x8x128xf32, #tpu.memory_space<vmem>>, vector<1x8x128xf32>
    %29 = vector.shape_cast %28 : vector<1x8x128xf32> to vector<8x128xf32>
    %30 = vector.shape_cast %19 : vector<8x128xf32> to vector<1x8x128xf32>
    tpu.vector_store %arg9[%c0_22, %c0_23, %c0_24], %30 {strides = array<i32>} : memref<1x8x128xf32, #tpu.memory_space<vmem>>, vector<1x8x128xf32>,
    %c0_25 = arith.constant 0 : index
    %c0_26 = arith.constant 0 : index
    %c0_27 = arith.constant 0 : index
    %31 = vector.load %arg10[%c0_25, %c0_26, %c0_27] : memref<1x8x128xf32, #tpu.memory_space<vmem>>, vector<1x8x128xf32>
    %32 = vector.shape_cast %31 : vector<1x8x128xf32> to vector<8x128xf32>
    %33 = vector.shape_cast %27 : vector<8x128xf32> to vector<1x8x128xf32>
    tpu.vector_store %arg10[%c0_25, %c0_26, %c0_27], %33 {strides = array<i32>} : memref<1x8x128xf32, #tpu.memory_space<vmem>>, vector<1x8x128xf32>,
    return
  }
  func.func @transform_0(%arg0: i32) -> (i32, i32, i32) {
    %c0_i32 = arith.constant 0 : i32
    %c0_i32_0 = arith.constant 0 : i32
    %c0_i32_1 = arith.constant 0 : i32
    return %arg0, %c0_i32, %c0_i32_0 : i32, i32, i32
  }
  func.func @transform_1(%arg0: i32) -> (i32, i32, i32) {
    %c0_i32 = arith.constant 0 : i32
    %c0_i32_0 = arith.constant 0 : i32
    %c0_i32_1 = arith.constant 0 : i32
    return %arg0, %c0_i32, %c0_i32_0 : i32, i32, i32
  }
  func.func @transform_2(%arg0: i32) -> (i32, i32) {
    %c0_i32 = arith.constant 0 : i32
    %c0_i32_0 = arith.constant 0 : i32
    %c0_i32_1 = arith.constant 0 : i32
    return %c0_i32, %c0_i32_0 : i32, i32
  }
  func.func @transform_3(%arg0: i32) -> (i32, i32) {
    %c0_i32 = arith.constant 0 : i32
    %c0_i32_0 = arith.constant 0 : i32
    %c0_i32_1 = arith.constant 0 : i32
    return %c0_i32, %c0_i32_0 : i32, i32
  }
  func.func @transform_4(%arg0: i32) -> (i32, i32) {
    %c0_i32 = arith.constant 0 : i32
    %c0_i32_0 = arith.constant 0 : i32
    %c0_i32_1 = arith.constant 0 : i32
    return %c0_i32, %c0_i32_0 : i32, i32
  }
  func.func @transform_5(%arg0: i32) -> (i32, i32) {
    %c0_i32 = arith.constant 0 : i32
    %c0_i32_0 = arith.constant 0 : i32
    %c0_i32_1 = arith.constant 0 : i32
    return %c0_i32, %c0_i32_0 : i32, i32
  }
  func.func @transform_6(%arg0: i32) -> (i32, i32) {
    %c0_i32 = arith.constant 0 : i32
    %c0_i32_0 = arith.constant 0 : i32
    %c0_i32_1 = arith.constant 0 : i32
    return %c0_i32, %c0_i32_0 : i32, i32
  }
  func.func @transform_7(%arg0: i32) -> (i32, i32) {
    %c0_i32 = arith.constant 0 : i32
    %c0_i32_0 = arith.constant 0 : i32
    %c0_i32_1 = arith.constant 0 : i32
    return %c0_i32, %c0_i32_0 : i32, i32
  }
  func.func @transform_8(%arg0: i32) -> (i32, i32, i32) {
    %c0_i32 = arith.constant 0 : i32
    %c0_i32_0 = arith.constant 0 : i32
    %c0_i32_1 = arith.constant 0 : i32
    return %arg0, %c0_i32, %c0_i32_0 : i32, i32, i32
  }
  func.func @transform_9(%arg0: i32) -> (i32, i32, i32) {
    %c0_i32 = arith.constant 0 : i32
    %c0_i32_0 = arith.constant 0 : i32
    %c0_i32_1 = arith.constant 0 : i32
    return %arg0, %c0_i32, %c0_i32_0 : i32, i32, i32
  }
}

module attributes {stable_mosaic.version = 11 : i64} {
  func.func @_encoder_kernel(%arg0: i32, %arg1: i32, %arg2: memref<1x32x128xf32, #tpu.memory_space<vmem>>, %arg3: memref<1x1x32xf32, #tpu.memory_space<vmem>>, %arg4: memref<1x128x384xbf16, #tpu.memory_space<vmem>>, %arg5: memref<1x1x384xf32, #tpu.memory_space<vmem>>, %arg6: memref<1x128x128xbf16, #tpu.memory_space<vmem>>, %arg7: memref<1x1x128xf32, #tpu.memory_space<vmem>>, %arg8: memref<1x1x128xf32, #tpu.memory_space<vmem>>, %arg9: memref<1x1x128xf32, #tpu.memory_space<vmem>>, %arg10: memref<1x128x256xbf16, #tpu.memory_space<vmem>>, %arg11: memref<1x1x256xf32, #tpu.memory_space<vmem>>, %arg12: memref<1x256x128xbf16, #tpu.memory_space<vmem>>, %arg13: memref<1x1x128xf32, #tpu.memory_space<vmem>>, %arg14: memref<1x1x128xf32, #tpu.memory_space<vmem>>, %arg15: memref<1x1x128xf32, #tpu.memory_space<vmem>>, %arg16: memref<1x128xf32, #tpu.memory_space<vmem>>, %arg17: memref<1x128xf32, #tpu.memory_space<vmem>>, %arg18: memref<1x32x128xf32, #tpu.memory_space<vmem>>, %arg19: memref<32x128xf32, #tpu.memory_space<vmem>>) attributes {dimension_semantics = [#tpu.dimension_semantics<parallel>, #tpu.dimension_semantics<arbitrary>], iteration_bounds = array<i64: 2, 2>, scalar_prefetch = 0 : i64, scratch_operands = 1 : i64, tpu.core_type = #tpu.core_type<tc>, window_params = [{transform_indices = @transform_0, window_bounds = array<i64: 1, 32, 128>}, {transform_indices = @transform_1, window_bounds = array<i64: 1, 1, 32>}, {transform_indices = @transform_2, window_bounds = array<i64: 1, 128, 384>}, {transform_indices = @transform_3, window_bounds = array<i64: 1, 1, 384>}, {transform_indices = @transform_4, window_bounds = array<i64: 1, 128, 128>}, {transform_indices = @transform_5, window_bounds = array<i64: 1, 1, 128>}, {transform_indices = @transform_6, window_bounds = array<i64: 1, 1, 128>}, {transform_indices = @transform_7, window_bounds = array<i64: 1, 1, 128>}, {transform_indices = @transform_8, window_bounds = array<i64: 1, 128, 256>}, {transform_indices = @transform_9, window_bounds = array<i64: 1, 1, 256>}, {transform_indices = @transform_10, window_bounds = array<i64: 1, 256, 128>}, {transform_indices = @transform_11, window_bounds = array<i64: 1, 1, 128>}, {transform_indices = @transform_12, window_bounds = array<i64: 1, 1, 128>}, {transform_indices = @transform_13, window_bounds = array<i64: 1, 1, 128>}, {pipeline_mode = #tpu.pipeline_mode<synchronous>, transform_indices = @transform_14, window_bounds = array<i64: 1, 128>}, {pipeline_mode = #tpu.pipeline_mode<synchronous>, transform_indices = @transform_15, window_bounds = array<i64: 1, 128>}, {transform_indices = @transform_16, window_bounds = array<i64: 1, 32, 128>}]} {
    %c0_i32 = arith.constant 0 : i32
    %0 = arith.cmpi eq, %arg1, %c0_i32 : i32
    %1 = arith.extui %0 : i1 to i32
    %c0_i32_0 = arith.constant 0 : i32
    %2 = arith.cmpi ne, %1, %c0_i32_0 : i32
    scf.if %2 {
      %c0_69 = arith.constant 0 : index
      %c0_70 = arith.constant 0 : index
      %c0_71 = arith.constant 0 : index
      %146 = vector.load %arg2[%c0_69, %c0_70, %c0_71] : memref<1x32x128xf32, #tpu.memory_space<vmem>>, vector<1x32x128xf32>
      %147 = vector.shape_cast %146 : vector<1x32x128xf32> to vector<32x128xf32>
      %c0_72 = arith.constant 0 : index
      %c0_73 = arith.constant 0 : index
      %148 = vector.load %arg16[%c0_72, %c0_73] : memref<1x128xf32, #tpu.memory_space<vmem>>, vector<1x128xf32>
      %c0_74 = arith.constant 0 : index
      %c0_75 = arith.constant 0 : index
      %149 = vector.load %arg17[%c0_74, %c0_75] : memref<1x128xf32, #tpu.memory_space<vmem>>, vector<1x128xf32>
      %cst_76 = arith.constant dense<0.000000e+00> : vector<32xf32>
      %150 = vector.multi_reduction <add>, %147, %cst_76 [1] : vector<32x128xf32> to vector<32xf32>
      %151 = vector.shape_cast %150 : vector<32xf32> to vector<32x1xf32>
      %cst_77 = arith.constant 1.280000e+02 : f32
      %152 = vector.broadcast %cst_77 : f32 to vector<32x1xf32>
      %153 = arith.divf %151, %152 : vector<32x1xf32>
      %154 = vector.broadcast %153 : vector<32x1xf32> to vector<32x128xf32>
      %155 = arith.subf %147, %154 : vector<32x128xf32>
      %156 = arith.mulf %155, %155 : vector<32x128xf32>
      %cst_78 = arith.constant dense<0.000000e+00> : vector<32xf32>
      %157 = vector.multi_reduction <add>, %156, %cst_78 [1] : vector<32x128xf32> to vector<32xf32>
      %158 = vector.shape_cast %157 : vector<32xf32> to vector<32x1xf32>
      %cst_79 = arith.constant 1.280000e+02 : f32
      %159 = vector.broadcast %cst_79 : f32 to vector<32x1xf32>
      %160 = arith.divf %158, %159 : vector<32x1xf32>
      %cst_80 = arith.constant 9.99999996E-13 : f32
      %161 = vector.broadcast %cst_80 : f32 to vector<32x1xf32>
      %162 = arith.addf %160, %161 : vector<32x1xf32>
      %163 = math.rsqrt %162 : vector<32x1xf32>
      %164 = vector.broadcast %163 : vector<32x1xf32> to vector<32x128xf32>
      %165 = arith.mulf %155, %164 : vector<32x128xf32>
      %166 = vector.broadcast %148 : vector<1x128xf32> to vector<32x128xf32>
      %167 = arith.mulf %165, %166 : vector<32x128xf32>
      %168 = vector.broadcast %149 : vector<1x128xf32> to vector<32x128xf32>
      %169 = arith.addf %167, %168 : vector<32x128xf32>
      %c0_81 = arith.constant 0 : index
      %c0_82 = arith.constant 0 : index
      %170 = vector.load %arg19[%c0_81, %c0_82] : memref<32x128xf32, #tpu.memory_space<vmem>>, vector<32x128xf32>
      tpu.vector_store %arg19[%c0_81, %c0_82], %169 {strides = array<i32>} : memref<32x128xf32, #tpu.memory_space<vmem>>, vector<32x128xf32>,
    } else {
    }
    %c0 = arith.constant 0 : index
    %c0_1 = arith.constant 0 : index
    %3 = vector.load %arg19[%c0, %c0_1] : memref<32x128xf32, #tpu.memory_space<vmem>>, vector<32x128xf32>
    %4 = arith.truncf %3 : vector<32x128xf32> to vector<32x128xbf16>
    %c0_2 = arith.constant 0 : index
    %c0_3 = arith.constant 0 : index
    %c0_4 = arith.constant 0 : index
    %5 = vector.load %arg4[%c0_2, %c0_3, %c0_4] : memref<1x128x384xbf16, #tpu.memory_space<vmem>>, vector<1x128x384xbf16>
    %6 = vector.shape_cast %5 : vector<1x128x384xbf16> to vector<128x384xbf16>
    %cst = arith.constant dense<0.000000e+00> : vector<32x384xf32>
    %7 = tpu.matmul %4, %6, %cst {dimension_numbers = #tpu.dot_dimension_numbers<[1], [0], [0], [1], [0, 0, 1, 1], [], []>} : vector<32x128xbf16>, vector<128x384xbf16>, vector<32x384xf32> -> vector<32x384xf32>
    %c0_5 = arith.constant 0 : index
    %c0_6 = arith.constant 0 : index
    %c0_7 = arith.constant 0 : index
    %8 = vector.load %arg5[%c0_5, %c0_6, %c0_7] : memref<1x1x384xf32, #tpu.memory_space<vmem>>, vector<1x1x384xf32>
    %9 = vector.shape_cast %8 : vector<1x1x384xf32> to vector<1x384xf32>
    %10 = vector.broadcast %9 : vector<1x384xf32> to vector<32x384xf32>
    %11 = arith.addf %7, %10 : vector<32x384xf32>
    %c0_8 = arith.constant 0 : index
    %c0_9 = arith.constant 0 : index
    %c0_10 = arith.constant 0 : index
    %12 = vector.load %arg3[%c0_8, %c0_9, %c0_10] : memref<1x1x32xf32, #tpu.memory_space<vmem>>, vector<1x1x32xf32>
    %13 = vector.shape_cast %12 : vector<1x1x32xf32> to vector<1x32xf32>
    %14 = vector.extract_strided_slice %11 {offsets = [0, 0], sizes = [32, 64], strides = [1, 1]} : vector<32x384xf32> to vector<32x64xf32>
    %15 = arith.truncf %14 : vector<32x64xf32> to vector<32x64xbf16>
    %16 = vector.extract_strided_slice %11 {offsets = [0, 128], sizes = [32, 64], strides = [1, 1]} : vector<32x384xf32> to vector<32x64xf32>
    %17 = arith.truncf %16 : vector<32x64xf32> to vector<32x64xbf16>
    %18 = vector.extract_strided_slice %11 {offsets = [0, 256], sizes = [32, 64], strides = [1, 1]} : vector<32x384xf32> to vector<32x64xf32>
    %19 = arith.truncf %18 : vector<32x64xf32> to vector<32x64xbf16>
    %cst_11 = arith.constant dense<0.000000e+00> : vector<32x32xf32>
    %20 = tpu.matmul %15, %17, %cst_11 {dimension_numbers = #tpu.dot_dimension_numbers<[1], [1], [0], [0], [0, 0, 1, 0], [], []>} : vector<32x64xbf16>, vector<32x64xbf16>, vector<32x32xf32> -> vector<32x32xf32>
    %21 = vector.broadcast %13 : vector<1x32xf32> to vector<32x32xf32>
    %22 = arith.addf %20, %21 : vector<32x32xf32>
    %cst_12 = arith.constant dense<0xFF800000> : vector<32xf32>
    %23 = vector.multi_reduction <maximumf>, %22, %cst_12 [1] : vector<32x32xf32> to vector<32xf32>
    %24 = vector.shape_cast %23 : vector<32xf32> to vector<32x1xf32>
    %25 = vector.broadcast %24 : vector<32x1xf32> to vector<32x32xf32>
    %26 = arith.subf %22, %25 : vector<32x32xf32>
    %27 = math.exp %26 : vector<32x32xf32>
    %cst_13 = arith.constant dense<0.000000e+00> : vector<32xf32>
    %28 = vector.multi_reduction <add>, %27, %cst_13 [1] : vector<32x32xf32> to vector<32xf32>
    %29 = vector.shape_cast %28 : vector<32xf32> to vector<32x1xf32>
    %30 = vector.broadcast %29 : vector<32x1xf32> to vector<32x32xf32>
    %31 = arith.divf %27, %30 : vector<32x32xf32>
    %32 = arith.truncf %31 : vector<32x32xf32> to vector<32x32xbf16>
    %cst_14 = arith.constant dense<0.000000e+00> : vector<32x64xf32>
    %33 = tpu.matmul %32, %19, %cst_14 {dimension_numbers = #tpu.dot_dimension_numbers<[1], [0], [0], [1], [0, 0, 1, 1], [], []>} : vector<32x32xbf16>, vector<32x64xbf16>, vector<32x64xf32> -> vector<32x64xf32>
    %34 = vector.extract_strided_slice %11 {offsets = [0, 64], sizes = [32, 64], strides = [1, 1]} : vector<32x384xf32> to vector<32x64xf32>
    %35 = arith.truncf %34 : vector<32x64xf32> to vector<32x64xbf16>
    %36 = vector.extract_strided_slice %11 {offsets = [0, 192], sizes = [32, 64], strides = [1, 1]} : vector<32x384xf32> to vector<32x64xf32>
    %37 = arith.truncf %36 : vector<32x64xf32> to vector<32x64xbf16>
    %38 = vector.extract_strided_slice %11 {offsets = [0, 320], sizes = [32, 64], strides = [1, 1]} : vector<32x384xf32> to vector<32x64xf32>
    %39 = arith.truncf %38 : vector<32x64xf32> to vector<32x64xbf16>
    %cst_15 = arith.constant dense<0.000000e+00> : vector<32x32xf32>
    %40 = tpu.matmul %35, %37, %cst_15 {dimension_numbers = #tpu.dot_dimension_numbers<[1], [1], [0], [0], [0, 0, 1, 0], [], []>} : vector<32x64xbf16>, vector<32x64xbf16>, vector<32x32xf32> -> vector<32x32xf32>
    %41 = vector.broadcast %13 : vector<1x32xf32> to vector<32x32xf32>
    %42 = arith.addf %40, %41 : vector<32x32xf32>
    %cst_16 = arith.constant dense<0xFF800000> : vector<32xf32>
    %43 = vector.multi_reduction <maximumf>, %42, %cst_16 [1] : vector<32x32xf32> to vector<32xf32>
    %44 = vector.shape_cast %43 : vector<32xf32> to vector<32x1xf32>
    %45 = vector.broadcast %44 : vector<32x1xf32> to vector<32x32xf32>
    %46 = arith.subf %42, %45 : vector<32x32xf32>
    %47 = math.exp %46 : vector<32x32xf32>
    %cst_17 = arith.constant dense<0.000000e+00> : vector<32xf32>
    %48 = vector.multi_reduction <add>, %47, %cst_17 [1] : vector<32x32xf32> to vector<32xf32>
    %49 = vector.shape_cast %48 : vector<32xf32> to vector<32x1xf32>
    %50 = vector.broadcast %49 : vector<32x1xf32> to vector<32x32xf32>
    %51 = arith.divf %47, %50 : vector<32x32xf32>
    %52 = arith.truncf %51 : vector<32x32xf32> to vector<32x32xbf16>
    %cst_18 = arith.constant dense<0.000000e+00> : vector<32x64xf32>
    %53 = tpu.matmul %52, %39, %cst_18 {dimension_numbers = #tpu.dot_dimension_numbers<[1], [0], [0], [1], [0, 0, 1, 1], [], []>} : vector<32x32xbf16>, vector<32x64xbf16>, vector<32x64xf32> -> vector<32x64xf32>
    %54 = tpu.concatenate %33, %53 in 1 : vector<32x64xf32>, vector<32x64xf32> -> vector<32x128xf32>
    %55 = arith.truncf %54 : vector<32x128xf32> to vector<32x128xbf16>
    %c0_19 = arith.constant 0 : index
    %c0_20 = arith.constant 0 : index
    %c0_21 = arith.constant 0 : index
    %56 = vector.load %arg6[%c0_19, %c0_20, %c0_21] : memref<1x128x128xbf16, #tpu.memory_space<vmem>>, vector<1x128x128xbf16>
    %57 = vector.shape_cast %56 : vector<1x128x128xbf16> to vector<128x128xbf16>
    %cst_22 = arith.constant dense<0.000000e+00> : vector<32x128xf32>
    %58 = tpu.matmul %55, %57, %cst_22 {dimension_numbers = #tpu.dot_dimension_numbers<[1], [0], [0], [1], [0, 0, 1, 1], [], []>} : vector<32x128xbf16>, vector<128x128xbf16>, vector<32x128xf32> -> vector<32x128xf32>
    %c0_23 = arith.constant 0 : index
    %c0_24 = arith.constant 0 : index
    %c0_25 = arith.constant 0 : index
    %59 = vector.load %arg7[%c0_23, %c0_24, %c0_25] : memref<1x1x128xf32, #tpu.memory_space<vmem>>, vector<1x1x128xf32>
    %60 = vector.shape_cast %59 : vector<1x1x128xf32> to vector<1x128xf32>
    %61 = vector.broadcast %60 : vector<1x128xf32> to vector<32x128xf32>
    %62 = arith.addf %58, %61 : vector<32x128xf32>
    %63 = arith.addf %3, %62 : vector<32x128xf32>
    %c0_26 = arith.constant 0 : index
    %c0_27 = arith.constant 0 : index
    %c0_28 = arith.constant 0 : index
    %64 = vector.load %arg8[%c0_26, %c0_27, %c0_28] : memref<1x1x128xf32, #tpu.memory_space<vmem>>, vector<1x1x128xf32>
    %65 = vector.shape_cast %64 : vector<1x1x128xf32> to vector<1x128xf32>
    %c0_29 = arith.constant 0 : index
    %c0_30 = arith.constant 0 : index
    %c0_31 = arith.constant 0 : index
    %66 = vector.load %arg9[%c0_29, %c0_30, %c0_31] : memref<1x1x128xf32, #tpu.memory_space<vmem>>, vector<1x1x128xf32>
    %67 = vector.shape_cast %66 : vector<1x1x128xf32> to vector<1x128xf32>
    %cst_32 = arith.constant dense<0.000000e+00> : vector<32xf32>
    %68 = vector.multi_reduction <add>, %63, %cst_32 [1] : vector<32x128xf32> to vector<32xf32>
    %69 = vector.shape_cast %68 : vector<32xf32> to vector<32x1xf32>
    %cst_33 = arith.constant 1.280000e+02 : f32
    %70 = vector.broadcast %cst_33 : f32 to vector<32x1xf32>
    %71 = arith.divf %69, %70 : vector<32x1xf32>
    %72 = vector.broadcast %71 : vector<32x1xf32> to vector<32x128xf32>
    %73 = arith.subf %63, %72 : vector<32x128xf32>
    %74 = arith.mulf %73, %73 : vector<32x128xf32>
    %cst_34 = arith.constant dense<0.000000e+00> : vector<32xf32>
    %75 = vector.multi_reduction <add>, %74, %cst_34 [1] : vector<32x128xf32> to vector<32xf32>
    %76 = vector.shape_cast %75 : vector<32xf32> to vector<32x1xf32>
    %cst_35 = arith.constant 1.280000e+02 : f32
    %77 = vector.broadcast %cst_35 : f32 to vector<32x1xf32>
    %78 = arith.divf %76, %77 : vector<32x1xf32>
    %cst_36 = arith.constant 9.99999996E-13 : f32
    %79 = vector.broadcast %cst_36 : f32 to vector<32x1xf32>
    %80 = arith.addf %78, %79 : vector<32x1xf32>
    %81 = math.rsqrt %80 : vector<32x1xf32>
    %82 = vector.broadcast %81 : vector<32x1xf32> to vector<32x128xf32>
    %83 = arith.mulf %73, %82 : vector<32x128xf32>
    %84 = vector.broadcast %65 : vector<1x128xf32> to vector<32x128xf32>
    %85 = arith.mulf %83, %84 : vector<32x128xf32>
    %86 = vector.broadcast %67 : vector<1x128xf32> to vector<32x128xf32>
    %87 = arith.addf %85, %86 : vector<32x128xf32>
    %88 = arith.truncf %87 : vector<32x128xf32> to vector<32x128xbf16>
    %c0_37 = arith.constant 0 : index
    %c0_38 = arith.constant 0 : index
    %c0_39 = arith.constant 0 : index
    %89 = vector.load %arg10[%c0_37, %c0_38, %c0_39] : memref<1x128x256xbf16, #tpu.memory_space<vmem>>, vector<1x128x256xbf16>
    %90 = vector.shape_cast %89 : vector<1x128x256xbf16> to vector<128x256xbf16>
    %cst_40 = arith.constant dense<0.000000e+00> : vector<32x256xf32>
    %91 = tpu.matmul %88, %90, %cst_40 {dimension_numbers = #tpu.dot_dimension_numbers<[1], [0], [0], [1], [0, 0, 1, 1], [], []>} : vector<32x128xbf16>, vector<128x256xbf16>, vector<32x256xf32> -> vector<32x256xf32>
    %c0_41 = arith.constant 0 : index
    %c0_42 = arith.constant 0 : index
    %c0_43 = arith.constant 0 : index
    %92 = vector.load %arg11[%c0_41, %c0_42, %c0_43] : memref<1x1x256xf32, #tpu.memory_space<vmem>>, vector<1x1x256xf32>
    %93 = vector.shape_cast %92 : vector<1x1x256xf32> to vector<1x256xf32>
    %94 = vector.broadcast %93 : vector<1x256xf32> to vector<32x256xf32>
    %95 = arith.addf %91, %94 : vector<32x256xf32>
    %cst_44 = arith.constant 5.000000e-01 : f32
    %96 = vector.broadcast %cst_44 : f32 to vector<32x256xf32>
    %97 = arith.mulf %96, %95 : vector<32x256xf32>
    %cst_45 = arith.constant 4.471500e-02 : f32
    %98 = vector.broadcast %cst_45 : f32 to vector<32x256xf32>
    %99 = arith.mulf %98, %95 : vector<32x256xf32>
    %100 = arith.mulf %99, %95 : vector<32x256xf32>
    %101 = arith.mulf %100, %95 : vector<32x256xf32>
    %102 = arith.addf %95, %101 : vector<32x256xf32>
    %cst_46 = arith.constant 0.797884583 : f32
    %103 = vector.broadcast %cst_46 : f32 to vector<32x256xf32>
    %104 = arith.mulf %103, %102 : vector<32x256xf32>
    %105 = math.tanh %104 : vector<32x256xf32>
    %cst_47 = arith.constant 1.000000e+00 : f32
    %106 = vector.broadcast %cst_47 : f32 to vector<32x256xf32>
    %107 = arith.addf %106, %105 : vector<32x256xf32>
    %108 = arith.mulf %97, %107 : vector<32x256xf32>
    %109 = arith.truncf %108 : vector<32x256xf32> to vector<32x256xbf16>
    %c0_48 = arith.constant 0 : index
    %c0_49 = arith.constant 0 : index
    %c0_50 = arith.constant 0 : index
    %110 = vector.load %arg12[%c0_48, %c0_49, %c0_50] : memref<1x256x128xbf16, #tpu.memory_space<vmem>>, vector<1x256x128xbf16>
    %111 = vector.shape_cast %110 : vector<1x256x128xbf16> to vector<256x128xbf16>
    %cst_51 = arith.constant dense<0.000000e+00> : vector<32x128xf32>
    %112 = tpu.matmul %109, %111, %cst_51 {dimension_numbers = #tpu.dot_dimension_numbers<[1], [0], [0], [1], [0, 0, 1, 1], [], []>} : vector<32x256xbf16>, vector<256x128xbf16>, vector<32x128xf32> -> vector<32x128xf32>
    %c0_52 = arith.constant 0 : index
    %c0_53 = arith.constant 0 : index
    %c0_54 = arith.constant 0 : index
    %113 = vector.load %arg13[%c0_52, %c0_53, %c0_54] : memref<1x1x128xf32, #tpu.memory_space<vmem>>, vector<1x1x128xf32>
    %114 = vector.shape_cast %113 : vector<1x1x128xf32> to vector<1x128xf32>
    %115 = vector.broadcast %114 : vector<1x128xf32> to vector<32x128xf32>
    %116 = arith.addf %112, %115 : vector<32x128xf32>
    %117 = arith.addf %87, %116 : vector<32x128xf32>
    %c0_55 = arith.constant 0 : index
    %c0_56 = arith.constant 0 : index
    %c0_57 = arith.constant 0 : index
    %118 = vector.load %arg14[%c0_55, %c0_56, %c0_57] : memref<1x1x128xf32, #tpu.memory_space<vmem>>, vector<1x1x128xf32>
    %119 = vector.shape_cast %118 : vector<1x1x128xf32> to vector<1x128xf32>
    %c0_58 = arith.constant 0 : index
    %c0_59 = arith.constant 0 : index
    %c0_60 = arith.constant 0 : index
    %120 = vector.load %arg15[%c0_58, %c0_59, %c0_60] : memref<1x1x128xf32, #tpu.memory_space<vmem>>, vector<1x1x128xf32>
    %121 = vector.shape_cast %120 : vector<1x1x128xf32> to vector<1x128xf32>
    %cst_61 = arith.constant dense<0.000000e+00> : vector<32xf32>
    %122 = vector.multi_reduction <add>, %117, %cst_61 [1] : vector<32x128xf32> to vector<32xf32>
    %123 = vector.shape_cast %122 : vector<32xf32> to vector<32x1xf32>
    %cst_62 = arith.constant 1.280000e+02 : f32
    %124 = vector.broadcast %cst_62 : f32 to vector<32x1xf32>
    %125 = arith.divf %123, %124 : vector<32x1xf32>
    %126 = vector.broadcast %125 : vector<32x1xf32> to vector<32x128xf32>
    %127 = arith.subf %117, %126 : vector<32x128xf32>
    %128 = arith.mulf %127, %127 : vector<32x128xf32>
    %cst_63 = arith.constant dense<0.000000e+00> : vector<32xf32>
    %129 = vector.multi_reduction <add>, %128, %cst_63 [1] : vector<32x128xf32> to vector<32xf32>
    %130 = vector.shape_cast %129 : vector<32xf32> to vector<32x1xf32>
    %cst_64 = arith.constant 1.280000e+02 : f32
    %131 = vector.broadcast %cst_64 : f32 to vector<32x1xf32>
    %132 = arith.divf %130, %131 : vector<32x1xf32>
    %cst_65 = arith.constant 9.99999996E-13 : f32
    %133 = vector.broadcast %cst_65 : f32 to vector<32x1xf32>
    %134 = arith.addf %132, %133 : vector<32x1xf32>
    %135 = math.rsqrt %134 : vector<32x1xf32>
    %136 = vector.broadcast %135 : vector<32x1xf32> to vector<32x128xf32>
    %137 = arith.mulf %127, %136 : vector<32x128xf32>
    %138 = vector.broadcast %119 : vector<1x128xf32> to vector<32x128xf32>
    %139 = arith.mulf %137, %138 : vector<32x128xf32>
    %140 = vector.broadcast %121 : vector<1x128xf32> to vector<32x128xf32>
    %141 = arith.addf %139, %140 : vector<32x128xf32>
    %c0_66 = arith.constant 0 : index
    %c0_67 = arith.constant 0 : index
    %142 = vector.load %arg19[%c0_66, %c0_67] : memref<32x128xf32, #tpu.memory_space<vmem>>, vector<32x128xf32>
    tpu.vector_store %arg19[%c0_66, %c0_67], %141 {strides = array<i32>} : memref<32x128xf32, #tpu.memory_space<vmem>>, vector<32x128xf32>,
    %c1_i32 = arith.constant 1 : i32
    %143 = arith.cmpi eq, %arg1, %c1_i32 : i32
    %144 = arith.extui %143 : i1 to i32
    %c0_i32_68 = arith.constant 0 : i32
    %145 = arith.cmpi ne, %144, %c0_i32_68 : i32
    scf.if %145 {
      %c0_69 = arith.constant 0 : index
      %c0_70 = arith.constant 0 : index
      %c0_71 = arith.constant 0 : index
      %146 = vector.load %arg18[%c0_69, %c0_70, %c0_71] : memref<1x32x128xf32, #tpu.memory_space<vmem>>, vector<1x32x128xf32>
      %147 = vector.shape_cast %146 : vector<1x32x128xf32> to vector<32x128xf32>
      %148 = vector.shape_cast %141 : vector<32x128xf32> to vector<1x32x128xf32>
      tpu.vector_store %arg18[%c0_69, %c0_70, %c0_71], %148 {strides = array<i32>} : memref<1x32x128xf32, #tpu.memory_space<vmem>>, vector<1x32x128xf32>,
    } else {
    }
    return
  }
  func.func @transform_0(%arg0: i32, %arg1: i32) -> (i32, i32, i32) {
    %c0_i32 = arith.constant 0 : i32
    %c0_i32_0 = arith.constant 0 : i32
    %c0_i32_1 = arith.constant 0 : i32
    return %arg0, %c0_i32, %c0_i32_0 : i32, i32, i32
  }
  func.func @transform_1(%arg0: i32, %arg1: i32) -> (i32, i32, i32) {
    %c0_i32 = arith.constant 0 : i32
    %c0_i32_0 = arith.constant 0 : i32
    %c0_i32_1 = arith.constant 0 : i32
    return %arg0, %c0_i32, %c0_i32_0 : i32, i32, i32
  }
  func.func @transform_2(%arg0: i32, %arg1: i32) -> (i32, i32, i32) {
    %c0_i32 = arith.constant 0 : i32
    %c0_i32_0 = arith.constant 0 : i32
    %c0_i32_1 = arith.constant 0 : i32
    return %arg1, %c0_i32, %c0_i32_0 : i32, i32, i32
  }
  func.func @transform_3(%arg0: i32, %arg1: i32) -> (i32, i32, i32) {
    %c0_i32 = arith.constant 0 : i32
    %c0_i32_0 = arith.constant 0 : i32
    %c0_i32_1 = arith.constant 0 : i32
    return %arg1, %c0_i32, %c0_i32_0 : i32, i32, i32
  }
  func.func @transform_4(%arg0: i32, %arg1: i32) -> (i32, i32, i32) {
    %c0_i32 = arith.constant 0 : i32
    %c0_i32_0 = arith.constant 0 : i32
    %c0_i32_1 = arith.constant 0 : i32
    return %arg1, %c0_i32, %c0_i32_0 : i32, i32, i32
  }
  func.func @transform_5(%arg0: i32, %arg1: i32) -> (i32, i32, i32) {
    %c0_i32 = arith.constant 0 : i32
    %c0_i32_0 = arith.constant 0 : i32
    %c0_i32_1 = arith.constant 0 : i32
    return %arg1, %c0_i32, %c0_i32_0 : i32, i32, i32
  }
  func.func @transform_6(%arg0: i32, %arg1: i32) -> (i32, i32, i32) {
    %c0_i32 = arith.constant 0 : i32
    %c0_i32_0 = arith.constant 0 : i32
    %c0_i32_1 = arith.constant 0 : i32
    return %arg1, %c0_i32, %c0_i32_0 : i32, i32, i32
  }
  func.func @transform_7(%arg0: i32, %arg1: i32) -> (i32, i32, i32) {
    %c0_i32 = arith.constant 0 : i32
    %c0_i32_0 = arith.constant 0 : i32
    %c0_i32_1 = arith.constant 0 : i32
    return %arg1, %c0_i32, %c0_i32_0 : i32, i32, i32
  }
  func.func @transform_8(%arg0: i32, %arg1: i32) -> (i32, i32, i32) {
    %c0_i32 = arith.constant 0 : i32
    %c0_i32_0 = arith.constant 0 : i32
    %c0_i32_1 = arith.constant 0 : i32
    return %arg1, %c0_i32, %c0_i32_0 : i32, i32, i32
  }
  func.func @transform_9(%arg0: i32, %arg1: i32) -> (i32, i32, i32) {
    %c0_i32 = arith.constant 0 : i32
    %c0_i32_0 = arith.constant 0 : i32
    %c0_i32_1 = arith.constant 0 : i32
    return %arg1, %c0_i32, %c0_i32_0 : i32, i32, i32
  }
  func.func @transform_10(%arg0: i32, %arg1: i32) -> (i32, i32, i32) {
    %c0_i32 = arith.constant 0 : i32
    %c0_i32_0 = arith.constant 0 : i32
    %c0_i32_1 = arith.constant 0 : i32
    return %arg1, %c0_i32, %c0_i32_0 : i32, i32, i32
  }
  func.func @transform_11(%arg0: i32, %arg1: i32) -> (i32, i32, i32) {
    %c0_i32 = arith.constant 0 : i32
    %c0_i32_0 = arith.constant 0 : i32
    %c0_i32_1 = arith.constant 0 : i32
    return %arg1, %c0_i32, %c0_i32_0 : i32, i32, i32
  }
  func.func @transform_12(%arg0: i32, %arg1: i32) -> (i32, i32, i32) {
    %c0_i32 = arith.constant 0 : i32
    %c0_i32_0 = arith.constant 0 : i32
    %c0_i32_1 = arith.constant 0 : i32
    return %arg1, %c0_i32, %c0_i32_0 : i32, i32, i32
  }
  func.func @transform_13(%arg0: i32, %arg1: i32) -> (i32, i32, i32) {
    %c0_i32 = arith.constant 0 : i32
    %c0_i32_0 = arith.constant 0 : i32
    %c0_i32_1 = arith.constant 0 : i32
    return %arg1, %c0_i32, %c0_i32_0 : i32, i32, i32
  }
  func.func @transform_14(%arg0: i32, %arg1: i32) -> (i32, i32) {
    %c0_i32 = arith.constant 0 : i32
    %c0_i32_0 = arith.constant 0 : i32
    %c0_i32_1 = arith.constant 0 : i32
    return %c0_i32, %c0_i32_0 : i32, i32
  }
  func.func @transform_15(%arg0: i32, %arg1: i32) -> (i32, i32) {
    %c0_i32 = arith.constant 0 : i32
    %c0_i32_0 = arith.constant 0 : i32
    %c0_i32_1 = arith.constant 0 : i32
    return %c0_i32, %c0_i32_0 : i32, i32
  }
  func.func @transform_16(%arg0: i32, %arg1: i32) -> (i32, i32, i32) {
    %c0_i32 = arith.constant 0 : i32
    %c0_i32_0 = arith.constant 0 : i32
    %c0_i32_1 = arith.constant 0 : i32
    return %arg0, %c0_i32, %c0_i32_0 : i32, i32, i32
  }
}

</mosaic_0001>

<llo_original>
// kernel: sub.14
$region0: #{sub.14}
  #allocation0 [shape = 's32[1]{0}', space=sflag, size = 0x4, scoped, tag = 'scoped memory for sub.14']
  %s0 = inlined_call_operand.vmem [shape: f32[2,8,3], index: 0, kind: input, shape index: {}]
  %s1 = inlined_call_operand.vmem [shape: f32[2,8,3], index: 1, kind: input, shape index: {}]
  %s2 = inlined_call_operand.vmem [shape: f32[2,8,3], index: 2, kind: output, shape index: {}]
  %v3 = vld [vmem:[%s0] sm:$0xff]
  %v4 = vld [vmem:[%s1] sm:$0xff]
  %5 = xla_tuple %v3, %v4
  %6 = xla_tuple %5
  %v7 = vsub.f32 %v3, %v4
  %8 = xla_tuple %v7
  %9 = vst [vmem:[%s2] sm:$0xff] %v7
  %s10 = scalar_lea.vmem %s0, 8
  %v11 = vld [vmem:[%s10] sm:$0xff]
  %s12 = scalar_lea.vmem %s1, 8
  %v13 = vld [vmem:[%s12] sm:$0xff]
  %14 = xla_tuple %v11, %v13
  %15 = xla_tuple %14
  %v16 = vsub.f32 %v11, %v13
  %17 = xla_tuple %v16
  %s18 = scalar_lea.vmem %s2, 8
  %19 = vst [vmem:[%s18] sm:$0xff] %v16

// kernel: three_dl_bert_forward.4
$region0: #{three_dl_bert_forward.4}
  #allocation0 [shape = 'u32[]', space=smem, size = 0x4, offset = 0x4, fixed_abs, tag = 'smem constant byte address 0x4 - core index']
  #allocation1 [shape = 'u32[72,128]{1,0:T(1,128)}', space=vmem, size = 0x9000, scoped, tag = 'internal scratch']
  %s0 = inlined_call_operand.vmem [shape: f32[2,8,256], index: 0, kind: input, shape index: {}]
  %s1 = inlined_call_operand.vmem [shape: f32[2,8,8], index: 1, kind: input, shape index: {}]
  %s2 = inlined_call_operand.vmem [shape: f32[8,128], index: 2, kind: input, shape index: {}]
  %s3 = inlined_call_operand.vmem [shape: f32[1,128], index: 3, kind: input, shape index: {}]
  %s4 = inlined_call_operand.vmem [shape: f32[256,128], index: 4, kind: input, shape index: {}]
  %s5 = inlined_call_operand.vmem [shape: f32[1,128], index: 5, kind: input, shape index: {}]
  %s6 = inlined_call_operand.vmem [shape: f32[128,128], index: 6, kind: input, shape index: {}]
  %s7 = inlined_call_operand.vmem [shape: f32[1,128], index: 7, kind: input, shape index: {}]
  %s8 = inlined_call_operand.vmem [shape: f32[2,8,128], index: 8, kind: output, shape index: {0}]
  %s9 = inlined_call_operand.vmem [shape: f32[2,8,128], index: 9, kind: output, shape index: {1}]
  %10 = xla_tuple %s8, %s9
  %s11 = sld [smem:[#allocation0]]
  $region73: #{three_dl_bert_forward.4} parent=0
    _
  %s13 = ssub.s32 1, %s11
  %s14 = scalar_select 0, %s13, %s11
  loop: start=0, step=1, limit=4
  $region2: #{three_dl_bert_forward.4} parent=0 // loop_pre_header
    _
  $region3: #{three_dl_bert_forward.4} parent=0 // loop_header
    %s16 = sphi 0, %s20
    %p17 = scmp.ge.s32.totalorder %s16, 4
    %s26 = sphi 0, %s28
    %s29 = sphi 0, %s26
    %s30 = sphi 0, %s29
    %s46 = sphi 0, %s30
    %s52 = sphi 0, %s54
    %s55 = sphi 0, %s52
    %s56 = sphi 0, %s55
    %s72 = sphi 0, %s56
    %s76 = sphi 0, %s76
    %s78 = sphi 0, %s76
    %s79 = sphi 0, %s78
    %s93 = sphi 0, %s79
    %s97 = sphi 0, %s97
    %s99 = sphi 0, %s97
    %s100 = sphi 0, %s99
    %s114 = sphi 0, %s100
    %s118 = sphi 0, %s118
    %s120 = sphi 0, %s118
    %s121 = sphi 0, %s120
    %s135 = sphi 0, %s121
    %s139 = sphi 0, %s139
    %s141 = sphi 0, %s139
    %s142 = sphi 0, %s141
    %s156 = sphi 0, %s142
    %s160 = sphi 0, %s160
    %s162 = sphi 0, %s160
    %s163 = sphi 0, %s162
    %s177 = sphi 0, %s163
    %s181 = sphi 0, %s181
    %s183 = sphi 0, %s181
    %s184 = sphi 0, %s183
    %s198 = sphi 0, %s184
    %s204 = sphi 0, %s206
    %s207 = sphi 0, %s204
    %s208 = sphi 0, %s207
    %s224 = sphi 0, %s208
    %s230 = sphi 0, %s232
    %s233 = sphi 0, %s230
    %s234 = sphi 0, %s233
    %s250 = sphi 0, %s234
  $region4: #{three_dl_bert_forward.4} parent=0 // loop_header_branch
    %19 = sbr.rel (%p17) target = $region8
  $region5: #{three_dl_bert_forward.4} parent=0 // loop_body
    %s21 = ssub.s32 %s16, 1
    %s22 = ssub.s32 %s16, 2
    %s23 = sadd.s32 %s16, 1
    %s24 = ssub.s32 %s16, %s23
    %p25 = scmp.eq.s32.totalorder %s24, 0
    %s27 = sadd.s32 %s26, 1
    %s28 = scalar_select %p25, %s26, %s27
    %p31 = pneg %p25
    %p32 = scmp.eq.s32.totalorder %s16, 1
    %p33 = por %p31, %p32
    %p34 = scmp.ne.s32.totalorder %s26, %s29
    %p35 = scmp.eq.s32.totalorder %s16, 0
    %p36 = por %p34, %p35
    %p37 = scmp.ne.s32.totalorder %s26, %s29
    %p38 = scmp.eq.s32.totalorder %s21, 1
    %p39 = por %p37, %p38
    %p40 = scmp.ne.s32.totalorder %s29, %s30
    %p41 = scmp.eq.s32.totalorder %s21, 0
    %p42 = por %p40, %p41
    %p43 = scmp.ne.s32.totalorder %s29, %s30
    %p44 = scmp.eq.s32.totalorder %s22, 1
    %p45 = por %p43, %p44
    %p47 = scmp.ne.s32.totalorder %s30, %s46
    %p48 = scmp.eq.s32.totalorder %s22, 0
    %p49 = por %p47, %p48
    %s50 = ssub.s32 %s16, %s23
    %p51 = scmp.eq.s32.totalorder %s50, 0
    %s53 = sadd.s32 %s52, 1
    %s54 = scalar_select %p51, %s52, %s53
    %p57 = pneg %p51
    %p58 = scmp.eq.s32.totalorder %s16, 1
    %p59 = por %p57, %p58
    %p60 = scmp.ne.s32.totalorder %s52, %s55
    %p61 = scmp.eq.s32.totalorder %s16, 0
    %p62 = por %p60, %p61
    %p63 = scmp.ne.s32.totalorder %s52, %s55
    %p64 = scmp.eq.s32.totalorder %s21, 1
    %p65 = por %p63, %p64
    %p66 = scmp.ne.s32.totalorder %s55, %s56
    %p67 = scmp.eq.s32.totalorder %s21, 0
    %p68 = por %p66, %p67
    %p69 = scmp.ne.s32.totalorder %s55, %s56
    %p70 = scmp.eq.s32.totalorder %s22, 1
    %p71 = por %p69, %p70
    %p73 = scmp.ne.s32.totalorder %s56, %s72
    %p74 = scmp.eq.s32.totalorder %s22, 0
    %p75 = por %p73, %p74
    %s77 = sadd.s32 %s76, 1
    %p80 = scmp.eq.s32.totalorder %s16, 1
    %p81 = scmp.ne.s32.totalorder %s76, %s78
    %p82 = scmp.eq.s32.totalorder %s16, 0
    %p83 = por %p81, %p82
    %p84 = scmp.ne.s32.totalorder %s76, %s78
    %p85 = scmp.eq.s32.totalorder %s21, 1
    %p86 = por %p84, %p85
    %p87 = scmp.ne.s32.totalorder %s78, %s79
    %p88 = scmp.eq.s32.totalorder %s21, 0
    %p89 = por %p87, %p88
    %p90 = scmp.ne.s32.totalorder %s78, %s79
    %p91 = scmp.eq.s32.totalorder %s22, 1
    %p92 = por %p90, %p91
    %p94 = scmp.ne.s32.totalorder %s79, %s93
    %p95 = scmp.eq.s32.totalorder %s22, 0
    %p96 = por %p94, %p95
    %s98 = sadd.s32 %s97, 1
    %p101 = scmp.eq.s32.totalorder %s16, 1
    %p102 = scmp.ne.s32.totalorder %s97, %s99
    %p103 = scmp.eq.s32.totalorder %s16, 0
    %p104 = por %p102, %p103
    %p105 = scmp.ne.s32.totalorder %s97, %s99
    %p106 = scmp.eq.s32.totalorder %s21, 1
    %p107 = por %p105, %p106
    %p108 = scmp.ne.s32.totalorder %s99, %s100
    %p109 = scmp.eq.s32.totalorder %s21, 0
    %p110 = por %p108, %p109
    %p111 = scmp.ne.s32.totalorder %s99, %s100
    %p112 = scmp.eq.s32.totalorder %s22, 1
    %p113 = por %p111, %p112
    %p115 = scmp.ne.s32.totalorder %s100, %s114
    %p116 = scmp.eq.s32.totalorder %s22, 0
    %p117 = por %p115, %p116
    %s119 = sadd.s32 %s118, 1
    %p122 = scmp.eq.s32.totalorder %s16, 1
    %p123 = scmp.ne.s32.totalorder %s118, %s120
    %p124 = scmp.eq.s32.totalorder %s16, 0
    %p125 = por %p123, %p124
    %p126 = scmp.ne.s32.totalorder %s118, %s120
    %p127 = scmp.eq.s32.totalorder %s21, 1
    %p128 = por %p126, %p127
    %p129 = scmp.ne.s32.totalorder %s120, %s121
    %p130 = scmp.eq.s32.totalorder %s21, 0
    %p131 = por %p129, %p130
    %p132 = scmp.ne.s32.totalorder %s120, %s121
    %p133 = scmp.eq.s32.totalorder %s22, 1
    %p134 = por %p132, %p133
    %p136 = scmp.ne.s32.totalorder %s121, %s135
    %p137 = scmp.eq.s32.totalorder %s22, 0
    %p138 = por %p136, %p137
    %s140 = sadd.s32 %s139, 1
    %p143 = scmp.eq.s32.totalorder %s16, 1
    %p144 = scmp.ne.s32.totalorder %s139, %s141
    %p145 = scmp.eq.s32.totalorder %s16, 0
    %p146 = por %p144, %p145
    %p147 = scmp.ne.s32.totalorder %s139, %s141
    %p148 = scmp.eq.s32.totalorder %s21, 1
    %p149 = por %p147, %p148
    %p150 = scmp.ne.s32.totalorder %s141, %s142
    %p151 = scmp.eq.s32.totalorder %s21, 0
    %p152 = por %p150, %p151
    %p153 = scmp.ne.s32.totalorder %s141, %s142
    %p154 = scmp.eq.s32.totalorder %s22, 1
    %p155 = por %p153, %p154
    %p157 = scmp.ne.s32.totalorder %s142, %s156
    %p158 = scmp.eq.s32.totalorder %s22, 0
    %p159 = por %p157, %p158
    %s161 = sadd.s32 %s160, 1
    %p164 = scmp.eq.s32.totalorder %s16, 1
    %p165 = scmp.ne.s32.totalorder %s160, %s162
    %p166 = scmp.eq.s32.totalorder %s16, 0
    %p167 = por %p165, %p166
    %p168 = scmp.ne.s32.totalorder %s160, %s162
    %p169 = scmp.eq.s32.totalorder %s21, 1
    %p170 = por %p168, %p169
    %p171 = scmp.ne.s32.totalorder %s162, %s163
    %p172 = scmp.eq.s32.totalorder %s21, 0
    %p173 = por %p171, %p172
    %p174 = scmp.ne.s32.totalorder %s162, %s163
    %p175 = scmp.eq.s32.totalorder %s22, 1
    %p176 = por %p174, %p175
    %p178 = scmp.ne.s32.totalorder %s163, %s177
    %p179 = scmp.eq.s32.totalorder %s22, 0
    %p180 = por %p178, %p179
    %s182 = sadd.s32 %s181, 1
    %p185 = scmp.eq.s32.totalorder %s16, 1
    %p186 = scmp.ne.s32.totalorder %s181, %s183
    %p187 = scmp.eq.s32.totalorder %s16, 0
    %p188 = por %p186, %p187
    %p189 = scmp.ne.s32.totalorder %s181, %s183
    %p190 = scmp.eq.s32.totalorder %s21, 1
    %p191 = por %p189, %p190
    %p192 = scmp.ne.s32.totalorder %s183, %s184
    %p193 = scmp.eq.s32.totalorder %s21, 0
    %p194 = por %p192, %p193
    %p195 = scmp.ne.s32.totalorder %s183, %s184
    %p196 = scmp.eq.s32.totalorder %s22, 1
    %p197 = por %p195, %p196
    %p199 = scmp.ne.s32.totalorder %s184, %s198
    %p200 = scmp.eq.s32.totalorder %s22, 0
    %p201 = por %p199, %p200
    %s202 = ssub.s32 %s16, %s23
    %p203 = scmp.eq.s32.totalorder %s202, 0
    %s205 = sadd.s32 %s204, 1
    %s206 = scalar_select %p203, %s204, %s205
    %p209 = pneg %p203
    %p210 = scmp.eq.s32.totalorder %s16, 1
    %p211 = por %p209, %p210
    %p212 = scmp.ne.s32.totalorder %s204, %s207
    %p213 = scmp.eq.s32.totalorder %s16, 0
    %p214 = por %p212, %p213
    %p215 = scmp.ne.s32.totalorder %s204, %s207
    %p216 = scmp.eq.s32.totalorder %s21, 1
    %p217 = por %p215, %p216
    %p218 = scmp.ne.s32.totalorder %s207, %s208
    %p219 = scmp.eq.s32.totalorder %s21, 0
    %p220 = por %p218, %p219
    %p221 = scmp.ne.s32.totalorder %s207, %s208
    %p222 = scmp.eq.s32.totalorder %s22, 1
    %p223 = por %p221, %p222
    %p225 = scmp.ne.s32.totalorder %s208, %s224
    %p226 = scmp.eq.s32.totalorder %s22, 0
    %p227 = por %p225, %p226
    %s228 = ssub.s32 %s16, %s23
    %p229 = scmp.eq.s32.totalorder %s228, 0
    %s231 = sadd.s32 %s230, 1
    %s232 = scalar_select %p229, %s230, %s231
    %p235 = pneg %p229
    %p236 = scmp.eq.s32.totalorder %s16, 1
    %p237 = por %p235, %p236
    %p238 = scmp.ne.s32.totalorder %s230, %s233
    %p239 = scmp.eq.s32.totalorder %s16, 0
    %p240 = por %p238, %p239
    %p241 = scmp.ne.s32.totalorder %s230, %s233
    %p242 = scmp.eq.s32.totalorder %s21, 1
    %p243 = por %p241, %p242
    %p244 = scmp.ne.s32.totalorder %s233, %s234
    %p245 = scmp.eq.s32.totalorder %s21, 0
    %p246 = por %p244, %p245
    %p247 = scmp.ne.s32.totalorder %s233, %s234
    %p248 = scmp.eq.s32.totalorder %s22, 1
    %p249 = por %p247, %p248
    %p251 = scmp.ne.s32.totalorder %s234, %s250
    %p252 = scmp.eq.s32.totalorder %s22, 0
    %p253 = por %p251, %p252
    %p254 = scmp.le.s32.totalorder 1, %s16
    %p255 = scmp.lt.s32.totalorder %s16, 3
    %p256 = pnand %p254, %p255
    %p257 = pneg %p256
    // Predicated region
    $region9: #{three_dl_bert_forward.4} parent=5 // pred_check
      _
    $region10: #{three_dl_bert_forward.4} parent=5 // pred_check_branch
      %259 = sbr.rel (%p256) target = $region12
    $region11: #{three_dl_bert_forward.4} parent=5 // pred_region
      %s260 = ssub.s32 %s16, 1
      // Predicated region
      $region13: #{three_dl_bert_forward.4} parent=11 // pred_check
        %p261 = pneg %p89
      $region14: #{three_dl_bert_forward.4} parent=11 // pred_check_branch
        %263 = sbr.rel (%p261) target = $region16
      $region15: #{three_dl_bert_forward.4} parent=11 // pred_region
        _
      $region16: #{three_dl_bert_forward.4} parent=11 // pred_fallthru
        _
      // Predicated region
      $region17: #{three_dl_bert_forward.4} parent=11 // pred_check
        %p264 = pneg %p110
      $region18: #{three_dl_bert_forward.4} parent=11 // pred_check_branch
        %266 = sbr.rel (%p264) target = $region20
      $region19: #{three_dl_bert_forward.4} parent=11 // pred_region
        _
      $region20: #{three_dl_bert_forward.4} parent=11 // pred_fallthru
        _
      // Predicated region
      $region21: #{three_dl_bert_forward.4} parent=11 // pred_check
        %p267 = pneg %p131
      $region22: #{three_dl_bert_forward.4} parent=11 // pred_check_branch
        %269 = sbr.rel (%p267) target = $region24
      $region23: #{three_dl_bert_forward.4} parent=11 // pred_region
        _
      $region24: #{three_dl_bert_forward.4} parent=11 // pred_fallthru
        _
      // Predicated region
      $region25: #{three_dl_bert_forward.4} parent=11 // pred_check
        %p270 = pneg %p152
      $region26: #{three_dl_bert_forward.4} parent=11 // pred_check_branch
        %272 = sbr.rel (%p270) target = $region28
      $region27: #{three_dl_bert_forward.4} parent=11 // pred_region
        _
      $region28: #{three_dl_bert_forward.4} parent=11 // pred_fallthru
        _
      // Predicated region
      $region29: #{three_dl_bert_forward.4} parent=11 // pred_check
        %p273 = pneg %p173
      $region30: #{three_dl_bert_forward.4} parent=11 // pred_check_branch
        %275 = sbr.rel (%p273) target = $region32
      $region31: #{three_dl_bert_forward.4} parent=11 // pred_region
        _
      $region32: #{three_dl_bert_forward.4} parent=11 // pred_fallthru
        _
      // Predicated region
      $region33: #{three_dl_bert_forward.4} parent=11 // pred_check
        %p276 = pneg %p194
      $region34: #{three_dl_bert_forward.4} parent=11 // pred_check_branch
        %278 = sbr.rel (%p276) target = $region36
      $region35: #{three_dl_bert_forward.4} parent=11 // pred_region
        _
      $region36: #{three_dl_bert_forward.4} parent=11 // pred_fallthru
        _
    $region12: #{three_dl_bert_forward.4} parent=5 // pred_fallthru
      _
    %p279 = scmp.lt.s32.totalorder %s16, 2
    // Predicated region
    $region37: #{three_dl_bert_forward.4} parent=5 // pred_check
      %p280 = pneg %p279
    $region38: #{three_dl_bert_forward.4} parent=5 // pred_check_branch
      %282 = sbr.rel (%p280) target = $region40
    $region39: #{three_dl_bert_forward.4} parent=5 // pred_region
      // Predicated region
      $region41: #{three_dl_bert_forward.4} parent=39 // pred_check
        %p283 = pneg %p36
      $region42: #{three_dl_bert_forward.4} parent=39 // pred_check_branch
        %285 = sbr.rel (%p283) target = $region44
      $region43: #{three_dl_bert_forward.4} parent=39 // pred_region
        %p286 = scmp.lt.s32.totalorder %s16, 1
        %s287 = scalar_select %p286, %s16, 1
        %s288 = smul.addr %s287, 2
        %s289 = smul.addr %s288, 8
        %s290 = scalar_lea.vmem %s0, %s289
      $region44: #{three_dl_bert_forward.4} parent=39 // pred_fallthru
        _
      // Predicated region
      $region45: #{three_dl_bert_forward.4} parent=39 // pred_check
        %p291 = pneg %p62
      $region46: #{three_dl_bert_forward.4} parent=39 // pred_check_branch
        %293 = sbr.rel (%p291) target = $region48
      $region47: #{three_dl_bert_forward.4} parent=39 // pred_region
        %p294 = scmp.lt.s32.totalorder %s16, 1
        %s295 = scalar_select %p294, %s16, 1
        %s296 = smul.addr %s295, 8
        %s297 = scalar_lea.vmem %s1, %s296
      $region48: #{three_dl_bert_forward.4} parent=39 // pred_fallthru
        _
    $region40: #{three_dl_bert_forward.4} parent=5 // pred_fallthru
      _
    %p298 = scmp.le.s32.totalorder 1, %s16
    %p299 = scmp.lt.s32.totalorder %s16, 3
    %p300 = pnand %p298, %p299
    %p301 = pneg %p300
    // Predicated region
    $region49: #{three_dl_bert_forward.4} parent=5 // pred_check
      _
    $region50: #{three_dl_bert_forward.4} parent=5 // pred_check_branch
      %303 = sbr.rel (%p300) target = $region52
    $region51: #{three_dl_bert_forward.4} parent=5 // pred_region
      %s304 = ssub.s32 %s16, 1
      %p305 = scmp.lt.s32.totalorder %s21, 1
      %s306 = scalar_select %p305, %s21, 1
      %s307 = smul.addr %s306, 2
      %s308 = smul.addr %s307, 8
      %s309 = scalar_lea.vmem %s0, %s308
      %p310 = pneg %p42
      %p311 = pneg %p39
      %p312 = scmp.lt.s32.totalorder %s21, 1
      %s313 = scalar_select %p312, %s21, 1
      %s314 = smul.addr %s313, 8
      %s315 = scalar_lea.vmem %s1, %s314
      %p316 = pneg %p68
      %p317 = pneg %p65
      %p318 = pneg %p89
      %p319 = pneg %p86
      %p320 = pneg %p110
      %p321 = pneg %p107
      %p322 = pneg %p131
      %p323 = pneg %p128
      %p324 = pneg %p152
      %p325 = pneg %p149
      %p326 = pneg %p173
      %p327 = pneg %p170
      %p328 = pneg %p194
      %p329 = pneg %p191
      %p330 = pneg %p220
      %p331 = pneg %p217
      %p332 = scmp.lt.s32.totalorder %s21, 1
      %s333 = scalar_select %p332, %s21, 1
      %s334 = smul.addr %s333, 8
      %s335 = scalar_lea.vmem %s8, %s334
      %p336 = pneg %p246
      %p337 = pneg %p243
      %p338 = scmp.lt.s32.totalorder %s21, 1
      %s339 = scalar_select %p338, %s21, 1
      %s340 = smul.addr %s339, 8
      %s341 = scalar_lea.vmem %s9, %s340
      %p342 = scmp.lt.s32.totalorder %s21, 1
      %s343 = scalar_select %p342, %s21, 1
      %s344 = smul.addr %s343, 2
      %s345 = smul.addr %s344, 8
      %s346 = scalar_lea.vmem %s0, %s345
      %p347 = scmp.lt.s32.totalorder %s21, 1
      %s348 = scalar_select %p347, %s21, 1
      %s349 = smul.addr %s348, 8
      %s350 = scalar_lea.vmem %s1, %s349
      %p351 = scmp.lt.s32.totalorder %s21, 1
      %s352 = scalar_select %p351, %s21, 1
      %s353 = smul.addr %s352, 8
      %s354 = scalar_lea.vmem %s8, %s353
      %p355 = scmp.lt.s32.totalorder %s21, 1
      %s356 = scalar_select %p355, %s21, 1
      %s357 = smul.addr %s356, 8
      %s358 = scalar_lea.vmem %s9, %s357
      %v359 = vld [vmem:[%s346] sm:$0xff]
      %v360 = vld [vmem:[%s346 + $0x8] sm:$0xff]
      %v361 = vld [vmem:[%s350] sm:$0xff]
      %v362 = vld [vmem:[%s2] sm:$0xff]
      %v363 = vld [vmem:[%s3] sm:$0x1]
      %v365 = vperm.slane %v363, 0
      %vm367 = vcmask 64512
      %v369 = vsel %vm367, %v361, 0
      %371 = vmatpush.msra.mxu0 0.0
      %372 = vmatpush.msra.mxu0 0.0
      %373 = vmatpush.msra.mxu0 0.0
      %374 = vmatpush.msra.mxu0 0.0
      %375 = vmatpush.msra.mxu0 0.0
      %376 = vmatpush.msra.mxu0 0.0
      %377 = vmatpush.msra.mxu0 0.0
      %378 = vmatpush.msra.mxu0 0.0
      %379 = vmatpush.msra.mxu0 0.0
      %380 = vmatpush.msra.mxu0 0.0
      %381 = vmatpush.msra.mxu0 0.0
      %382 = vmatpush.msra.mxu0 0.0
      %383 = vmatpush.msra.mxu0 0.0
      %384 = vmatpush.msra.mxu0 0.0
      %385 = vmatpush.msra.mxu0 0.0
      %386 = vmatpush.msra.mxu0 %v362
      %387 = vmatmul.f32.gmra.mxu0 %v369
      %v388 = vpop.f32.mrf.mxu0
      %v389 = vadd.f32 %v365, %v388
      %390 = vdwg.mxu0
      %v391 = vmax.f32 %v389, 0.0
      %v392 = vld [vmem:[%s4] sm:$0xff]
      %v393 = vld [vmem:[%s4 + $0x8] sm:$0xff]
      %v394 = vld [vmem:[%s4 + $0x10] sm:$0xff]
      %v395 = vld [vmem:[%s4 + $0x18] sm:$0xff]
      %v396 = vld [vmem:[%s4 + $0x20] sm:$0xff]
      %v397 = vld [vmem:[%s4 + $0x28] sm:$0xff]
      %v398 = vld [vmem:[%s4 + $0x30] sm:$0xff]
      %v399 = vld [vmem:[%s4 + $0x38] sm:$0xff]
      %v400 = vld [vmem:[%s4 + $0x40] sm:$0xff]
      %v401 = vld [vmem:[%s4 + $0x48] sm:$0xff]
      %v402 = vld [vmem:[%s4 + $0x50] sm:$0xff]
      %v403 = vld [vmem:[%s4 + $0x58] sm:$0xff]
      %v404 = vld [vmem:[%s4 + $0x60] sm:$0xff]
      %v405 = vld [vmem:[%s4 + $0x68] sm:$0xff]
      %v406 = vld [vmem:[%s4 + $0x70] sm:$0xff]
      %v407 = vld [vmem:[%s4 + $0x78] sm:$0xff]
      %v408 = vld [vmem:[%s4 + $0x80] sm:$0xff]
      %v409 = vld [vmem:[%s4 + $0x88] sm:$0xff]
      %v410 = vld [vmem:[%s4 + $0x90] sm:$0xff]
      %v411 = vld [vmem:[%s4 + $0x98] sm:$0xff]
      %v412 = vld [vmem:[%s4 + $0xa0] sm:$0xff]
      %v413 = vld [vmem:[%s4 + $0xa8] sm:$0xff]
      %v414 = vld [vmem:[%s4 + $0xb0] sm:$0xff]
      %v415 = vld [vmem:[%s4 + $0xb8] sm:$0xff]
      %v416 = vld [vmem:[%s4 + $0xc0] sm:$0xff]
      %v417 = vld [vmem:[%s4 + $0xc8] sm:$0xff]
      %v418 = vld [vmem:[%s4 + $0xd0] sm:$0xff]
      %v419 = vld [vmem:[%s4 + $0xd8] sm:$0xff]
      %v420 = vld [vmem:[%s4 + $0xe0] sm:$0xff]
      %v421 = vld [vmem:[%s4 + $0xe8] sm:$0xff]
      %v422 = vld [vmem:[%s4 + $0xf0] sm:$0xff]
      %v423 = vld [vmem:[%s4 + $0xf8] sm:$0xff]
      %v424 = vld [vmem:[%s5] sm:$0x1]
      %v426 = vperm.slane %v424, 0
      %428 = vmatpush.msra.mxu0 %v407
      %429 = vmatpush.msra.mxu0 %v406
      %430 = vmatpush.msra.mxu0 %v405
      %431 = vmatpush.msra.mxu0 %v404
      %432 = vmatpush.msra.mxu0 %v403
      %433 = vmatpush.msra.mxu0 %v402
      %434 = vmatpush.msra.mxu0 %v401
      %435 = vmatpush.msra.mxu0 %v400
      %436 = vmatpush.msra.mxu0 %v399
      %437 = vmatpush.msra.mxu0 %v398
      %438 = vmatpush.msra.mxu0 %v397
      %439 = vmatpush.msra.mxu0 %v396
      %440 = vmatpush.msra.mxu0 %v395
      %441 = vmatpush.msra.mxu0 %v394
      %442 = vmatpush.msra.mxu0 %v393
      %443 = vmatpush.msra.mxu0 %v392
      %444 = vmatmul.f32.gmra.mxu0 %v359
      %v445 = vpop.f32.mrf.mxu0
      %v446 = vadd.f32 %v426, %v445
      %447 = vdwg.mxu0
      %448 = vmatpush.msra.mxu0 %v423
      %449 = vmatpush.msra.mxu0 %v422
      %450 = vmatpush.msra.mxu0 %v421
      %451 = vmatpush.msra.mxu0 %v420
      %452 = vmatpush.msra.mxu0 %v419
      %453 = vmatpush.msra.mxu0 %v418
      %454 = vmatpush.msra.mxu0 %v417
      %455 = vmatpush.msra.mxu0 %v416
      %456 = vmatpush.msra.mxu0 %v415
      %457 = vmatpush.msra.mxu0 %v414
      %458 = vmatpush.msra.mxu0 %v413
      %459 = vmatpush.msra.mxu0 %v412
      %460 = vmatpush.msra.mxu0 %v411
      %461 = vmatpush.msra.mxu0 %v410
      %462 = vmatpush.msra.mxu0 %v409
      %463 = vmatpush.msra.mxu0 %v408
      %464 = vmatmul.f32.gmra.mxu0 %v391
      %v465 = vpop.f32.mrf.mxu0
      %v466 = vadd.f32 %v446, %v465
      %467 = vdwg.mxu0
      %v468 = vmax.f32 %v466, 0.0
      %v469 = vld [vmem:[%s6] sm:$0xff]
      %v470 = vld [vmem:[%s6 + $0x8] sm:$0xff]
      %v471 = vld [vmem:[%s6 + $0x10] sm:$0xff]
      %v472 = vld [vmem:[%s6 + $0x18] sm:$0xff]
      %v473 = vld [vmem:[%s6 + $0x20] sm:$0xff]
      %v474 = vld [vmem:[%s6 + $0x28] sm:$0xff]
      %v475 = vld [vmem:[%s6 + $0x30] sm:$0xff]
      %v476 = vld [vmem:[%s6 + $0x38] sm:$0xff]
      %v477 = vld [vmem:[%s6 + $0x40] sm:$0xff]
      %v478 = vld [vmem:[%s6 + $0x48] sm:$0xff]
      %v479 = vld [vmem:[%s6 + $0x50] sm:$0xff]
      %v480 = vld [vmem:[%s6 + $0x58] sm:$0xff]
      %v481 = vld [vmem:[%s6 + $0x60] sm:$0xff]
      %v482 = vld [vmem:[%s6 + $0x68] sm:$0xff]
      %v483 = vld [vmem:[%s6 + $0x70] sm:$0xff]
      %v484 = vld [vmem:[%s6 + $0x78] sm:$0xff]
      %v485 = vld [vmem:[%s7] sm:$0x1]
      %v487 = vperm.slane %v485, 0
      %489 = vmatpush.msra.mxu0 %v484
      %490 = vmatpush.msra.mxu0 %v483
      %491 = vmatpush.msra.mxu0 %v482
      %492 = vmatpush.msra.mxu0 %v481
      %493 = vmatpush.msra.mxu0 %v480
      %494 = vmatpush.msra.mxu0 %v479
      %495 = vmatpush.msra.mxu0 %v478
      %496 = vmatpush.msra.mxu0 %v477
      %497 = vmatpush.msra.mxu0 %v476
      %498 = vmatpush.msra.mxu0 %v475
      %499 = vmatpush.msra.mxu0 %v474
      %500 = vmatpush.msra.mxu0 %v473
      %501 = vmatpush.msra.mxu0 %v472
      %502 = vmatpush.msra.mxu0 %v471
      %503 = vmatpush.msra.mxu0 %v470
      %504 = vmatpush.msra.mxu0 %v469
      %505 = vmatmul.f32.gmra.mxu0 %v360
      %v506 = vpop.f32.mrf.mxu0
      %v507 = vadd.f32 %v487, %v506
      %508 = vdwg.mxu0
      %v509 = vmax.f32 %v507, 0.0
      %510 = vst [vmem:[%s354] sm:$0xff] %v468
      %511 = vst [vmem:[%s358] sm:$0xff] %v509
      %p512 = scmp.lt.s32.totalorder %s21, 1
      %s513 = scalar_select %p512, %s21, 1
      %s514 = smul.addr %s513, 8
      %s515 = scalar_lea.vmem %s8, %s514
      %p516 = scmp.lt.s32.totalorder %s21, 1
      %s517 = scalar_select %p516, %s21, 1
      %s518 = smul.addr %s517, 8
      %s519 = scalar_lea.vmem %s9, %s518
      // Predicated region
      $region53: #{three_dl_bert_forward.4} parent=51 // pred_check
        %p520 = pneg %p217
      $region54: #{three_dl_bert_forward.4} parent=51 // pred_check_branch
        %522 = sbr.rel (%p520) target = $region56
      $region55: #{three_dl_bert_forward.4} parent=51 // pred_region
        _
      $region56: #{three_dl_bert_forward.4} parent=51 // pred_fallthru
        _
      // Predicated region
      $region57: #{three_dl_bert_forward.4} parent=51 // pred_check
        %p523 = pneg %p243
      $region58: #{three_dl_bert_forward.4} parent=51 // pred_check_branch
        %525 = sbr.rel (%p523) target = $region60
      $region59: #{three_dl_bert_forward.4} parent=51 // pred_region
        _
      $region60: #{three_dl_bert_forward.4} parent=51 // pred_fallthru
        _
    $region52: #{three_dl_bert_forward.4} parent=5 // pred_fallthru
      _
    %p526 = scmp.le.s32.totalorder 2, %s16
    // Predicated region
    $region61: #{three_dl_bert_forward.4} parent=5 // pred_check
      %p527 = pneg %p526
    $region62: #{three_dl_bert_forward.4} parent=5 // pred_check_branch
      %529 = sbr.rel (%p527) target = $region64
    $region63: #{three_dl_bert_forward.4} parent=5 // pred_region
      %s530 = ssub.s32 %s16, 2
      // Predicated region
      $region65: #{three_dl_bert_forward.4} parent=63 // pred_check
        %p531 = pneg %p223
      $region66: #{three_dl_bert_forward.4} parent=63 // pred_check_branch
        %533 = sbr.rel (%p531) target = $region68
      $region67: #{three_dl_bert_forward.4} parent=63 // pred_region
        %p534 = scmp.lt.s32.totalorder %s22, 1
        %s535 = scalar_select %p534, %s22, 1
        %s536 = smul.addr %s535, 8
        %s537 = scalar_lea.vmem %s8, %s536
      $region68: #{three_dl_bert_forward.4} parent=63 // pred_fallthru
        _
      // Predicated region
      $region69: #{three_dl_bert_forward.4} parent=63 // pred_check
        %p538 = pneg %p249
      $region70: #{three_dl_bert_forward.4} parent=63 // pred_check_branch
        %540 = sbr.rel (%p538) target = $region72
      $region71: #{three_dl_bert_forward.4} parent=63 // pred_region
        %p541 = scmp.lt.s32.totalorder %s22, 1
        %s542 = scalar_select %p541, %s22, 1
        %s543 = smul.addr %s542, 8
        %s544 = scalar_lea.vmem %s9, %s543
      $region72: #{three_dl_bert_forward.4} parent=63 // pred_fallthru
        _
    $region64: #{three_dl_bert_forward.4} parent=5 // pred_fallthru
      _
  $region6: #{three_dl_bert_forward.4} parent=0 // loop_footer
    %s20 = sadd.s32 1, %s16
  $region7: #{three_dl_bert_forward.4} parent=0 // loop_footer_branch
    %15 = sbr.rel target = $region3
  $region8: #{three_dl_bert_forward.4} parent=0 // loop_exit
    _

// kernel: three_dl_bert_forward.3
$region0: #{three_dl_bert_forward.3}
  #allocation0 [shape = 'u32[]', space=smem, size = 0x4, offset = 0x4, fixed_abs, tag = 'smem constant byte address 0x4 - core index']
  #allocation1 [shape = 'u32[72,128]{1,0:T(1,128)}', space=vmem, size = 0x9000, scoped, tag = 'internal scratch']
  %s0 = inlined_call_operand.vmem [shape: f32[2,128,16], index: 0, kind: input, shape index: {}]
  %s1 = inlined_call_operand.vmem [shape: f32[16,256], index: 1, kind: input, shape index: {}]
  %s2 = inlined_call_operand.vmem [shape: f32[1,256], index: 2, kind: input, shape index: {}]
  %s3 = inlined_call_operand.vmem [shape: f32[2,8,256], index: 3, kind: output, shape index: {}]
  %s4 = sld [smem:[#allocation0]]
  $region45: #{three_dl_bert_forward.3} parent=0
    _
  %s6 = ssub.s32 1, %s4
  %s7 = scalar_select 0, %s6, %s4
  loop: start=0, step=1, limit=4
  $region2: #{three_dl_bert_forward.3} parent=0 // loop_pre_header
    _
  $region3: #{three_dl_bert_forward.3} parent=0 // loop_header
    %s9 = sphi 0, %s13
    %p10 = scmp.ge.s32.totalorder %s9, 4
    %s19 = sphi 0, %s21
    %s22 = sphi 0, %s19
    %s23 = sphi 0, %s22
    %s39 = sphi 0, %s23
    %s43 = sphi 0, %s43
    %s45 = sphi 0, %s43
    %s46 = sphi 0, %s45
    %s60 = sphi 0, %s46
    %s64 = sphi 0, %s64
    %s66 = sphi 0, %s64
    %s67 = sphi 0, %s66
    %s81 = sphi 0, %s67
    %s87 = sphi 0, %s89
    %s90 = sphi 0, %s87
    %s91 = sphi 0, %s90
    %s107 = sphi 0, %s91
  $region4: #{three_dl_bert_forward.3} parent=0 // loop_header_branch
    %12 = sbr.rel (%p10) target = $region8
  $region5: #{three_dl_bert_forward.3} parent=0 // loop_body
    %s14 = ssub.s32 %s9, 1
    %s15 = ssub.s32 %s9, 2
    %s16 = sadd.s32 %s9, 1
    %s17 = ssub.s32 %s9, %s16
    %p18 = scmp.eq.s32.totalorder %s17, 0
    %s20 = sadd.s32 %s19, 1
    %s21 = scalar_select %p18, %s19, %s20
    %p24 = pneg %p18
    %p25 = scmp.eq.s32.totalorder %s9, 1
    %p26 = por %p24, %p25
    %p27 = scmp.ne.s32.totalorder %s19, %s22
    %p28 = scmp.eq.s32.totalorder %s9, 0
    %p29 = por %p27, %p28
    %p30 = scmp.ne.s32.totalorder %s19, %s22
    %p31 = scmp.eq.s32.totalorder %s14, 1
    %p32 = por %p30, %p31
    %p33 = scmp.ne.s32.totalorder %s22, %s23
    %p34 = scmp.eq.s32.totalorder %s14, 0
    %p35 = por %p33, %p34
    %p36 = scmp.ne.s32.totalorder %s22, %s23
    %p37 = scmp.eq.s32.totalorder %s15, 1
    %p38 = por %p36, %p37
    %p40 = scmp.ne.s32.totalorder %s23, %s39
    %p41 = scmp.eq.s32.totalorder %s15, 0
    %p42 = por %p40, %p41
    %s44 = sadd.s32 %s43, 1
    %p47 = scmp.eq.s32.totalorder %s9, 1
    %p48 = scmp.ne.s32.totalorder %s43, %s45
    %p49 = scmp.eq.s32.totalorder %s9, 0
    %p50 = por %p48, %p49
    %p51 = scmp.ne.s32.totalorder %s43, %s45
    %p52 = scmp.eq.s32.totalorder %s14, 1
    %p53 = por %p51, %p52
    %p54 = scmp.ne.s32.totalorder %s45, %s46
    %p55 = scmp.eq.s32.totalorder %s14, 0
    %p56 = por %p54, %p55
    %p57 = scmp.ne.s32.totalorder %s45, %s46
    %p58 = scmp.eq.s32.totalorder %s15, 1
    %p59 = por %p57, %p58
    %p61 = scmp.ne.s32.totalorder %s46, %s60
    %p62 = scmp.eq.s32.totalorder %s15, 0
    %p63 = por %p61, %p62
    %s65 = sadd.s32 %s64, 1
    %p68 = scmp.eq.s32.totalorder %s9, 1
    %p69 = scmp.ne.s32.totalorder %s64, %s66
    %p70 = scmp.eq.s32.totalorder %s9, 0
    %p71 = por %p69, %p70
    %p72 = scmp.ne.s32.totalorder %s64, %s66
    %p73 = scmp.eq.s32.totalorder %s14, 1
    %p74 = por %p72, %p73
    %p75 = scmp.ne.s32.totalorder %s66, %s67
    %p76 = scmp.eq.s32.totalorder %s14, 0
    %p77 = por %p75, %p76
    %p78 = scmp.ne.s32.totalorder %s66, %s67
    %p79 = scmp.eq.s32.totalorder %s15, 1
    %p80 = por %p78, %p79
    %p82 = scmp.ne.s32.totalorder %s67, %s81
    %p83 = scmp.eq.s32.totalorder %s15, 0
    %p84 = por %p82, %p83
    %s85 = ssub.s32 %s9, %s16
    %p86 = scmp.eq.s32.totalorder %s85, 0
    %s88 = sadd.s32 %s87, 1
    %s89 = scalar_select %p86, %s87, %s88
    %p92 = pneg %p86
    %p93 = scmp.eq.s32.totalorder %s9, 1
    %p94 = por %p92, %p93
    %p95 = scmp.ne.s32.totalorder %s87, %s90
    %p96 = scmp.eq.s32.totalorder %s9, 0
    %p97 = por %p95, %p96
    %p98 = scmp.ne.s32.totalorder %s87, %s90
    %p99 = scmp.eq.s32.totalorder %s14, 1
    %p100 = por %p98, %p99
    %p101 = scmp.ne.s32.totalorder %s90, %s91
    %p102 = scmp.eq.s32.totalorder %s14, 0
    %p103 = por %p101, %p102
    %p104 = scmp.ne.s32.totalorder %s90, %s91
    %p105 = scmp.eq.s32.totalorder %s15, 1
    %p106 = por %p104, %p105
    %p108 = scmp.ne.s32.totalorder %s91, %s107
    %p109 = scmp.eq.s32.totalorder %s15, 0
    %p110 = por %p108, %p109
    %p111 = scmp.le.s32.totalorder 1, %s9
    %p112 = scmp.lt.s32.totalorder %s9, 3
    %p113 = pnand %p111, %p112
    %p114 = pneg %p113
    // Predicated region
    $region9: #{three_dl_bert_forward.3} parent=5 // pred_check
      _
    $region10: #{three_dl_bert_forward.3} parent=5 // pred_check_branch
      %116 = sbr.rel (%p113) target = $region12
    $region11: #{three_dl_bert_forward.3} parent=5 // pred_region
      %s117 = ssub.s32 %s9, 1
      // Predicated region
      $region13: #{three_dl_bert_forward.3} parent=11 // pred_check
        %p118 = pneg %p56
      $region14: #{three_dl_bert_forward.3} parent=11 // pred_check_branch
        %120 = sbr.rel (%p118) target = $region16
      $region15: #{three_dl_bert_forward.3} parent=11 // pred_region
        _
      $region16: #{three_dl_bert_forward.3} parent=11 // pred_fallthru
        _
      // Predicated region
      $region17: #{three_dl_bert_forward.3} parent=11 // pred_check
        %p121 = pneg %p77
      $region18: #{three_dl_bert_forward.3} parent=11 // pred_check_branch
        %123 = sbr.rel (%p121) target = $region20
      $region19: #{three_dl_bert_forward.3} parent=11 // pred_region
        _
      $region20: #{three_dl_bert_forward.3} parent=11 // pred_fallthru
        _
    $region12: #{three_dl_bert_forward.3} parent=5 // pred_fallthru
      _
    %p124 = scmp.lt.s32.totalorder %s9, 2
    // Predicated region
    $region21: #{three_dl_bert_forward.3} parent=5 // pred_check
      %p125 = pneg %p124
    $region22: #{three_dl_bert_forward.3} parent=5 // pred_check_branch
      %127 = sbr.rel (%p125) target = $region24
    $region23: #{three_dl_bert_forward.3} parent=5 // pred_region
      // Predicated region
      $region25: #{three_dl_bert_forward.3} parent=23 // pred_check
        %p128 = pneg %p29
      $region26: #{three_dl_bert_forward.3} parent=23 // pred_check_branch
        %130 = sbr.rel (%p128) target = $region28
      $region27: #{three_dl_bert_forward.3} parent=23 // pred_region
        %p131 = scmp.lt.s32.totalorder %s9, 1
        %s132 = scalar_select %p131, %s9, 1
        %s133 = smul.addr %s132, 16
        %s134 = smul.addr %s133, 8
        %s135 = scalar_lea.vmem %s0, %s134
      $region28: #{three_dl_bert_forward.3} parent=23 // pred_fallthru
        _
    $region24: #{three_dl_bert_forward.3} parent=5 // pred_fallthru
      _
    %p136 = scmp.le.s32.totalorder 1, %s9
    %p137 = scmp.lt.s32.totalorder %s9, 3
    %p138 = pnand %p136, %p137
    %p139 = pneg %p138
    // Predicated region
    $region29: #{three_dl_bert_forward.3} parent=5 // pred_check
      _
    $region30: #{three_dl_bert_forward.3} parent=5 // pred_check_branch
      %141 = sbr.rel (%p138) target = $region32
    $region31: #{three_dl_bert_forward.3} parent=5 // pred_region
      %s142 = ssub.s32 %s9, 1
      %p143 = scmp.lt.s32.totalorder %s14, 1
      %s144 = scalar_select %p143, %s14, 1
      %s145 = smul.addr %s144, 16
      %s146 = smul.addr %s145, 8
      %s147 = scalar_lea.vmem %s0, %s146
      %p148 = pneg %p35
      %p149 = pneg %p32
      %p150 = pneg %p56
      %p151 = pneg %p53
      %p152 = pneg %p77
      %p153 = pneg %p74
      %p154 = pneg %p103
      %p155 = pneg %p100
      %p156 = scmp.lt.s32.totalorder %s14, 1
      %s157 = scalar_select %p156, %s14, 1
      %s158 = smul.addr %s157, 2
      %s159 = smul.addr %s158, 8
      %s160 = scalar_lea.vmem %s3, %s159
      %p161 = scmp.lt.s32.totalorder %s14, 1
      %s162 = scalar_select %p161, %s14, 1
      %s163 = smul.addr %s162, 16
      %s164 = smul.addr %s163, 8
      %s165 = scalar_lea.vmem %s0, %s164
      %p166 = scmp.lt.s32.totalorder %s14, 1
      %s167 = scalar_select %p166, %s14, 1
      %s168 = smul.addr %s167, 2
      %s169 = smul.addr %s168, 8
      %s170 = scalar_lea.vmem %s3, %s169
      %v171 = vld [vmem:[%s165] sm:$0xff]
      %v172 = vld [vmem:[%s165 + $0x8] sm:$0xff]
      %v173 = vld [vmem:[%s165 + $0x10] sm:$0xff]
      %v174 = vld [vmem:[%s165 + $0x18] sm:$0xff]
      %v175 = vld [vmem:[%s165 + $0x20] sm:$0xff]
      %v176 = vld [vmem:[%s165 + $0x28] sm:$0xff]
      %v177 = vld [vmem:[%s165 + $0x30] sm:$0xff]
      %v178 = vld [vmem:[%s165 + $0x38] sm:$0xff]
      %v179 = vld [vmem:[%s165 + $0x40] sm:$0xff]
      %v180 = vld [vmem:[%s165 + $0x48] sm:$0xff]
      %v181 = vld [vmem:[%s165 + $0x50] sm:$0xff]
      %v182 = vld [vmem:[%s165 + $0x58] sm:$0xff]
      %v183 = vld [vmem:[%s165 + $0x60] sm:$0xff]
      %v184 = vld [vmem:[%s165 + $0x68] sm:$0xff]
      %v185 = vld [vmem:[%s165 + $0x70] sm:$0xff]
      %v186 = vld [vmem:[%s165 + $0x78] sm:$0xff]
      %v187 = vld [vmem:[%s1] sm:$0xff]
      %v188 = vld [vmem:[%s1 + $0x8] sm:$0xff]
      %v189 = vld [vmem:[%s1 + $0x10] sm:$0xff]
      %v190 = vld [vmem:[%s1 + $0x18] sm:$0xff]
      %v191 = vld [vmem:[%s2] sm:$0x3]
      %v193 = vperm.slane %v191, 0
      %v194 = vperm.slane %v191, 1
      %vm197 = vcmask 130048
      %v199 = vsel %vm197, %v171, 0
      %v202 = vsel %vm197, %v172, 0
      %v205 = vsel %vm197, %v173, 0
      %v208 = vsel %vm197, %v174, 0
      %v211 = vsel %vm197, %v175, 0
      %v214 = vsel %vm197, %v176, 0
      %v217 = vsel %vm197, %v177, 0
      %v220 = vsel %vm197, %v178, 0
      %v223 = vsel %vm197, %v179, 0
      %v226 = vsel %vm197, %v180, 0
      %v229 = vsel %vm197, %v181, 0
      %v232 = vsel %vm197, %v182, 0
      %v235 = vsel %vm197, %v183, 0
      %v238 = vsel %vm197, %v184, 0
      %v241 = vsel %vm197, %v185, 0
      %v244 = vsel %vm197, %v186, 0
      %246 = vmatpush.msra.mxu0 0.0
      %247 = vmatpush.msra.mxu0 0.0
      %248 = vmatpush.msra.mxu0 0.0
      %249 = vmatpush.msra.mxu0 0.0
      %250 = vmatpush.msra.mxu0 0.0
      %251 = vmatpush.msra.mxu0 0.0
      %252 = vmatpush.msra.mxu0 0.0
      %253 = vmatpush.msra.mxu0 0.0
      %254 = vmatpush.msra.mxu0 0.0
      %255 = vmatpush.msra.mxu0 0.0
      %256 = vmatpush.msra.mxu0 0.0
      %257 = vmatpush.msra.mxu0 0.0
      %258 = vmatpush.msra.mxu0 0.0
      %259 = vmatpush.msra.mxu0 0.0
      %260 = vmatpush.msra.mxu0 %v189
      %261 = vmatpush.msra.mxu0 %v187
      %262 = vmatmul.f32.gmra.mxu0 %v199
      %v263 = vpop.f32.mrf.mxu0
      %v264 = vadd.f32 %v193, %v263
      %265 = vmatmul.f32.gmra.mxu0 %v202
      %v266 = vpop.f32.mrf.mxu0
      %v267 = vadd.f32 %v193, %v266
      %268 = vmatmul.f32.gmra.mxu0 %v205
      %v269 = vpop.f32.mrf.mxu0
      %v270 = vadd.f32 %v193, %v269
      %271 = vmatmul.f32.gmra.mxu0 %v208
      %v272 = vpop.f32.mrf.mxu0
      %v273 = vadd.f32 %v193, %v272
      %274 = vmatmul.f32.gmra.mxu0 %v211
      %v275 = vpop.f32.mrf.mxu0
      %v276 = vadd.f32 %v193, %v275
      %277 = vmatmul.f32.gmra.mxu0 %v214
      %v278 = vpop.f32.mrf.mxu0
      %v279 = vadd.f32 %v193, %v278
      %280 = vmatmul.f32.gmra.mxu0 %v217
      %v281 = vpop.f32.mrf.mxu0
      %v282 = vadd.f32 %v193, %v281
      %283 = vmatmul.f32.gmra.mxu0 %v220
      %v284 = vpop.f32.mrf.mxu0
      %v285 = vadd.f32 %v193, %v284
      %286 = vmatmul.f32.gmra.mxu0 %v223
      %v287 = vpop.f32.mrf.mxu0
      %v288 = vadd.f32 %v193, %v287
      %289 = vmatmul.f32.gmra.mxu0 %v226
      %v290 = vpop.f32.mrf.mxu0
      %v291 = vadd.f32 %v193, %v290
      %292 = vmatmul.f32.gmra.mxu0 %v229
      %v293 = vpop.f32.mrf.mxu0
      %v294 = vadd.f32 %v193, %v293
      %295 = vmatmul.f32.gmra.mxu0 %v232
      %v296 = vpop.f32.mrf.mxu0
      %v297 = vadd.f32 %v193, %v296
      %298 = vmatmul.f32.gmra.mxu0 %v235
      %v299 = vpop.f32.mrf.mxu0
      %v300 = vadd.f32 %v193, %v299
      %301 = vmatmul.f32.gmra.mxu0 %v238
      %v302 = vpop.f32.mrf.mxu0
      %v303 = vadd.f32 %v193, %v302
      %304 = vmatmul.f32.gmra.mxu0 %v241
      %v305 = vpop.f32.mrf.mxu0
      %v306 = vadd.f32 %v193, %v305
      %307 = vmatmul.f32.gmra.mxu0 %v244
      %v308 = vpop.f32.mrf.mxu0
      %v309 = vadd.f32 %v193, %v308
      %310 = vdwg.mxu0
      %311 = vmatpush.msra.mxu0 0.0
      %312 = vmatpush.msra.mxu0 0.0
      %313 = vmatpush.msra.mxu0 0.0
      %314 = vmatpush.msra.mxu0 0.0
      %315 = vmatpush.msra.mxu0 0.0
      %316 = vmatpush.msra.mxu0 0.0
      %317 = vmatpush.msra.mxu0 0.0
      %318 = vmatpush.msra.mxu0 0.0
      %319 = vmatpush.msra.mxu0 0.0
      %320 = vmatpush.msra.mxu0 0.0
      %321 = vmatpush.msra.mxu0 0.0
      %322 = vmatpush.msra.mxu0 0.0
      %323 = vmatpush.msra.mxu0 0.0
      %324 = vmatpush.msra.mxu0 0.0
      %325 = vmatpush.msra.mxu0 %v190
      %326 = vmatpush.msra.mxu0 %v188
      %327 = vmatmul.f32.gmra.mxu0 %v199
      %v328 = vpop.f32.mrf.mxu0
      %v329 = vadd.f32 %v194, %v328
      %330 = vmatmul.f32.gmra.mxu0 %v202
      %v331 = vpop.f32.mrf.mxu0
      %v332 = vadd.f32 %v194, %v331
      %333 = vmatmul.f32.gmra.mxu0 %v205
      %v334 = vpop.f32.mrf.mxu0
      %v335 = vadd.f32 %v194, %v334
      %336 = vmatmul.f32.gmra.mxu0 %v208
      %v337 = vpop.f32.mrf.mxu0
      %v338 = vadd.f32 %v194, %v337
      %339 = vmatmul.f32.gmra.mxu0 %v211
      %v340 = vpop.f32.mrf.mxu0
      %v341 = vadd.f32 %v194, %v340
      %342 = vmatmul.f32.gmra.mxu0 %v214
      %v343 = vpop.f32.mrf.mxu0
      %v344 = vadd.f32 %v194, %v343
      %345 = vmatmul.f32.gmra.mxu0 %v217
      %v346 = vpop.f32.mrf.mxu0
      %v347 = vadd.f32 %v194, %v346
      %348 = vmatmul.f32.gmra.mxu0 %v220
      %v349 = vpop.f32.mrf.mxu0
      %v350 = vadd.f32 %v194, %v349
      %351 = vmatmul.f32.gmra.mxu0 %v223
      %v352 = vpop.f32.mrf.mxu0
      %v353 = vadd.f32 %v194, %v352
      %354 = vmatmul.f32.gmra.mxu0 %v226
      %v355 = vpop.f32.mrf.mxu0
      %v356 = vadd.f32 %v194, %v355
      %357 = vmatmul.f32.gmra.mxu0 %v229
      %v358 = vpop.f32.mrf.mxu0
      %v359 = vadd.f32 %v194, %v358
      %360 = vmatmul.f32.gmra.mxu0 %v232
      %v361 = vpop.f32.mrf.mxu0
      %v362 = vadd.f32 %v194, %v361
      %363 = vmatmul.f32.gmra.mxu0 %v235
      %v364 = vpop.f32.mrf.mxu0
      %v365 = vadd.f32 %v194, %v364
      %366 = vmatmul.f32.gmra.mxu0 %v238
      %v367 = vpop.f32.mrf.mxu0
      %v368 = vadd.f32 %v194, %v367
      %369 = vmatmul.f32.gmra.mxu0 %v241
      %v370 = vpop.f32.mrf.mxu0
      %v371 = vadd.f32 %v194, %v370
      %372 = vmatmul.f32.gmra.mxu0 %v244
      %v373 = vpop.f32.mrf.mxu0
      %v374 = vadd.f32 %v194, %v373
      %375 = vdwg.mxu0
      %v376 = vmax.f32 %v264, 0.0
      %v377 = vmax.f32 %v329, 0.0
      %v378 = vmax.f32 %v267, 0.0
      %v379 = vmax.f32 %v332, 0.0
      %v380 = vmax.f32 %v270, 0.0
      %v381 = vmax.f32 %v335, 0.0
      %v382 = vmax.f32 %v273, 0.0
      %v383 = vmax.f32 %v338, 0.0
      %v384 = vmax.f32 %v276, 0.0
      %v385 = vmax.f32 %v341, 0.0
      %v386 = vmax.f32 %v279, 0.0
      %v387 = vmax.f32 %v344, 0.0
      %v388 = vmax.f32 %v282, 0.0
      %v389 = vmax.f32 %v347, 0.0
      %v390 = vmax.f32 %v285, 0.0
      %v391 = vmax.f32 %v350, 0.0
      %v392 = vmax.f32 %v288, 0.0
      %v393 = vmax.f32 %v353, 0.0
      %v394 = vmax.f32 %v291, 0.0
      %v395 = vmax.f32 %v356, 0.0
      %v396 = vmax.f32 %v294, 0.0
      %v397 = vmax.f32 %v359, 0.0
      %v398 = vmax.f32 %v297, 0.0
      %v399 = vmax.f32 %v362, 0.0
      %v400 = vmax.f32 %v300, 0.0
      %v401 = vmax.f32 %v365, 0.0
      %v402 = vmax.f32 %v303, 0.0
      %v403 = vmax.f32 %v368, 0.0
      %v404 = vmax.f32 %v306, 0.0
      %v405 = vmax.f32 %v371, 0.0
      %v406 = vmax.f32 %v309, 0.0
      %v407 = vmax.f32 %v374, 0.0
      %v408 = vmax.f32 %v376, %v378
      %v409 = vrot.slane %v408, 4
      %v410 = vmax.f32 %v408, %v409
      %v411 = vrot.slane %v410, 2
      %v412 = vmax.f32 %v410, %v411
      %v413 = vrot.slane %v412, 1
      %v414 = vmax.f32 %v412, %v413
      %v415 = vmax.f32 %v377, %v379
      %v416 = vrot.slane %v415, 4
      %v417 = vmax.f32 %v415, %v416
      %v418 = vrot.slane %v417, 2
      %v419 = vmax.f32 %v417, %v418
      %v420 = vrot.slane %v419, 1
      %v421 = vmax.f32 %v419, %v420
      %v422 = vmax.f32 %v380, %v382
      %v423 = vrot.slane %v422, 4
      %v424 = vmax.f32 %v422, %v423
      %v425 = vrot.slane %v424, 2
      %v426 = vmax.f32 %v424, %v425
      %v427 = vrot.slane %v426, 1
      %v428 = vmax.f32 %v426, %v427
      %v429 = vmax.f32 %v381, %v383
      %v430 = vrot.slane %v429, 4
      %v431 = vmax.f32 %v429, %v430
      %v432 = vrot.slane %v431, 2
      %v433 = vmax.f32 %v431, %v432
      %v434 = vrot.slane %v433, 1
      %v435 = vmax.f32 %v433, %v434
      %v436 = vmax.f32 %v384, %v386
      %v437 = vrot.slane %v436, 4
      %v438 = vmax.f32 %v436, %v437
      %v439 = vrot.slane %v438, 2
      %v440 = vmax.f32 %v438, %v439
      %v441 = vrot.slane %v440, 1
      %v442 = vmax.f32 %v440, %v441
      %v443 = vmax.f32 %v385, %v387
      %v444 = vrot.slane %v443, 4
      %v445 = vmax.f32 %v443, %v444
      %v446 = vrot.slane %v445, 2
      %v447 = vmax.f32 %v445, %v446
      %v448 = vrot.slane %v447, 1
      %v449 = vmax.f32 %v447, %v448
      %v450 = vmax.f32 %v388, %v390
      %v451 = vrot.slane %v450, 4
      %v452 = vmax.f32 %v450, %v451
      %v453 = vrot.slane %v452, 2
      %v454 = vmax.f32 %v452, %v453
      %v455 = vrot.slane %v454, 1
      %v456 = vmax.f32 %v454, %v455
      %v457 = vmax.f32 %v389, %v391
      %v458 = vrot.slane %v457, 4
      %v459 = vmax.f32 %v457, %v458
      %v460 = vrot.slane %v459, 2
      %v461 = vmax.f32 %v459, %v460
      %v462 = vrot.slane %v461, 1
      %v463 = vmax.f32 %v461, %v462
      %v464 = vmax.f32 %v392, %v394
      %v465 = vrot.slane %v464, 4
      %v466 = vmax.f32 %v464, %v465
      %v467 = vrot.slane %v466, 2
      %v468 = vmax.f32 %v466, %v467
      %v469 = vrot.slane %v468, 1
      %v470 = vmax.f32 %v468, %v469
      %v471 = vmax.f32 %v393, %v395
      %v472 = vrot.slane %v471, 4
      %v473 = vmax.f32 %v471, %v472
      %v474 = vrot.slane %v473, 2
      %v475 = vmax.f32 %v473, %v474
      %v476 = vrot.slane %v475, 1
      %v477 = vmax.f32 %v475, %v476
      %v478 = vmax.f32 %v396, %v398
      %v479 = vrot.slane %v478, 4
      %v480 = vmax.f32 %v478, %v479
      %v481 = vrot.slane %v480, 2
      %v482 = vmax.f32 %v480, %v481
      %v483 = vrot.slane %v482, 1
      %v484 = vmax.f32 %v482, %v483
      %v485 = vmax.f32 %v397, %v399
      %v486 = vrot.slane %v485, 4
      %v487 = vmax.f32 %v485, %v486
      %v488 = vrot.slane %v487, 2
      %v489 = vmax.f32 %v487, %v488
      %v490 = vrot.slane %v489, 1
      %v491 = vmax.f32 %v489, %v490
      %v492 = vmax.f32 %v400, %v402
      %v493 = vrot.slane %v492, 4
      %v494 = vmax.f32 %v492, %v493
      %v495 = vrot.slane %v494, 2
      %v496 = vmax.f32 %v494, %v495
      %v497 = vrot.slane %v496, 1
      %v498 = vmax.f32 %v496, %v497
      %v499 = vmax.f32 %v401, %v403
      %v500 = vrot.slane %v499, 4
      %v501 = vmax.f32 %v499, %v500
      %v502 = vrot.slane %v501, 2
      %v503 = vmax.f32 %v501, %v502
      %v504 = vrot.slane %v503, 1
      %v505 = vmax.f32 %v503, %v504
      %v506 = vmax.f32 %v404, %v406
      %v507 = vrot.slane %v506, 4
      %v508 = vmax.f32 %v506, %v507
      %v509 = vrot.slane %v508, 2
      %v510 = vmax.f32 %v508, %v509
      %v511 = vrot.slane %v510, 1
      %v512 = vmax.f32 %v510, %v511
      %v513 = vmax.f32 %v405, %v407
      %v514 = vrot.slane %v513, 4
      %v515 = vmax.f32 %v513, %v514
      %v516 = vrot.slane %v515, 2
      %v517 = vmax.f32 %v515, %v516
      %v518 = vrot.slane %v517, 1
      %v519 = vmax.f32 %v517, %v518
      %vm536 = vcmask 1041409
      %v537 = vsel %vm536, %v428, %v414
      %vm538 = vcmask 1042434
      %v539 = vsel %vm538, %v442, %v537
      %vm540 = vcmask 1043459
      %v541 = vsel %vm540, %v456, %v539
      %vm542 = vcmask 1044484
      %v543 = vsel %vm542, %v470, %v541
      %vm544 = vcmask 1045509
      %v545 = vsel %vm544, %v484, %v543
      %vm546 = vcmask 1046534
      %v547 = vsel %vm546, %v498, %v545
      %vm548 = vcmask 1047559
      %v549 = vsel %vm548, %v512, %v547
      %v550 = vsel %vm536, %v435, %v421
      %v551 = vsel %vm538, %v449, %v550
      %v552 = vsel %vm540, %v463, %v551
      %v553 = vsel %vm542, %v477, %v552
      %v554 = vsel %vm544, %v491, %v553
      %v555 = vsel %vm546, %v505, %v554
      %v556 = vsel %vm548, %v519, %v555
      %559 = vst [vmem:[%s170] sm:$0xff] %v549
      %560 = vst [vmem:[%s170 + $0x8] sm:$0xff] %v556
      %p561 = scmp.lt.s32.totalorder %s14, 1
      %s562 = scalar_select %p561, %s14, 1
      %s563 = smul.addr %s562, 2
      %s564 = smul.addr %s563, 8
      %s565 = scalar_lea.vmem %s3, %s564
      // Predicated region
      $region33: #{three_dl_bert_forward.3} parent=31 // pred_check
        %p566 = pneg %p100
      $region34: #{three_dl_bert_forward.3} parent=31 // pred_check_branch
        %568 = sbr.rel (%p566) target = $region36
      $region35: #{three_dl_bert_forward.3} parent=31 // pred_region
        _
      $region36: #{three_dl_bert_forward.3} parent=31 // pred_fallthru
        _
    $region32: #{three_dl_bert_forward.3} parent=5 // pred_fallthru
      _
    %p569 = scmp.le.s32.totalorder 2, %s9
    // Predicated region
    $region37: #{three_dl_bert_forward.3} parent=5 // pred_check
      %p570 = pneg %p569
    $region38: #{three_dl_bert_forward.3} parent=5 // pred_check_branch
      %572 = sbr.rel (%p570) target = $region40
    $region39: #{three_dl_bert_forward.3} parent=5 // pred_region
      %s573 = ssub.s32 %s9, 2
      // Predicated region
      $region41: #{three_dl_bert_forward.3} parent=39 // pred_check
        %p574 = pneg %p106
      $region42: #{three_dl_bert_forward.3} parent=39 // pred_check_branch
        %576 = sbr.rel (%p574) target = $region44
      $region43: #{three_dl_bert_forward.3} parent=39 // pred_region
        %p577 = scmp.lt.s32.totalorder %s15, 1
        %s578 = scalar_select %p577, %s15, 1
        %s579 = smul.addr %s578, 2
        %s580 = smul.addr %s579, 8
        %s581 = scalar_lea.vmem %s3, %s580
      $region44: #{three_dl_bert_forward.3} parent=39 // pred_fallthru
        _
    $region40: #{three_dl_bert_forward.3} parent=5 // pred_fallthru
      _
  $region6: #{three_dl_bert_forward.3} parent=0 // loop_footer
    %s13 = sadd.s32 1, %s9
  $region7: #{three_dl_bert_forward.3} parent=0 // loop_footer_branch
    %8 = sbr.rel target = $region3
  $region8: #{three_dl_bert_forward.3} parent=0 // loop_exit
    _

// kernel: three_dl_bert_forward.5
$region0: #{three_dl_bert_forward.5}
  #allocation0 [shape = 'u32[]', space=smem, size = 0x4, offset = 0x4, fixed_abs, tag = 'smem constant byte address 0x4 - core index']
  #allocation1 [shape = 'u32[72,128]{1,0:T(1,128)}', space=vmem, size = 0x9000, scoped, tag = 'internal scratch']
  #allocation2 [shape = 'f32[32,128]{1,0:T(8,128)}', space=vmem, size = 0x4000, scoped, tag = 'scratch operand']
  %s0 = inlined_call_operand.vmem [shape: f32[2,32,128], index: 0, kind: input, shape index: {}]
  %s1 = inlined_call_operand.vmem [shape: f32[2,1,32], index: 1, kind: input, shape index: {}]
  %s2 = inlined_call_operand.vmem [shape: bf16[2,128,384], index: 2, kind: input, shape index: {}]
  %s3 = inlined_call_operand.vmem [shape: f32[2,1,384], index: 3, kind: input, shape index: {}]
  %s4 = inlined_call_operand.vmem [shape: bf16[2,128,128], index: 4, kind: input, shape index: {}]
  %s5 = inlined_call_operand.vmem [shape: f32[2,1,128], index: 5, kind: input, shape index: {}]
  %s6 = inlined_call_operand.vmem [shape: f32[2,1,128], index: 6, kind: input, shape index: {}]
  %s7 = inlined_call_operand.vmem [shape: f32[2,1,128], index: 7, kind: input, shape index: {}]
  %s8 = inlined_call_operand.vmem [shape: bf16[2,128,256], index: 8, kind: input, shape index: {}]
  %s9 = inlined_call_operand.vmem [shape: f32[2,1,256], index: 9, kind: input, shape index: {}]
  %s10 = inlined_call_operand.vmem [shape: bf16[2,256,128], index: 10, kind: input, shape index: {}]
  %s11 = inlined_call_operand.vmem [shape: f32[2,1,128], index: 11, kind: input, shape index: {}]
  %s12 = inlined_call_operand.vmem [shape: f32[2,1,128], index: 12, kind: input, shape index: {}]
  %s13 = inlined_call_operand.vmem [shape: f32[2,1,128], index: 13, kind: input, shape index: {}]
  %s14 = inlined_call_operand.vmem [shape: f32[1,128], index: 14, kind: input, shape index: {}]
  %s15 = inlined_call_operand.vmem [shape: f32[1,128], index: 15, kind: input, shape index: {}]
  %s16 = inlined_call_operand.vmem [shape: f32[2,32,128], index: 16, kind: output, shape index: {}]
  %s17 = sld [smem:[#allocation0]]
  $region105: #{three_dl_bert_forward.5} parent=0
    _
  %s19 = ssub.s32 1, %s17
  %s20 = scalar_select 0, %s19, %s17
  loop: start=0, step=1, limit=6
  $region2: #{three_dl_bert_forward.5} parent=0 // loop_pre_header
    _
  $region3: #{three_dl_bert_forward.5} parent=0 // loop_header
    %s22 = sphi 0, %s26
    %p23 = scmp.ge.s32.totalorder %s22, 6
    %s29 = sphi 0, %s41
    %s30 = sphi 0, %s37
    %s31 = sphi 0, %s29
    %s32 = sphi 0, %s30
    %s33 = sphi 0, %s31
    %s34 = sphi 0, %s32
    %s44 = sphi 0, %s46
    %s47 = sphi 0, %s44
    %s48 = sphi 0, %s47
    %s64 = sphi 0, %s48
    %s70 = sphi 0, %s72
    %s73 = sphi 0, %s70
    %s74 = sphi 0, %s73
    %s90 = sphi 0, %s74
    %s96 = sphi 0, %s98
    %s99 = sphi 0, %s96
    %s100 = sphi 0, %s99
    %s116 = sphi 0, %s100
    %s122 = sphi 0, %s124
    %s125 = sphi 0, %s122
    %s126 = sphi 0, %s125
    %s142 = sphi 0, %s126
    %s148 = sphi 0, %s150
    %s151 = sphi 0, %s148
    %s152 = sphi 0, %s151
    %s168 = sphi 0, %s152
    %s174 = sphi 0, %s176
    %s177 = sphi 0, %s174
    %s178 = sphi 0, %s177
    %s194 = sphi 0, %s178
    %s200 = sphi 0, %s202
    %s203 = sphi 0, %s200
    %s204 = sphi 0, %s203
    %s220 = sphi 0, %s204
    %s226 = sphi 0, %s228
    %s229 = sphi 0, %s226
    %s230 = sphi 0, %s229
    %s246 = sphi 0, %s230
    %s252 = sphi 0, %s254
    %s255 = sphi 0, %s252
    %s256 = sphi 0, %s255
    %s272 = sphi 0, %s256
    %s278 = sphi 0, %s280
    %s281 = sphi 0, %s278
    %s282 = sphi 0, %s281
    %s298 = sphi 0, %s282
    %s304 = sphi 0, %s306
    %s307 = sphi 0, %s304
    %s308 = sphi 0, %s307
    %s324 = sphi 0, %s308
    %s330 = sphi 0, %s332
    %s333 = sphi 0, %s330
    %s334 = sphi 0, %s333
    %s350 = sphi 0, %s334
    %s356 = sphi 0, %s358
    %s359 = sphi 0, %s356
    %s360 = sphi 0, %s359
    %s376 = sphi 0, %s360
    %s382 = sphi 0, %s384
    %s385 = sphi 0, %s382
    %s386 = sphi 0, %s385
    %s402 = sphi 0, %s386
    %s406 = sphi 0, %s406
    %s408 = sphi 0, %s406
    %s409 = sphi 0, %s408
    %s423 = sphi 0, %s409
    %s427 = sphi 0, %s427
    %s429 = sphi 0, %s427
    %s430 = sphi 0, %s429
    %s444 = sphi 0, %s430
    %s450 = sphi 0, %s452
    %s453 = sphi 0, %s450
    %s454 = sphi 0, %s453
    %s470 = sphi 0, %s454
  $region4: #{three_dl_bert_forward.5} parent=0 // loop_header_branch
    %25 = sbr.rel (%p23) target = $region8
  $region5: #{three_dl_bert_forward.5} parent=0 // loop_body
    %s27 = ssub.s32 %s22, 1
    %s28 = ssub.s32 %s22, 2
    %s35 = sadd.s32 1, %s30
    %p36 = scmp.ge.s32.totalorder %s35, 2
    %s37 = scalar_select %p36, 0, %s35
    %s38 = sadd.s32 1, %s29
    %s39 = scalar_select %p36, %s38, %s29
    %p40 = scmp.ge.s32.totalorder %s39, 2
    %s41 = scalar_select %p40, 0, %s39
    %s42 = ssub.s32 %s29, %s41
    %p43 = scmp.eq.s32.totalorder %s42, 0
    %s45 = sadd.s32 %s44, 1
    %s46 = scalar_select %p43, %s44, %s45
    %p49 = pneg %p43
    %p50 = scmp.eq.s32.totalorder %s22, 3
    %p51 = por %p49, %p50
    %p52 = scmp.ne.s32.totalorder %s44, %s47
    %p53 = scmp.eq.s32.totalorder %s22, 0
    %p54 = por %p52, %p53
    %p55 = scmp.ne.s32.totalorder %s44, %s47
    %p56 = scmp.eq.s32.totalorder %s27, 3
    %p57 = por %p55, %p56
    %p58 = scmp.ne.s32.totalorder %s47, %s48
    %p59 = scmp.eq.s32.totalorder %s27, 0
    %p60 = por %p58, %p59
    %p61 = scmp.ne.s32.totalorder %s47, %s48
    %p62 = scmp.eq.s32.totalorder %s28, 3
    %p63 = por %p61, %p62
    %p65 = scmp.ne.s32.totalorder %s48, %s64
    %p66 = scmp.eq.s32.totalorder %s28, 0
    %p67 = por %p65, %p66
    %s68 = ssub.s32 %s29, %s41
    %p69 = scmp.eq.s32.totalorder %s68, 0
    %s71 = sadd.s32 %s70, 1
    %s72 = scalar_select %p69, %s70, %s71
    %p75 = pneg %p69
    %p76 = scmp.eq.s32.totalorder %s22, 3
    %p77 = por %p75, %p76
    %p78 = scmp.ne.s32.totalorder %s70, %s73
    %p79 = scmp.eq.s32.totalorder %s22, 0
    %p80 = por %p78, %p79
    %p81 = scmp.ne.s32.totalorder %s70, %s73
    %p82 = scmp.eq.s32.totalorder %s27, 3
    %p83 = por %p81, %p82
    %p84 = scmp.ne.s32.totalorder %s73, %s74
    %p85 = scmp.eq.s32.totalorder %s27, 0
    %p86 = por %p84, %p85
    %p87 = scmp.ne.s32.totalorder %s73, %s74
    %p88 = scmp.eq.s32.totalorder %s28, 3
    %p89 = por %p87, %p88
    %p91 = scmp.ne.s32.totalorder %s74, %s90
    %p92 = scmp.eq.s32.totalorder %s28, 0
    %p93 = por %p91, %p92
    %s94 = ssub.s32 %s30, %s37
    %p95 = scmp.eq.s32.totalorder %s94, 0
    %s97 = sadd.s32 %s96, 1
    %s98 = scalar_select %p95, %s96, %s97
    %p101 = pneg %p95
    %p102 = scmp.eq.s32.totalorder %s22, 3
    %p103 = por %p101, %p102
    %p104 = scmp.ne.s32.totalorder %s96, %s99
    %p105 = scmp.eq.s32.totalorder %s22, 0
    %p106 = por %p104, %p105
    %p107 = scmp.ne.s32.totalorder %s96, %s99
    %p108 = scmp.eq.s32.totalorder %s27, 3
    %p109 = por %p107, %p108
    %p110 = scmp.ne.s32.totalorder %s99, %s100
    %p111 = scmp.eq.s32.totalorder %s27, 0
    %p112 = por %p110, %p111
    %p113 = scmp.ne.s32.totalorder %s99, %s100
    %p114 = scmp.eq.s32.totalorder %s28, 3
    %p115 = por %p113, %p114
    %p117 = scmp.ne.s32.totalorder %s100, %s116
    %p118 = scmp.eq.s32.totalorder %s28, 0
    %p119 = por %p117, %p118
    %s120 = ssub.s32 %s30, %s37
    %p121 = scmp.eq.s32.totalorder %s120, 0
    %s123 = sadd.s32 %s122, 1
    %s124 = scalar_select %p121, %s122, %s123
    %p127 = pneg %p121
    %p128 = scmp.eq.s32.totalorder %s22, 3
    %p129 = por %p127, %p128
    %p130 = scmp.ne.s32.totalorder %s122, %s125
    %p131 = scmp.eq.s32.totalorder %s22, 0
    %p132 = por %p130, %p131
    %p133 = scmp.ne.s32.totalorder %s122, %s125
    %p134 = scmp.eq.s32.totalorder %s27, 3
    %p135 = por %p133, %p134
    %p136 = scmp.ne.s32.totalorder %s125, %s126
    %p137 = scmp.eq.s32.totalorder %s27, 0
    %p138 = por %p136, %p137
    %p139 = scmp.ne.s32.totalorder %s125, %s126
    %p140 = scmp.eq.s32.totalorder %s28, 3
    %p141 = por %p139, %p140
    %p143 = scmp.ne.s32.totalorder %s126, %s142
    %p144 = scmp.eq.s32.totalorder %s28, 0
    %p145 = por %p143, %p144
    %s146 = ssub.s32 %s30, %s37
    %p147 = scmp.eq.s32.totalorder %s146, 0
    %s149 = sadd.s32 %s148, 1
    %s150 = scalar_select %p147, %s148, %s149
    %p153 = pneg %p147
    %p154 = scmp.eq.s32.totalorder %s22, 3
    %p155 = por %p153, %p154
    %p156 = scmp.ne.s32.totalorder %s148, %s151
    %p157 = scmp.eq.s32.totalorder %s22, 0
    %p158 = por %p156, %p157
    %p159 = scmp.ne.s32.totalorder %s148, %s151
    %p160 = scmp.eq.s32.totalorder %s27, 3
    %p161 = por %p159, %p160
    %p162 = scmp.ne.s32.totalorder %s151, %s152
    %p163 = scmp.eq.s32.totalorder %s27, 0
    %p164 = por %p162, %p163
    %p165 = scmp.ne.s32.totalorder %s151, %s152
    %p166 = scmp.eq.s32.totalorder %s28, 3
    %p167 = por %p165, %p166
    %p169 = scmp.ne.s32.totalorder %s152, %s168
    %p170 = scmp.eq.s32.totalorder %s28, 0
    %p171 = por %p169, %p170
    %s172 = ssub.s32 %s30, %s37
    %p173 = scmp.eq.s32.totalorder %s172, 0
    %s175 = sadd.s32 %s174, 1
    %s176 = scalar_select %p173, %s174, %s175
    %p179 = pneg %p173
    %p180 = scmp.eq.s32.totalorder %s22, 3
    %p181 = por %p179, %p180
    %p182 = scmp.ne.s32.totalorder %s174, %s177
    %p183 = scmp.eq.s32.totalorder %s22, 0
    %p184 = por %p182, %p183
    %p185 = scmp.ne.s32.totalorder %s174, %s177
    %p186 = scmp.eq.s32.totalorder %s27, 3
    %p187 = por %p185, %p186
    %p188 = scmp.ne.s32.totalorder %s177, %s178
    %p189 = scmp.eq.s32.totalorder %s27, 0
    %p190 = por %p188, %p189
    %p191 = scmp.ne.s32.totalorder %s177, %s178
    %p192 = scmp.eq.s32.totalorder %s28, 3
    %p193 = por %p191, %p192
    %p195 = scmp.ne.s32.totalorder %s178, %s194
    %p196 = scmp.eq.s32.totalorder %s28, 0
    %p197 = por %p195, %p196
    %s198 = ssub.s32 %s30, %s37
    %p199 = scmp.eq.s32.totalorder %s198, 0
    %s201 = sadd.s32 %s200, 1
    %s202 = scalar_select %p199, %s200, %s201
    %p205 = pneg %p199
    %p206 = scmp.eq.s32.totalorder %s22, 3
    %p207 = por %p205, %p206
    %p208 = scmp.ne.s32.totalorder %s200, %s203
    %p209 = scmp.eq.s32.totalorder %s22, 0
    %p210 = por %p208, %p209
    %p211 = scmp.ne.s32.totalorder %s200, %s203
    %p212 = scmp.eq.s32.totalorder %s27, 3
    %p213 = por %p211, %p212
    %p214 = scmp.ne.s32.totalorder %s203, %s204
    %p215 = scmp.eq.s32.totalorder %s27, 0
    %p216 = por %p214, %p215
    %p217 = scmp.ne.s32.totalorder %s203, %s204
    %p218 = scmp.eq.s32.totalorder %s28, 3
    %p219 = por %p217, %p218
    %p221 = scmp.ne.s32.totalorder %s204, %s220
    %p222 = scmp.eq.s32.totalorder %s28, 0
    %p223 = por %p221, %p222
    %s224 = ssub.s32 %s30, %s37
    %p225 = scmp.eq.s32.totalorder %s224, 0
    %s227 = sadd.s32 %s226, 1
    %s228 = scalar_select %p225, %s226, %s227
    %p231 = pneg %p225
    %p232 = scmp.eq.s32.totalorder %s22, 3
    %p233 = por %p231, %p232
    %p234 = scmp.ne.s32.totalorder %s226, %s229
    %p235 = scmp.eq.s32.totalorder %s22, 0
    %p236 = por %p234, %p235
    %p237 = scmp.ne.s32.totalorder %s226, %s229
    %p238 = scmp.eq.s32.totalorder %s27, 3
    %p239 = por %p237, %p238
    %p240 = scmp.ne.s32.totalorder %s229, %s230
    %p241 = scmp.eq.s32.totalorder %s27, 0
    %p242 = por %p240, %p241
    %p243 = scmp.ne.s32.totalorder %s229, %s230
    %p244 = scmp.eq.s32.totalorder %s28, 3
    %p245 = por %p243, %p244
    %p247 = scmp.ne.s32.totalorder %s230, %s246
    %p248 = scmp.eq.s32.totalorder %s28, 0
    %p249 = por %p247, %p248
    %s250 = ssub.s32 %s30, %s37
    %p251 = scmp.eq.s32.totalorder %s250, 0
    %s253 = sadd.s32 %s252, 1
    %s254 = scalar_select %p251, %s252, %s253
    %p257 = pneg %p251
    %p258 = scmp.eq.s32.totalorder %s22, 3
    %p259 = por %p257, %p258
    %p260 = scmp.ne.s32.totalorder %s252, %s255
    %p261 = scmp.eq.s32.totalorder %s22, 0
    %p262 = por %p260, %p261
    %p263 = scmp.ne.s32.totalorder %s252, %s255
    %p264 = scmp.eq.s32.totalorder %s27, 3
    %p265 = por %p263, %p264
    %p266 = scmp.ne.s32.totalorder %s255, %s256
    %p267 = scmp.eq.s32.totalorder %s27, 0
    %p268 = por %p266, %p267
    %p269 = scmp.ne.s32.totalorder %s255, %s256
    %p270 = scmp.eq.s32.totalorder %s28, 3
    %p271 = por %p269, %p270
    %p273 = scmp.ne.s32.totalorder %s256, %s272
    %p274 = scmp.eq.s32.totalorder %s28, 0
    %p275 = por %p273, %p274
    %s276 = ssub.s32 %s30, %s37
    %p277 = scmp.eq.s32.totalorder %s276, 0
    %s279 = sadd.s32 %s278, 1
    %s280 = scalar_select %p277, %s278, %s279
    %p283 = pneg %p277
    %p284 = scmp.eq.s32.totalorder %s22, 3
    %p285 = por %p283, %p284
    %p286 = scmp.ne.s32.totalorder %s278, %s281
    %p287 = scmp.eq.s32.totalorder %s22, 0
    %p288 = por %p286, %p287
    %p289 = scmp.ne.s32.totalorder %s278, %s281
    %p290 = scmp.eq.s32.totalorder %s27, 3
    %p291 = por %p289, %p290
    %p292 = scmp.ne.s32.totalorder %s281, %s282
    %p293 = scmp.eq.s32.totalorder %s27, 0
    %p294 = por %p292, %p293
    %p295 = scmp.ne.s32.totalorder %s281, %s282
    %p296 = scmp.eq.s32.totalorder %s28, 3
    %p297 = por %p295, %p296
    %p299 = scmp.ne.s32.totalorder %s282, %s298
    %p300 = scmp.eq.s32.totalorder %s28, 0
    %p301 = por %p299, %p300
    %s302 = ssub.s32 %s30, %s37
    %p303 = scmp.eq.s32.totalorder %s302, 0
    %s305 = sadd.s32 %s304, 1
    %s306 = scalar_select %p303, %s304, %s305
    %p309 = pneg %p303
    %p310 = scmp.eq.s32.totalorder %s22, 3
    %p311 = por %p309, %p310
    %p312 = scmp.ne.s32.totalorder %s304, %s307
    %p313 = scmp.eq.s32.totalorder %s22, 0
    %p314 = por %p312, %p313
    %p315 = scmp.ne.s32.totalorder %s304, %s307
    %p316 = scmp.eq.s32.totalorder %s27, 3
    %p317 = por %p315, %p316
    %p318 = scmp.ne.s32.totalorder %s307, %s308
    %p319 = scmp.eq.s32.totalorder %s27, 0
    %p320 = por %p318, %p319
    %p321 = scmp.ne.s32.totalorder %s307, %s308
    %p322 = scmp.eq.s32.totalorder %s28, 3
    %p323 = por %p321, %p322
    %p325 = scmp.ne.s32.totalorder %s308, %s324
    %p326 = scmp.eq.s32.totalorder %s28, 0
    %p327 = por %p325, %p326
    %s328 = ssub.s32 %s30, %s37
    %p329 = scmp.eq.s32.totalorder %s328, 0
    %s331 = sadd.s32 %s330, 1
    %s332 = scalar_select %p329, %s330, %s331
    %p335 = pneg %p329
    %p336 = scmp.eq.s32.totalorder %s22, 3
    %p337 = por %p335, %p336
    %p338 = scmp.ne.s32.totalorder %s330, %s333
    %p339 = scmp.eq.s32.totalorder %s22, 0
    %p340 = por %p338, %p339
    %p341 = scmp.ne.s32.totalorder %s330, %s333
    %p342 = scmp.eq.s32.totalorder %s27, 3
    %p343 = por %p341, %p342
    %p344 = scmp.ne.s32.totalorder %s333, %s334
    %p345 = scmp.eq.s32.totalorder %s27, 0
    %p346 = por %p344, %p345
    %p347 = scmp.ne.s32.totalorder %s333, %s334
    %p348 = scmp.eq.s32.totalorder %s28, 3
    %p349 = por %p347, %p348
    %p351 = scmp.ne.s32.totalorder %s334, %s350
    %p352 = scmp.eq.s32.totalorder %s28, 0
    %p353 = por %p351, %p352
    %s354 = ssub.s32 %s30, %s37
    %p355 = scmp.eq.s32.totalorder %s354, 0
    %s357 = sadd.s32 %s356, 1
    %s358 = scalar_select %p355, %s356, %s357
    %p361 = pneg %p355
    %p362 = scmp.eq.s32.totalorder %s22, 3
    %p363 = por %p361, %p362
    %p364 = scmp.ne.s32.totalorder %s356, %s359
    %p365 = scmp.eq.s32.totalorder %s22, 0
    %p366 = por %p364, %p365
    %p367 = scmp.ne.s32.totalorder %s356, %s359
    %p368 = scmp.eq.s32.totalorder %s27, 3
    %p369 = por %p367, %p368
    %p370 = scmp.ne.s32.totalorder %s359, %s360
    %p371 = scmp.eq.s32.totalorder %s27, 0
    %p372 = por %p370, %p371
    %p373 = scmp.ne.s32.totalorder %s359, %s360
    %p374 = scmp.eq.s32.totalorder %s28, 3
    %p375 = por %p373, %p374
    %p377 = scmp.ne.s32.totalorder %s360, %s376
    %p378 = scmp.eq.s32.totalorder %s28, 0
    %p379 = por %p377, %p378
    %s380 = ssub.s32 %s30, %s37
    %p381 = scmp.eq.s32.totalorder %s380, 0
    %s383 = sadd.s32 %s382, 1
    %s384 = scalar_select %p381, %s382, %s383
    %p387 = pneg %p381
    %p388 = scmp.eq.s32.totalorder %s22, 3
    %p389 = por %p387, %p388
    %p390 = scmp.ne.s32.totalorder %s382, %s385
    %p391 = scmp.eq.s32.totalorder %s22, 0
    %p392 = por %p390, %p391
    %p393 = scmp.ne.s32.totalorder %s382, %s385
    %p394 = scmp.eq.s32.totalorder %s27, 3
    %p395 = por %p393, %p394
    %p396 = scmp.ne.s32.totalorder %s385, %s386
    %p397 = scmp.eq.s32.totalorder %s27, 0
    %p398 = por %p396, %p397
    %p399 = scmp.ne.s32.totalorder %s385, %s386
    %p400 = scmp.eq.s32.totalorder %s28, 3
    %p401 = por %p399, %p400
    %p403 = scmp.ne.s32.totalorder %s386, %s402
    %p404 = scmp.eq.s32.totalorder %s28, 0
    %p405 = por %p403, %p404
    %s407 = sadd.s32 %s406, 1
    %p410 = scmp.eq.s32.totalorder %s22, 3
    %p411 = scmp.ne.s32.totalorder %s406, %s408
    %p412 = scmp.eq.s32.totalorder %s22, 0
    %p413 = por %p411, %p412
    %p414 = scmp.ne.s32.totalorder %s406, %s408
    %p415 = scmp.eq.s32.totalorder %s27, 3
    %p416 = por %p414, %p415
    %p417 = scmp.ne.s32.totalorder %s408, %s409
    %p418 = scmp.eq.s32.totalorder %s27, 0
    %p419 = por %p417, %p418
    %p420 = scmp.ne.s32.totalorder %s408, %s409
    %p421 = scmp.eq.s32.totalorder %s28, 3
    %p422 = por %p420, %p421
    %p424 = scmp.ne.s32.totalorder %s409, %s423
    %p425 = scmp.eq.s32.totalorder %s28, 0
    %p426 = por %p424, %p425
    %s428 = sadd.s32 %s427, 1
    %p431 = scmp.eq.s32.totalorder %s22, 3
    %p432 = scmp.ne.s32.totalorder %s427, %s429
    %p433 = scmp.eq.s32.totalorder %s22, 0
    %p434 = por %p432, %p433
    %p435 = scmp.ne.s32.totalorder %s427, %s429
    %p436 = scmp.eq.s32.totalorder %s27, 3
    %p437 = por %p435, %p436
    %p438 = scmp.ne.s32.totalorder %s429, %s430
    %p439 = scmp.eq.s32.totalorder %s27, 0
    %p440 = por %p438, %p439
    %p441 = scmp.ne.s32.totalorder %s429, %s430
    %p442 = scmp.eq.s32.totalorder %s28, 3
    %p443 = por %p441, %p442
    %p445 = scmp.ne.s32.totalorder %s430, %s444
    %p446 = scmp.eq.s32.totalorder %s28, 0
    %p447 = por %p445, %p446
    %s448 = ssub.s32 %s29, %s41
    %p449 = scmp.eq.s32.totalorder %s448, 0
    %s451 = sadd.s32 %s450, 1
    %s452 = scalar_select %p449, %s450, %s451
    %p455 = pneg %p449
    %p456 = scmp.eq.s32.totalorder %s22, 3
    %p457 = por %p455, %p456
    %p458 = scmp.ne.s32.totalorder %s450, %s453
    %p459 = scmp.eq.s32.totalorder %s22, 0
    %p460 = por %p458, %p459
    %p461 = scmp.ne.s32.totalorder %s450, %s453
    %p462 = scmp.eq.s32.totalorder %s27, 3
    %p463 = por %p461, %p462
    %p464 = scmp.ne.s32.totalorder %s453, %s454
    %p465 = scmp.eq.s32.totalorder %s27, 0
    %p466 = por %p464, %p465
    %p467 = scmp.ne.s32.totalorder %s453, %s454
    %p468 = scmp.eq.s32.totalorder %s28, 3
    %p469 = por %p467, %p468
    %p471 = scmp.ne.s32.totalorder %s454, %s470
    %p472 = scmp.eq.s32.totalorder %s28, 0
    %p473 = por %p471, %p472
    %p474 = scmp.le.s32.totalorder 1, %s22
    %p475 = scmp.lt.s32.totalorder %s22, 5
    %p476 = pnand %p474, %p475
    %p477 = pneg %p476
    // Predicated region
    $region9: #{three_dl_bert_forward.5} parent=5 // pred_check
      _
    $region10: #{three_dl_bert_forward.5} parent=5 // pred_check_branch
      %479 = sbr.rel (%p476) target = $region12
    $region11: #{three_dl_bert_forward.5} parent=5 // pred_region
      %s480 = ssub.s32 %s22, 1
      // Predicated region
      $region13: #{three_dl_bert_forward.5} parent=11 // pred_check
        %p481 = pneg %p419
      $region14: #{three_dl_bert_forward.5} parent=11 // pred_check_branch
        %483 = sbr.rel (%p481) target = $region16
      $region15: #{three_dl_bert_forward.5} parent=11 // pred_region
        _
      $region16: #{three_dl_bert_forward.5} parent=11 // pred_fallthru
        _
      // Predicated region
      $region17: #{three_dl_bert_forward.5} parent=11 // pred_check
        %p484 = pneg %p440
      $region18: #{three_dl_bert_forward.5} parent=11 // pred_check_branch
        %486 = sbr.rel (%p484) target = $region20
      $region19: #{three_dl_bert_forward.5} parent=11 // pred_region
        _
      $region20: #{three_dl_bert_forward.5} parent=11 // pred_fallthru
        _
    $region12: #{three_dl_bert_forward.5} parent=5 // pred_fallthru
      _
    %p487 = scmp.lt.s32.totalorder %s22, 4
    // Predicated region
    $region21: #{three_dl_bert_forward.5} parent=5 // pred_check
      %p488 = pneg %p487
    $region22: #{three_dl_bert_forward.5} parent=5 // pred_check_branch
      %490 = sbr.rel (%p488) target = $region24
    $region23: #{three_dl_bert_forward.5} parent=5 // pred_region
      // Predicated region
      $region25: #{three_dl_bert_forward.5} parent=23 // pred_check
        %p491 = pneg %p54
      $region26: #{three_dl_bert_forward.5} parent=23 // pred_check_branch
        %493 = sbr.rel (%p491) target = $region28
      $region27: #{three_dl_bert_forward.5} parent=23 // pred_region
        %p494 = scmp.lt.s32.totalorder %s29, 1
        %s495 = scalar_select %p494, %s29, 1
        %s496 = smul.addr %s495, 4
        %s497 = smul.addr %s496, 8
        %s498 = scalar_lea.vmem %s0, %s497
      $region28: #{three_dl_bert_forward.5} parent=23 // pred_fallthru
        _
      // Predicated region
      $region29: #{three_dl_bert_forward.5} parent=23 // pred_check
        %p499 = pneg %p80
      $region30: #{three_dl_bert_forward.5} parent=23 // pred_check_branch
        %501 = sbr.rel (%p499) target = $region32
      $region31: #{three_dl_bert_forward.5} parent=23 // pred_region
        %p502 = scmp.lt.s32.totalorder %s29, 1
        %s503 = scalar_select %p502, %s29, 1
        %s504 = scalar_lea.vmem %s1, %s503
      $region32: #{three_dl_bert_forward.5} parent=23 // pred_fallthru
        _
      // Predicated region
      $region33: #{three_dl_bert_forward.5} parent=23 // pred_check
        %p505 = pneg %p106
      $region34: #{three_dl_bert_forward.5} parent=23 // pred_check_branch
        %507 = sbr.rel (%p505) target = $region36
      $region35: #{three_dl_bert_forward.5} parent=23 // pred_region
        %p508 = scmp.lt.s32.totalorder %s30, 1
        %s509 = scalar_select %p508, %s30, 1
        %s510 = smul.addr %s509, 48
        %s511 = smul.addr %s510, 4
        %s512 = scalar_lea.vmem %s2, %s511
      $region36: #{three_dl_bert_forward.5} parent=23 // pred_fallthru
        _
      // Predicated region
      $region37: #{three_dl_bert_forward.5} parent=23 // pred_check
        %p513 = pneg %p132
      $region38: #{three_dl_bert_forward.5} parent=23 // pred_check_branch
        %515 = sbr.rel (%p513) target = $region40
      $region39: #{three_dl_bert_forward.5} parent=23 // pred_region
        %p516 = scmp.lt.s32.totalorder %s30, 1
        %s517 = scalar_select %p516, %s30, 1
        %s518 = smul.addr %s517, 3
        %s519 = scalar_lea.vmem %s3, %s518
      $region40: #{three_dl_bert_forward.5} parent=23 // pred_fallthru
        _
      // Predicated region
      $region41: #{three_dl_bert_forward.5} parent=23 // pred_check
        %p520 = pneg %p158
      $region42: #{three_dl_bert_forward.5} parent=23 // pred_check_branch
        %522 = sbr.rel (%p520) target = $region44
      $region43: #{three_dl_bert_forward.5} parent=23 // pred_region
        %p523 = scmp.lt.s32.totalorder %s30, 1
        %s524 = scalar_select %p523, %s30, 1
        %s525 = smul.addr %s524, 16
        %s526 = smul.addr %s525, 4
        %s527 = scalar_lea.vmem %s4, %s526
      $region44: #{three_dl_bert_forward.5} parent=23 // pred_fallthru
        _
      // Predicated region
      $region45: #{three_dl_bert_forward.5} parent=23 // pred_check
        %p528 = pneg %p184
      $region46: #{three_dl_bert_forward.5} parent=23 // pred_check_branch
        %530 = sbr.rel (%p528) target = $region48
      $region47: #{three_dl_bert_forward.5} parent=23 // pred_region
        %p531 = scmp.lt.s32.totalorder %s30, 1
        %s532 = scalar_select %p531, %s30, 1
        %s533 = scalar_lea.vmem %s5, %s532
      $region48: #{three_dl_bert_forward.5} parent=23 // pred_fallthru
        _
      // Predicated region
      $region49: #{three_dl_bert_forward.5} parent=23 // pred_check
        %p534 = pneg %p210
      $region50: #{three_dl_bert_forward.5} parent=23 // pred_check_branch
        %536 = sbr.rel (%p534) target = $region52
      $region51: #{three_dl_bert_forward.5} parent=23 // pred_region
        %p537 = scmp.lt.s32.totalorder %s30, 1
        %s538 = scalar_select %p537, %s30, 1
        %s539 = scalar_lea.vmem %s6, %s538
      $region52: #{three_dl_bert_forward.5} parent=23 // pred_fallthru
        _
      // Predicated region
      $region53: #{three_dl_bert_forward.5} parent=23 // pred_check
        %p540 = pneg %p236
      $region54: #{three_dl_bert_forward.5} parent=23 // pred_check_branch
        %542 = sbr.rel (%p540) target = $region56
      $region55: #{three_dl_bert_forward.5} parent=23 // pred_region
        %p543 = scmp.lt.s32.totalorder %s30, 1
        %s544 = scalar_select %p543, %s30, 1
        %s545 = scalar_lea.vmem %s7, %s544
      $region56: #{three_dl_bert_forward.5} parent=23 // pred_fallthru
        _
      // Predicated region
      $region57: #{three_dl_bert_forward.5} parent=23 // pred_check
        %p546 = pneg %p262
      $region58: #{three_dl_bert_forward.5} parent=23 // pred_check_branch
        %548 = sbr.rel (%p546) target = $region60
      $region59: #{three_dl_bert_forward.5} parent=23 // pred_region
        %p549 = scmp.lt.s32.totalorder %s30, 1
        %s550 = scalar_select %p549, %s30, 1
        %s551 = smul.addr %s550, 32
        %s552 = smul.addr %s551, 4
        %s553 = scalar_lea.vmem %s8, %s552
      $region60: #{three_dl_bert_forward.5} parent=23 // pred_fallthru
        _
      // Predicated region
      $region61: #{three_dl_bert_forward.5} parent=23 // pred_check
        %p554 = pneg %p288
      $region62: #{three_dl_bert_forward.5} parent=23 // pred_check_branch
        %556 = sbr.rel (%p554) target = $region64
      $region63: #{three_dl_bert_forward.5} parent=23 // pred_region
        %p557 = scmp.lt.s32.totalorder %s30, 1
        %s558 = scalar_select %p557, %s30, 1
        %s559 = smul.addr %s558, 2
        %s560 = scalar_lea.vmem %s9, %s559
      $region64: #{three_dl_bert_forward.5} parent=23 // pred_fallthru
        _
      // Predicated region
      $region65: #{three_dl_bert_forward.5} parent=23 // pred_check
        %p561 = pneg %p314
      $region66: #{three_dl_bert_forward.5} parent=23 // pred_check_branch
        %563 = sbr.rel (%p561) target = $region68
      $region67: #{three_dl_bert_forward.5} parent=23 // pred_region
        %p564 = scmp.lt.s32.totalorder %s30, 1
        %s565 = scalar_select %p564, %s30, 1
        %s566 = smul.addr %s565, 32
        %s567 = smul.addr %s566, 4
        %s568 = scalar_lea.vmem %s10, %s567
      $region68: #{three_dl_bert_forward.5} parent=23 // pred_fallthru
        _
      // Predicated region
      $region69: #{three_dl_bert_forward.5} parent=23 // pred_check
        %p569 = pneg %p340
      $region70: #{three_dl_bert_forward.5} parent=23 // pred_check_branch
        %571 = sbr.rel (%p569) target = $region72
      $region71: #{three_dl_bert_forward.5} parent=23 // pred_region
        %p572 = scmp.lt.s32.totalorder %s30, 1
        %s573 = scalar_select %p572, %s30, 1
        %s574 = scalar_lea.vmem %s11, %s573
      $region72: #{three_dl_bert_forward.5} parent=23 // pred_fallthru
        _
      // Predicated region
      $region73: #{three_dl_bert_forward.5} parent=23 // pred_check
        %p575 = pneg %p366
      $region74: #{three_dl_bert_forward.5} parent=23 // pred_check_branch
        %577 = sbr.rel (%p575) target = $region76
      $region75: #{three_dl_bert_forward.5} parent=23 // pred_region
        %p578 = scmp.lt.s32.totalorder %s30, 1
        %s579 = scalar_select %p578, %s30, 1
        %s580 = scalar_lea.vmem %s12, %s579
      $region76: #{three_dl_bert_forward.5} parent=23 // pred_fallthru
        _
      // Predicated region
      $region77: #{three_dl_bert_forward.5} parent=23 // pred_check
        %p581 = pneg %p392
      $region78: #{three_dl_bert_forward.5} parent=23 // pred_check_branch
        %583 = sbr.rel (%p581) target = $region80
      $region79: #{three_dl_bert_forward.5} parent=23 // pred_region
        %p584 = scmp.lt.s32.totalorder %s30, 1
        %s585 = scalar_select %p584, %s30, 1
        %s586 = scalar_lea.vmem %s13, %s585
      $region80: #{three_dl_bert_forward.5} parent=23 // pred_fallthru
        _
    $region24: #{three_dl_bert_forward.5} parent=5 // pred_fallthru
      _
    %p587 = scmp.le.s32.totalorder 1, %s22
    %p588 = scmp.lt.s32.totalorder %s22, 5
    %p589 = pnand %p587, %p588
    %p590 = pneg %p589
    // Predicated region
    $region81: #{three_dl_bert_forward.5} parent=5 // pred_check
      _
    $region82: #{three_dl_bert_forward.5} parent=5 // pred_check_branch
      %592 = sbr.rel (%p589) target = $region84
    $region83: #{three_dl_bert_forward.5} parent=5 // pred_region
      %s593 = ssub.s32 %s22, 1
      %p594 = scmp.lt.s32.totalorder %s31, 1
      %s595 = scalar_select %p594, %s31, 1
      %s596 = smul.addr %s595, 4
      %s597 = smul.addr %s596, 8
      %s598 = scalar_lea.vmem %s0, %s597
      %p599 = pneg %p60
      %p600 = pneg %p57
      %p601 = scmp.lt.s32.totalorder %s31, 1
      %s602 = scalar_select %p601, %s31, 1
      %s603 = scalar_lea.vmem %s1, %s602
      %p604 = pneg %p86
      %p605 = pneg %p83
      %p606 = scmp.lt.s32.totalorder %s32, 1
      %s607 = scalar_select %p606, %s32, 1
      %s608 = smul.addr %s607, 48
      %s609 = smul.addr %s608, 4
      %s610 = scalar_lea.vmem %s2, %s609
      %p611 = pneg %p112
      %p612 = pneg %p109
      %p613 = scmp.lt.s32.totalorder %s32, 1
      %s614 = scalar_select %p613, %s32, 1
      %s615 = smul.addr %s614, 3
      %s616 = scalar_lea.vmem %s3, %s615
      %p617 = pneg %p138
      %p618 = pneg %p135
      %p619 = scmp.lt.s32.totalorder %s32, 1
      %s620 = scalar_select %p619, %s32, 1
      %s621 = smul.addr %s620, 16
      %s622 = smul.addr %s621, 4
      %s623 = scalar_lea.vmem %s4, %s622
      %p624 = pneg %p164
      %p625 = pneg %p161
      %p626 = scmp.lt.s32.totalorder %s32, 1
      %s627 = scalar_select %p626, %s32, 1
      %s628 = scalar_lea.vmem %s5, %s627
      %p629 = pneg %p190
      %p630 = pneg %p187
      %p631 = scmp.lt.s32.totalorder %s32, 1
      %s632 = scalar_select %p631, %s32, 1
      %s633 = scalar_lea.vmem %s6, %s632
      %p634 = pneg %p216
      %p635 = pneg %p213
      %p636 = scmp.lt.s32.totalorder %s32, 1
      %s637 = scalar_select %p636, %s32, 1
      %s638 = scalar_lea.vmem %s7, %s637
      %p639 = pneg %p242
      %p640 = pneg %p239
      %p641 = scmp.lt.s32.totalorder %s32, 1
      %s642 = scalar_select %p641, %s32, 1
      %s643 = smul.addr %s642, 32
      %s644 = smul.addr %s643, 4
      %s645 = scalar_lea.vmem %s8, %s644
      %p646 = pneg %p268
      %p647 = pneg %p265
      %p648 = scmp.lt.s32.totalorder %s32, 1
      %s649 = scalar_select %p648, %s32, 1
      %s650 = smul.addr %s649, 2
      %s651 = scalar_lea.vmem %s9, %s650
      %p652 = pneg %p294
      %p653 = pneg %p291
      %p654 = scmp.lt.s32.totalorder %s32, 1
      %s655 = scalar_select %p654, %s32, 1
      %s656 = smul.addr %s655, 32
      %s657 = smul.addr %s656, 4
      %s658 = scalar_lea.vmem %s10, %s657
      %p659 = pneg %p320
      %p660 = pneg %p317
      %p661 = scmp.lt.s32.totalorder %s32, 1
      %s662 = scalar_select %p661, %s32, 1
      %s663 = scalar_lea.vmem %s11, %s662
      %p664 = pneg %p346
      %p665 = pneg %p343
      %p666 = scmp.lt.s32.totalorder %s32, 1
      %s667 = scalar_select %p666, %s32, 1
      %s668 = scalar_lea.vmem %s12, %s667
      %p669 = pneg %p372
      %p670 = pneg %p369
      %p671 = scmp.lt.s32.totalorder %s32, 1
      %s672 = scalar_select %p671, %s32, 1
      %s673 = scalar_lea.vmem %s13, %s672
      %p674 = pneg %p398
      %p675 = pneg %p395
      %p676 = pneg %p419
      %p677 = pneg %p416
      %p678 = pneg %p440
      %p679 = pneg %p437
      %p680 = pneg %p466
      %p681 = pneg %p463
      %p682 = scmp.lt.s32.totalorder %s31, 1
      %s683 = scalar_select %p682, %s31, 1
      %s684 = smul.addr %s683, 4
      %s685 = smul.addr %s684, 8
      %s686 = scalar_lea.vmem %s16, %s685
      %p687 = scmp.lt.s32.totalorder %s31, 1
      %s688 = scalar_select %p687, %s31, 1
      %s689 = smul.addr %s688, 4
      %s690 = smul.addr %s689, 8
      %s691 = scalar_lea.vmem %s0, %s690
      %p692 = scmp.lt.s32.totalorder %s31, 1
      %s693 = scalar_select %p692, %s31, 1
      %s694 = scalar_lea.vmem %s1, %s693
      %p695 = scmp.lt.s32.totalorder %s32, 1
      %s696 = scalar_select %p695, %s32, 1
      %s697 = smul.addr %s696, 48
      %s698 = smul.addr %s697, 4
      %s699 = scalar_lea.vmem %s2, %s698
      %p700 = scmp.lt.s32.totalorder %s32, 1
      %s701 = scalar_select %p700, %s32, 1
      %s702 = smul.addr %s701, 3
      %s703 = scalar_lea.vmem %s3, %s702
      %p704 = scmp.lt.s32.totalorder %s32, 1
      %s705 = scalar_select %p704, %s32, 1
      %s706 = smul.addr %s705, 16
      %s707 = smul.addr %s706, 4
      %s708 = scalar_lea.vmem %s4, %s707
      %p709 = scmp.lt.s32.totalorder %s32, 1
      %s710 = scalar_select %p709, %s32, 1
      %s711 = scalar_lea.vmem %s5, %s710
      %p712 = scmp.lt.s32.totalorder %s32, 1
      %s713 = scalar_select %p712, %s32, 1
      %s714 = scalar_lea.vmem %s6, %s713
      %p715 = scmp.lt.s32.totalorder %s32, 1
      %s716 = scalar_select %p715, %s32, 1
      %s717 = scalar_lea.vmem %s7, %s716
      %p718 = scmp.lt.s32.totalorder %s32, 1
      %s719 = scalar_select %p718, %s32, 1
      %s720 = smul.addr %s719, 32
      %s721 = smul.addr %s720, 4
      %s722 = scalar_lea.vmem %s8, %s721
      %p723 = scmp.lt.s32.totalorder %s32, 1
      %s724 = scalar_select %p723, %s32, 1
      %s725 = smul.addr %s724, 2
      %s726 = scalar_lea.vmem %s9, %s725
      %p727 = scmp.lt.s32.totalorder %s32, 1
      %s728 = scalar_select %p727, %s32, 1
      %s729 = smul.addr %s728, 32
      %s730 = smul.addr %s729, 4
      %s731 = scalar_lea.vmem %s10, %s730
      %p732 = scmp.lt.s32.totalorder %s32, 1
      %s733 = scalar_select %p732, %s32, 1
      %s734 = scalar_lea.vmem %s11, %s733
      %p735 = scmp.lt.s32.totalorder %s32, 1
      %s736 = scalar_select %p735, %s32, 1
      %s737 = scalar_lea.vmem %s12, %s736
      %p738 = scmp.lt.s32.totalorder %s32, 1
      %s739 = scalar_select %p738, %s32, 1
      %s740 = scalar_lea.vmem %s13, %s739
      %p741 = scmp.lt.s32.totalorder %s31, 1
      %s742 = scalar_select %p741, %s31, 1
      %s743 = smul.addr %s742, 4
      %s744 = smul.addr %s743, 8
      %s745 = scalar_lea.vmem %s16, %s744
      %p747 = scmp.eq.s32.totalorder %s32, 0
      // Predicated region
      $region85: #{three_dl_bert_forward.5} parent=83 // pred_check
        %p748 = pneg %p747
      $region86: #{three_dl_bert_forward.5} parent=83 // pred_check_branch
        %750 = sbr.rel (%p748) target = $region88
      $region87: #{three_dl_bert_forward.5} parent=83 // pred_region
        %v751 = vld [vmem:[%s691] sm:$0xff]
        %v752 = vld [vmem:[%s691 + $0x8] sm:$0xff]
        %v753 = vld [vmem:[%s691 + $0x10] sm:$0xff]
        %v754 = vld [vmem:[%s691 + $0x18] sm:$0xff]
        %v755 = vld [vmem:[%s14] sm:$0x1]
        %v756 = vld [vmem:[%s15] sm:$0x1]
        %757 = vadd.xlane.f32.xlu0 %v751
        %v758 = vpop.xlane.xlu0 %757
        %759 = vadd.xlane.f32.xlu0 %v752
        %v760 = vpop.xlane.xlu0 %759
        %761 = vadd.xlane.f32.xlu0 %v753
        %v762 = vpop.xlane.xlu0 %761
        %763 = vadd.xlane.f32.xlu0 %v754
        %v764 = vpop.xlane.xlu0 %763
        %v765 = vrcp.pop 128.0
        %v766 = vmul.f32 128.0, %v765
        %v767 = vsub.f32 1.0, %v766
        %v768 = vmul.f32 %v765, %v767
        %v769 = vadd.f32 %v765, %v768
        %vm770 = vweird.f32 %v765
        %v771 = vsel %vm770, %v765, %v769
        %v772 = vmul.f32 %v758, %v771
        %v773 = vmul.f32 %v760, %v771
        %v774 = vmul.f32 %v762, %v771
        %v775 = vmul.f32 %v764, %v771
        %v776 = vsub.f32 %v751, %v772
        %v777 = vsub.f32 %v752, %v773
        %v778 = vsub.f32 %v753, %v774
        %v779 = vsub.f32 %v754, %v775
        %v780 = vmul.f32 %v776, %v776
        %v781 = vmul.f32 %v777, %v777
        %v782 = vmul.f32 %v778, %v778
        %v783 = vmul.f32 %v779, %v779
        %784 = vadd.xlane.f32.xlu0 %v780
        %v785 = vpop.xlane.xlu0 %784
        %786 = vadd.xlane.f32.xlu0 %v781
        %v787 = vpop.xlane.xlu0 %786
        %788 = vadd.xlane.f32.xlu0 %v782
        %v789 = vpop.xlane.xlu0 %788
        %790 = vadd.xlane.f32.xlu0 %v783
        %v791 = vpop.xlane.xlu0 %790
        %v792 = vmul.f32 %v785, %v771
        %v793 = vmul.f32 %v787, %v771
        %v794 = vmul.f32 %v789, %v771
        %v795 = vmul.f32 %v791, %v771
        %v796 = vadd.f32 %v792, 1e-12
        %v797 = vadd.f32 %v793, 1e-12
        %v798 = vadd.f32 %v794, 1e-12
        %v799 = vadd.f32 %v795, 1e-12
        %v800 = vrsqrt.pop %v796
        %v801 = vmul.f32 %v800, %v796
        %v802 = vmul.f32 %v801, %v800
        %v803 = vmul.f32 0.5, %v802
        %v804 = vsub.f32 1.5, %v803
        %v805 = vmul.f32 %v800, %v804
        %vm806 = vweird.f32 %v796
        %vm807 = vweird.f32 %v800
        %vm808 = vmor %vm806, %vm807
        %v809 = vsel %vm808, %v800, %v805
        %v810 = vrsqrt.pop %v797
        %v811 = vmul.f32 %v810, %v797
        %v812 = vmul.f32 %v811, %v810
        %v813 = vmul.f32 0.5, %v812
        %v814 = vsub.f32 1.5, %v813
        %v815 = vmul.f32 %v810, %v814
        %vm816 = vweird.f32 %v797
        %vm817 = vweird.f32 %v810
        %vm818 = vmor %vm816, %vm817
        %v819 = vsel %vm818, %v810, %v815
        %v820 = vrsqrt.pop %v798
        %v821 = vmul.f32 %v820, %v798
        %v822 = vmul.f32 %v821, %v820
        %v823 = vmul.f32 0.5, %v822
        %v824 = vsub.f32 1.5, %v823
        %v825 = vmul.f32 %v820, %v824
        %vm826 = vweird.f32 %v798
        %vm827 = vweird.f32 %v820
        %vm828 = vmor %vm826, %vm827
        %v829 = vsel %vm828, %v820, %v825
        %v830 = vrsqrt.pop %v799
        %v831 = vmul.f32 %v830, %v799
        %v832 = vmul.f32 %v831, %v830
        %v833 = vmul.f32 0.5, %v832
        %v834 = vsub.f32 1.5, %v833
        %v835 = vmul.f32 %v830, %v834
        %vm836 = vweird.f32 %v799
        %vm837 = vweird.f32 %v830
        %vm838 = vmor %vm836, %vm837
        %v839 = vsel %vm838, %v830, %v835
        %v840 = vmul.f32 %v776, %v809
        %v841 = vmul.f32 %v777, %v819
        %v842 = vmul.f32 %v778, %v829
        %v843 = vmul.f32 %v779, %v839
        %v845 = vperm.slane %v755, 0
        %v847 = vmul.f32 %v840, %v845
        %v848 = vmul.f32 %v841, %v845
        %v849 = vmul.f32 %v842, %v845
        %v850 = vmul.f32 %v843, %v845
        %v852 = vperm.slane %v756, 0
        %v854 = vadd.f32 %v847, %v852
        %v855 = vadd.f32 %v848, %v852
        %v856 = vadd.f32 %v849, %v852
        %v857 = vadd.f32 %v850, %v852
        %858 = vst [vmem:[#allocation2] sm:$0xff] %v854
        %859 = vst [vmem:[#allocation2 + $0x8] sm:$0xff] %v855
        %860 = vst [vmem:[#allocation2 + $0x10] sm:$0xff] %v856
        %861 = vst [vmem:[#allocation2 + $0x18] sm:$0xff] %v857
      $region88: #{three_dl_bert_forward.5} parent=83 // pred_fallthru
        _
      %v862 = vld [vmem:[#allocation2] sm:$0xff]
      %v863 = vld [vmem:[#allocation2 + $0x8] sm:$0xff]
      %v864 = vld [vmem:[#allocation2 + $0x10] sm:$0xff]
      %v865 = vld [vmem:[#allocation2 + $0x18] sm:$0xff]
      %v866 = vpack.c.bf16 %v863, %v862
      %v867 = vpack.c.bf16 %v865, %v864
      %v868 = vld [vmem:[%s699] sm:$0xff]
      %v869 = vld [vmem:[%s699 + $0x8] sm:$0xf]
      %v870 = vld [vmem:[%s699 + $0xc] sm:$0xff]
      %v871 = vld [vmem:[%s699 + $0x14] sm:$0xf]
      %v872 = vld [vmem:[%s699 + $0x18] sm:$0xff]
      %v873 = vld [vmem:[%s699 + $0x20] sm:$0xf]
      %v874 = vld [vmem:[%s699 + $0x24] sm:$0xff]
      %v875 = vld [vmem:[%s699 + $0x2c] sm:$0xf]
      %v876 = vld [vmem:[%s699 + $0x30] sm:$0xff]
      %v877 = vld [vmem:[%s699 + $0x38] sm:$0xf]
      %v878 = vld [vmem:[%s699 + $0x3c] sm:$0xff]
      %v879 = vld [vmem:[%s699 + $0x44] sm:$0xf]
      %v880 = vld [vmem:[%s699 + $0x48] sm:$0xff]
      %v881 = vld [vmem:[%s699 + $0x50] sm:$0xf]
      %v882 = vld [vmem:[%s699 + $0x54] sm:$0xff]
      %v883 = vld [vmem:[%s699 + $0x5c] sm:$0xf]
      %v884 = vld [vmem:[%s699 + $0x60] sm:$0xff]
      %v885 = vld [vmem:[%s699 + $0x68] sm:$0xf]
      %v886 = vld [vmem:[%s699 + $0x6c] sm:$0xff]
      %v887 = vld [vmem:[%s699 + $0x74] sm:$0xf]
      %v888 = vld [vmem:[%s699 + $0x78] sm:$0xff]
      %v889 = vld [vmem:[%s699 + $0x80] sm:$0xf]
      %v890 = vld [vmem:[%s699 + $0x84] sm:$0xff]
      %v891 = vld [vmem:[%s699 + $0x8c] sm:$0xf]
      %v892 = vld [vmem:[%s699 + $0x90] sm:$0xff]
      %v893 = vld [vmem:[%s699 + $0x98] sm:$0xf]
      %v894 = vld [vmem:[%s699 + $0x9c] sm:$0xff]
      %v895 = vld [vmem:[%s699 + $0xa4] sm:$0xf]
      %v896 = vld [vmem:[%s699 + $0xa8] sm:$0xff]
      %v897 = vld [vmem:[%s699 + $0xb0] sm:$0xf]
      %v898 = vld [vmem:[%s699 + $0xb4] sm:$0xff]
      %v899 = vld [vmem:[%s699 + $0xbc] sm:$0xf]
      %v900 = vld [vmem:[%s703] sm:$0x7]
      %v902 = vperm.slane %v900, 0
      %v903 = vperm.slane %v900, 1
      %v904 = vperm.slane %v900, 2
      %v940 = vunpack.c.l.b16 %v868
      %v941 = vunpack.c.h.b16 %v868
      %v942 = vunpack.c.l.b16 %v869
      %v943 = vunpack.c.l.b16 %v870
      %v944 = vunpack.c.h.b16 %v870
      %v945 = vunpack.c.l.b16 %v871
      %v946 = vunpack.c.l.b16 %v872
      %v947 = vunpack.c.h.b16 %v872
      %v948 = vunpack.c.l.b16 %v873
      %v949 = vunpack.c.l.b16 %v874
      %v950 = vunpack.c.h.b16 %v874
      %v951 = vunpack.c.l.b16 %v875
      %v952 = vunpack.c.l.b16 %v876
      %v953 = vunpack.c.h.b16 %v876
      %v954 = vunpack.c.l.b16 %v877
      %v955 = vunpack.c.l.b16 %v878
      %v956 = vunpack.c.h.b16 %v878
      %v957 = vunpack.c.l.b16 %v879
      %v958 = vunpack.c.l.b16 %v880
      %v959 = vunpack.c.h.b16 %v880
      %v960 = vunpack.c.l.b16 %v881
      %v961 = vunpack.c.l.b16 %v882
      %v962 = vunpack.c.h.b16 %v882
      %v963 = vunpack.c.l.b16 %v883
      %v964 = vunpack.c.l.b16 %v884
      %v965 = vunpack.c.h.b16 %v884
      %v966 = vunpack.c.l.b16 %v885
      %v967 = vunpack.c.l.b16 %v886
      %v968 = vunpack.c.h.b16 %v886
      %v969 = vunpack.c.l.b16 %v887
      %v970 = vunpack.c.l.b16 %v888
      %v971 = vunpack.c.h.b16 %v888
      %v972 = vunpack.c.l.b16 %v889
      %v973 = vunpack.c.l.b16 %v890
      %v974 = vunpack.c.h.b16 %v890
      %v975 = vunpack.c.l.b16 %v891
      %v976 = vunpack.c.l.b16 %v892
      %v977 = vunpack.c.h.b16 %v892
      %v978 = vunpack.c.l.b16 %v893
      %v979 = vunpack.c.l.b16 %v894
      %v980 = vunpack.c.h.b16 %v894
      %v981 = vunpack.c.l.b16 %v895
      %v982 = vunpack.c.l.b16 %v896
      %v983 = vunpack.c.h.b16 %v896
      %v984 = vunpack.c.l.b16 %v897
      %v985 = vunpack.c.l.b16 %v898
      %v986 = vunpack.c.h.b16 %v898
      %v987 = vunpack.c.l.b16 %v899
      %v988 = vpack.c.b16 %v943, %v940
      %v989 = vpack.c.b16 %v944, %v941
      %v990 = vpack.c.b16 %v945, %v942
      %v991 = vpack.c.b16 %v949, %v946
      %v992 = vpack.c.b16 %v950, %v947
      %v993 = vpack.c.b16 %v951, %v948
      %v994 = vpack.c.b16 %v955, %v952
      %v995 = vpack.c.b16 %v956, %v953
      %v996 = vpack.c.b16 %v957, %v954
      %v997 = vpack.c.b16 %v961, %v958
      %v998 = vpack.c.b16 %v962, %v959
      %v999 = vpack.c.b16 %v963, %v960
      %v1000 = vpack.c.b16 %v967, %v964
      %v1001 = vpack.c.b16 %v968, %v965
      %v1002 = vpack.c.b16 %v969, %v966
      %v1003 = vpack.c.b16 %v973, %v970
      %v1004 = vpack.c.b16 %v974, %v971
      %v1005 = vpack.c.b16 %v975, %v972
      %v1006 = vpack.c.b16 %v979, %v976
      %v1007 = vpack.c.b16 %v980, %v977
      %v1008 = vpack.c.b16 %v981, %v978
      %v1009 = vpack.c.b16 %v985, %v982
      %v1010 = vpack.c.b16 %v986, %v983
      %v1011 = vpack.c.b16 %v987, %v984
      %1036 = vmatpush.bf16.msra.mxu0 %v1009
      %1037 = vmatpush.bf16.msra.mxu0 %v1006
      %1038 = vmatpush.bf16.msra.mxu0 %v1003
      %1039 = vmatpush.bf16.msra.mxu0 %v1000
      %1040 = vmatpush.bf16.msra.mxu0 %v997
      %1041 = vmatpush.bf16.msra.mxu0 %v994
      %1042 = vmatpush.bf16.msra.mxu0 %v991
      %1043 = vmatpush.bf16.msra.mxu0 %v988
      %1044 = vmatmul.bf16.gmra.mxu0 %v866
      %v1045 = vpop.f32.mrf.mxu0
      %v1046 = vadd.f32 %v902, %v1045
      %v1047 = vpop.f32.mrf.mxu0
      %v1048 = vadd.f32 %v902, %v1047
      %1049 = vmatmul.bf16.gmra.mxu0 %v867
      %v1050 = vpop.f32.mrf.mxu0
      %v1051 = vadd.f32 %v902, %v1050
      %v1052 = vpop.f32.mrf.mxu0
      %v1053 = vadd.f32 %v902, %v1052
      %1054 = vdwg.mxu0
      %1055 = vmatpush.bf16.msra.mxu0 %v1010
      %1056 = vmatpush.bf16.msra.mxu0 %v1007
      %1057 = vmatpush.bf16.msra.mxu0 %v1004
      %1058 = vmatpush.bf16.msra.mxu0 %v1001
      %1059 = vmatpush.bf16.msra.mxu0 %v998
      %1060 = vmatpush.bf16.msra.mxu0 %v995
      %1061 = vmatpush.bf16.msra.mxu0 %v992
      %1062 = vmatpush.bf16.msra.mxu0 %v989
      %1063 = vmatmul.bf16.gmra.mxu0 %v866
      %v1064 = vpop.f32.mrf.mxu0
      %v1065 = vadd.f32 %v903, %v1064
      %v1066 = vpop.f32.mrf.mxu0
      %v1067 = vadd.f32 %v903, %v1066
      %1068 = vmatmul.bf16.gmra.mxu0 %v867
      %v1069 = vpop.f32.mrf.mxu0
      %v1070 = vadd.f32 %v903, %v1069
      %v1071 = vpop.f32.mrf.mxu0
      %v1072 = vadd.f32 %v903, %v1071
      %1073 = vdwg.mxu0
      %1074 = vmatpush.bf16.msra.mxu0 %v1011
      %1075 = vmatpush.bf16.msra.mxu0 %v1008
      %1076 = vmatpush.bf16.msra.mxu0 %v1005
      %1077 = vmatpush.bf16.msra.mxu0 %v1002
      %1078 = vmatpush.bf16.msra.mxu0 %v999
      %1079 = vmatpush.bf16.msra.mxu0 %v996
      %1080 = vmatpush.bf16.msra.mxu0 %v993
      %1081 = vmatpush.bf16.msra.mxu0 %v990
      %1082 = vmatmul.bf16.gmra.mxu0 %v866
      %v1083 = vpop.f32.mrf.mxu0
      %v1084 = vadd.f32 %v904, %v1083
      %v1085 = vpop.f32.mrf.mxu0
      %v1086 = vadd.f32 %v904, %v1085
      %1087 = vmatmul.bf16.gmra.mxu0 %v867
      %v1088 = vpop.f32.mrf.mxu0
      %v1089 = vadd.f32 %v904, %v1088
      %v1090 = vpop.f32.mrf.mxu0
      %v1091 = vadd.f32 %v904, %v1090
      %1092 = vdwg.mxu0
      %v1093 = vld [vmem:[%s694] sm:$0x1]
      %v1094 = vpack.c.bf16 %v1048, %v1046
      %v1095 = vpack.c.bf16 %v1053, %v1051
      %v1096 = vpack.c.bf16 %v1067, %v1065
      %v1097 = vpack.c.bf16 %v1072, %v1070
      %v1098 = vpack.c.bf16 %v1086, %v1084
      %v1099 = vpack.c.bf16 %v1091, %v1089
      %v1101 = vperm.slane %v1093, 0
      %vm1103 = vcmask 523264
      %v1105 = vsel %vm1103, %v1094, 0
      %v1108 = vsel %vm1103, %v1095, 0
      %v1111 = vsel %vm1103, %v1096, 0
      %v1114 = vsel %vm1103, %v1097, 0
      %1116 = vmatpush.bf16.xpose.msra.mxu0 0
      %1117 = vmatpush.bf16.xpose.msra.mxu0 0
      %1118 = vmatpush.bf16.xpose.msra.mxu0 0
      %1119 = vmatpush.bf16.xpose.msra.mxu0 0
      %1120 = vmatpush.bf16.xpose.msra.mxu0 0
      %1121 = vmatpush.bf16.xpose.msra.mxu0 0
      %1122 = vmatpush.bf16.xpose.msra.mxu0 %v1114
      %1123 = vmatpush.bf16.xpose.msra.mxu0 %v1111
      %1124 = vmatmul.bf16.gmra.mxu0 %v1105
      %v1125 = vpop.f32.mrf.mxu0
      %v1126 = vadd.f32 %v1101, %v1125
      %v1127 = vpop.f32.mrf.mxu0
      %v1128 = vadd.f32 %v1101, %v1127
      %1129 = vmatmul.bf16.gmra.mxu0 %v1108
      %v1130 = vpop.f32.mrf.mxu0
      %v1131 = vadd.f32 %v1101, %v1130
      %v1132 = vpop.f32.mrf.mxu0
      %v1133 = vadd.f32 %v1101, %v1132
      %1134 = vdwg.mxu0
      %vm1135 = vcmask 261120
      %v1136 = vsel %vm1135, %v1126, -inf
      %1137 = vmax.xlane.f32.xlu0 %v1136
      %v1138 = vpop.xlane.xlu0 %1137
      %v1139 = vsel %vm1135, %v1128, -inf
      %1140 = vmax.xlane.f32.xlu0 %v1139
      %v1141 = vpop.xlane.xlu0 %1140
      %v1142 = vsel %vm1135, %v1131, -inf
      %1143 = vmax.xlane.f32.xlu0 %v1142
      %v1144 = vpop.xlane.xlu0 %1143
      %v1145 = vsel %vm1135, %v1133, -inf
      %1146 = vmax.xlane.f32.xlu0 %v1145
      %v1147 = vpop.xlane.xlu0 %1146
      %v1148 = vsub.f32 %v1126, %v1138
      %v1149 = vsub.f32 %v1128, %v1141
      %v1150 = vsub.f32 %v1131, %v1144
      %v1151 = vsub.f32 %v1133, %v1147
      %v1152 = vmul.f32 %v1148, 1.442695
      %v1153 = vpow.pop %v1152
      %v1154 = vmul.f32 %v1149, 1.442695
      %v1155 = vpow.pop %v1154
      %v1156 = vmul.f32 %v1150, 1.442695
      %v1157 = vpow.pop %v1156
      %v1158 = vmul.f32 %v1151, 1.442695
      %v1159 = vpow.pop %v1158
      %v1160 = vsel %vm1135, %v1153, 0.0
      %1161 = vadd.xlane.f32.xlu0 %v1160
      %v1162 = vpop.xlane.xlu0 %1161
      %v1163 = vsel %vm1135, %v1155, 0.0
      %1164 = vadd.xlane.f32.xlu0 %v1163
      %v1165 = vpop.xlane.xlu0 %1164
      %v1166 = vsel %vm1135, %v1157, 0.0
      %1167 = vadd.xlane.f32.xlu0 %v1166
      %v1168 = vpop.xlane.xlu0 %1167
      %v1169 = vsel %vm1135, %v1159, 0.0
      %1170 = vadd.xlane.f32.xlu0 %v1169
      %v1171 = vpop.xlane.xlu0 %1170
      %v1172 = vrcp.pop %v1162
      %v1173 = vmul.f32 %v1162, %v1172
      %v1174 = vsub.f32 1.0, %v1173
      %v1175 = vmul.f32 %v1172, %v1174
      %v1176 = vadd.f32 %v1172, %v1175
      %vm1177 = vweird.f32 %v1162
      %vm1178 = vweird.f32 %v1172
      %vm1179 = vmor %vm1177, %vm1178
      %v1180 = vsel %vm1179, %v1172, %v1176
      %v1181 = vand.u32 2147483647, %v1162
      %vm1182 = vcmp.eq.f32.partialorder %v1181, 8.507059e+37
      %v1183 = vand.u32 %v1162, 2147483648
      %v1184 = vor.u32 1.1754944e-38, %v1183
      %v1185 = vsel %vm1182, %v1184, %v1180
      %v1186 = vmul.f32 %v1153, %v1185
      %v1187 = vrcp.pop %v1165
      %v1188 = vmul.f32 %v1165, %v1187
      %v1189 = vsub.f32 1.0, %v1188
      %v1190 = vmul.f32 %v1187, %v1189
      %v1191 = vadd.f32 %v1187, %v1190
      %vm1192 = vweird.f32 %v1165
      %vm1193 = vweird.f32 %v1187
      %vm1194 = vmor %vm1192, %vm1193
      %v1195 = vsel %vm1194, %v1187, %v1191
      %v1196 = vand.u32 2147483647, %v1165
      %vm1197 = vcmp.eq.f32.partialorder %v1196, 8.507059e+37
      %v1198 = vand.u32 %v1165, 2147483648
      %v1199 = vor.u32 1.1754944e-38, %v1198
      %v1200 = vsel %vm1197, %v1199, %v1195
      %v1201 = vmul.f32 %v1155, %v1200
      %v1202 = vrcp.pop %v1168
      %v1203 = vmul.f32 %v1168, %v1202
      %v1204 = vsub.f32 1.0, %v1203
      %v1205 = vmul.f32 %v1202, %v1204
      %v1206 = vadd.f32 %v1202, %v1205
      %vm1207 = vweird.f32 %v1168
      %vm1208 = vweird.f32 %v1202
      %vm1209 = vmor %vm1207, %vm1208
      %v1210 = vsel %vm1209, %v1202, %v1206
      %v1211 = vand.u32 2147483647, %v1168
      %vm1212 = vcmp.eq.f32.partialorder %v1211, 8.507059e+37
      %v1213 = vand.u32 %v1168, 2147483648
      %v1214 = vor.u32 1.1754944e-38, %v1213
      %v1215 = vsel %vm1212, %v1214, %v1210
      %v1216 = vmul.f32 %v1157, %v1215
      %v1217 = vrcp.pop %v1171
      %v1218 = vmul.f32 %v1171, %v1217
      %v1219 = vsub.f32 1.0, %v1218
      %v1220 = vmul.f32 %v1217, %v1219
      %v1221 = vadd.f32 %v1217, %v1220
      %vm1222 = vweird.f32 %v1171
      %vm1223 = vweird.f32 %v1217
      %vm1224 = vmor %vm1222, %vm1223
      %v1225 = vsel %vm1224, %v1217, %v1221
      %v1226 = vand.u32 2147483647, %v1171
      %vm1227 = vcmp.eq.f32.partialorder %v1226, 8.507059e+37
      %v1228 = vand.u32 %v1171, 2147483648
      %v1229 = vor.u32 1.1754944e-38, %v1228
      %v1230 = vsel %vm1227, %v1229, %v1225
      %v1231 = vmul.f32 %v1159, %v1230
      %v1232 = vpack.c.bf16 %v1201, %v1186
      %v1233 = vpack.c.bf16 %v1231, %v1216
      %v1235 = vsel %vm1135, %v1232, 0
      %v1238 = vsel %vm1135, %v1233, 0
      %1240 = vmatpush.bf16.msra.mxu0 0
      %1241 = vmatpush.bf16.msra.mxu0 0
      %1242 = vmatpush.bf16.msra.mxu0 0
      %1243 = vmatpush.bf16.msra.mxu0 0
      %1244 = vmatpush.bf16.msra.mxu0 0
      %1245 = vmatpush.bf16.msra.mxu0 0
      %1246 = vmatpush.bf16.msra.mxu0 %v1099
      %1247 = vmatpush.bf16.msra.mxu0 %v1098
      %1248 = vmatmul.bf16.gmra.mxu0 %v1235
      %v1249 = vpop.f32.mrf.mxu0
      %v1250 = vadd.f32 0.0, %v1249
      %v1251 = vpop.f32.mrf.mxu0
      %v1252 = vadd.f32 0.0, %v1251
      %1253 = vmatmul.bf16.gmra.mxu0 %v1238
      %v1254 = vpop.f32.mrf.mxu0
      %v1255 = vadd.f32 0.0, %v1254
      %v1256 = vpop.f32.mrf.mxu0
      %v1257 = vadd.f32 0.0, %v1256
      %1258 = vdwg.mxu0
      %1261 = vrot.lane.b32.xlu0 %v1094, 64
      %v1262 = vpop.permute.xlu0 %1261
      %1263 = vrot.lane.b32.xlu0 %v1095, 64
      %v1264 = vpop.permute.xlu0 %1263
      %1267 = vrot.lane.b32.xlu0 %v1096, 64
      %v1268 = vpop.permute.xlu0 %1267
      %1269 = vrot.lane.b32.xlu0 %v1097, 64
      %v1270 = vpop.permute.xlu0 %1269
      %v1272 = vsel %vm1103, %v1262, 0
      %v1275 = vsel %vm1103, %v1264, 0
      %v1278 = vsel %vm1103, %v1268, 0
      %v1281 = vsel %vm1103, %v1270, 0
      %1283 = vmatpush.bf16.xpose.msra.mxu0 0
      %1284 = vmatpush.bf16.xpose.msra.mxu0 0
      %1285 = vmatpush.bf16.xpose.msra.mxu0 0
      %1286 = vmatpush.bf16.xpose.msra.mxu0 0
      %1287 = vmatpush.bf16.xpose.msra.mxu0 0
      %1288 = vmatpush.bf16.xpose.msra.mxu0 0
      %1289 = vmatpush.bf16.xpose.msra.mxu0 %v1281
      %1290 = vmatpush.bf16.xpose.msra.mxu0 %v1278
      %1291 = vmatmul.bf16.gmra.mxu0 %v1272
      %v1292 = vpop.f32.mrf.mxu0
      %v1293 = vadd.f32 %v1101, %v1292
      %v1294 = vpop.f32.mrf.mxu0
      %v1295 = vadd.f32 %v1101, %v1294
      %1296 = vmatmul.bf16.gmra.mxu0 %v1275
      %v1297 = vpop.f32.mrf.mxu0
      %v1298 = vadd.f32 %v1101, %v1297
      %v1299 = vpop.f32.mrf.mxu0
      %v1300 = vadd.f32 %v1101, %v1299
      %1301 = vdwg.mxu0
      %v1302 = vsel %vm1135, %v1293, -inf
      %1303 = vmax.xlane.f32.xlu0 %v1302
      %v1304 = vpop.xlane.xlu0 %1303
      %v1305 = vsel %vm1135, %v1295, -inf
      %1306 = vmax.xlane.f32.xlu0 %v1305
      %v1307 = vpop.xlane.xlu0 %1306
      %v1308 = vsel %vm1135, %v1298, -inf
      %1309 = vmax.xlane.f32.xlu0 %v1308
      %v1310 = vpop.xlane.xlu0 %1309
      %v1311 = vsel %vm1135, %v1300, -inf
      %1312 = vmax.xlane.f32.xlu0 %v1311
      %v1313 = vpop.xlane.xlu0 %1312
      %v1314 = vsub.f32 %v1293, %v1304
      %v1315 = vsub.f32 %v1295, %v1307
      %v1316 = vsub.f32 %v1298, %v1310
      %v1317 = vsub.f32 %v1300, %v1313
      %v1318 = vmul.f32 %v1314, 1.442695
      %v1319 = vpow.pop %v1318
      %v1320 = vmul.f32 %v1315, 1.442695
      %v1321 = vpow.pop %v1320
      %v1322 = vmul.f32 %v1316, 1.442695
      %v1323 = vpow.pop %v1322
      %v1324 = vmul.f32 %v1317, 1.442695
      %v1325 = vpow.pop %v1324
      %v1326 = vsel %vm1135, %v1319, 0.0
      %1327 = vadd.xlane.f32.xlu0 %v1326
      %v1328 = vpop.xlane.xlu0 %1327
      %v1329 = vsel %vm1135, %v1321, 0.0
      %1330 = vadd.xlane.f32.xlu0 %v1329
      %v1331 = vpop.xlane.xlu0 %1330
      %v1332 = vsel %vm1135, %v1323, 0.0
      %1333 = vadd.xlane.f32.xlu0 %v1332
      %v1334 = vpop.xlane.xlu0 %1333
      %v1335 = vsel %vm1135, %v1325, 0.0
      %1336 = vadd.xlane.f32.xlu0 %v1335
      %v1337 = vpop.xlane.xlu0 %1336
      %v1338 = vrcp.pop %v1328
      %v1339 = vmul.f32 %v1328, %v1338
      %v1340 = vsub.f32 1.0, %v1339
      %v1341 = vmul.f32 %v1338, %v1340
      %v1342 = vadd.f32 %v1338, %v1341
      %vm1343 = vweird.f32 %v1328
      %vm1344 = vweird.f32 %v1338
      %vm1345 = vmor %vm1343, %vm1344
      %v1346 = vsel %vm1345, %v1338, %v1342
      %v1347 = vand.u32 2147483647, %v1328
      %vm1348 = vcmp.eq.f32.partialorder %v1347, 8.507059e+37
      %v1349 = vand.u32 %v1328, 2147483648
      %v1350 = vor.u32 1.1754944e-38, %v1349
      %v1351 = vsel %vm1348, %v1350, %v1346
      %v1352 = vmul.f32 %v1319, %v1351
      %v1353 = vrcp.pop %v1331
      %v1354 = vmul.f32 %v1331, %v1353
      %v1355 = vsub.f32 1.0, %v1354
      %v1356 = vmul.f32 %v1353, %v1355
      %v1357 = vadd.f32 %v1353, %v1356
      %vm1358 = vweird.f32 %v1331
      %vm1359 = vweird.f32 %v1353
      %vm1360 = vmor %vm1358, %vm1359
      %v1361 = vsel %vm1360, %v1353, %v1357
      %v1362 = vand.u32 2147483647, %v1331
      %vm1363 = vcmp.eq.f32.partialorder %v1362, 8.507059e+37
      %v1364 = vand.u32 %v1331, 2147483648
      %v1365 = vor.u32 1.1754944e-38, %v1364
      %v1366 = vsel %vm1363, %v1365, %v1361
      %v1367 = vmul.f32 %v1321, %v1366
      %v1368 = vrcp.pop %v1334
      %v1369 = vmul.f32 %v1334, %v1368
      %v1370 = vsub.f32 1.0, %v1369
      %v1371 = vmul.f32 %v1368, %v1370
      %v1372 = vadd.f32 %v1368, %v1371
      %vm1373 = vweird.f32 %v1334
      %vm1374 = vweird.f32 %v1368
      %vm1375 = vmor %vm1373, %vm1374
      %v1376 = vsel %vm1375, %v1368, %v1372
      %v1377 = vand.u32 2147483647, %v1334
      %vm1378 = vcmp.eq.f32.partialorder %v1377, 8.507059e+37
      %v1379 = vand.u32 %v1334, 2147483648
      %v1380 = vor.u32 1.1754944e-38, %v1379
      %v1381 = vsel %vm1378, %v1380, %v1376
      %v1382 = vmul.f32 %v1323, %v1381
      %v1383 = vrcp.pop %v1337
      %v1384 = vmul.f32 %v1337, %v1383
      %v1385 = vsub.f32 1.0, %v1384
      %v1386 = vmul.f32 %v1383, %v1385
      %v1387 = vadd.f32 %v1383, %v1386
      %vm1388 = vweird.f32 %v1337
      %vm1389 = vweird.f32 %v1383
      %vm1390 = vmor %vm1388, %vm1389
      %v1391 = vsel %vm1390, %v1383, %v1387
      %v1392 = vand.u32 2147483647, %v1337
      %vm1393 = vcmp.eq.f32.partialorder %v1392, 8.507059e+37
      %v1394 = vand.u32 %v1337, 2147483648
      %v1395 = vor.u32 1.1754944e-38, %v1394
      %v1396 = vsel %vm1393, %v1395, %v1391
      %v1397 = vmul.f32 %v1325, %v1396
      %v1398 = vpack.c.bf16 %v1367, %v1352
      %v1399 = vpack.c.bf16 %v1397, %v1382
      %1402 = vrot.lane.b32.xlu0 %v1098, 64
      %v1403 = vpop.permute.xlu0 %1402
      %1404 = vrot.lane.b32.xlu0 %v1099, 64
      %v1405 = vpop.permute.xlu0 %1404
      %v1409 = vsel %vm1135, %v1398, 0
      %v1412 = vsel %vm1135, %v1399, 0
      %1414 = vmatpush.bf16.msra.mxu0 0
      %1415 = vmatpush.bf16.msra.mxu0 0
      %1416 = vmatpush.bf16.msra.mxu0 0
      %1417 = vmatpush.bf16.msra.mxu0 0
      %1418 = vmatpush.bf16.msra.mxu0 0
      %1419 = vmatpush.bf16.msra.mxu0 0
      %1420 = vmatpush.bf16.msra.mxu0 %v1405
      %1421 = vmatpush.bf16.msra.mxu0 %v1403
      %1422 = vmatmul.bf16.gmra.mxu0 %v1409
      %v1423 = vpop.f32.mrf.mxu0
      %v1424 = vadd.f32 0.0, %v1423
      %v1425 = vpop.f32.mrf.mxu0
      %v1426 = vadd.f32 0.0, %v1425
      %1427 = vmatmul.bf16.gmra.mxu0 %v1412
      %v1428 = vpop.f32.mrf.mxu0
      %v1429 = vadd.f32 0.0, %v1428
      %v1430 = vpop.f32.mrf.mxu0
      %v1431 = vadd.f32 0.0, %v1430
      %1432 = vdwg.mxu0
      %1437 = vrot.lane.b32.xlu0 %v1424, 64
      %v1438 = vpop.permute.xlu0 %1437
      %1439 = vrot.lane.b32.xlu0 %v1426, 64
      %v1440 = vpop.permute.xlu0 %1439
      %1441 = vrot.lane.b32.xlu0 %v1429, 64
      %v1442 = vpop.permute.xlu0 %1441
      %1443 = vrot.lane.b32.xlu0 %v1431, 64
      %v1444 = vpop.permute.xlu0 %1443
      %v1449 = vsel %vm1103, %v1250, %v1438
      %v1450 = vsel %vm1103, %v1252, %v1440
      %v1451 = vsel %vm1103, %v1255, %v1442
      %v1452 = vsel %vm1103, %v1257, %v1444
      %v1453 = vpack.c.bf16 %v1450, %v1449
      %v1454 = vpack.c.bf16 %v1452, %v1451
      %v1455 = vld [vmem:[%s708] sm:$0xf]
      %v1456 = vld [vmem:[%s708 + $0x4] sm:$0xf]
      %v1457 = vld [vmem:[%s708 + $0x8] sm:$0xf]
      %v1458 = vld [vmem:[%s708 + $0xc] sm:$0xf]
      %v1459 = vld [vmem:[%s708 + $0x10] sm:$0xf]
      %v1460 = vld [vmem:[%s708 + $0x14] sm:$0xf]
      %v1461 = vld [vmem:[%s708 + $0x18] sm:$0xf]
      %v1462 = vld [vmem:[%s708 + $0x1c] sm:$0xf]
      %v1463 = vld [vmem:[%s708 + $0x20] sm:$0xf]
      %v1464 = vld [vmem:[%s708 + $0x24] sm:$0xf]
      %v1465 = vld [vmem:[%s708 + $0x28] sm:$0xf]
      %v1466 = vld [vmem:[%s708 + $0x2c] sm:$0xf]
      %v1467 = vld [vmem:[%s708 + $0x30] sm:$0xf]
      %v1468 = vld [vmem:[%s708 + $0x34] sm:$0xf]
      %v1469 = vld [vmem:[%s708 + $0x38] sm:$0xf]
      %v1470 = vld [vmem:[%s708 + $0x3c] sm:$0xf]
      %v1471 = vld [vmem:[%s711] sm:$0x1]
      %v1473 = vperm.slane %v1471, 0
      %v1491 = vunpack.c.l.b16 %v1455
      %v1492 = vunpack.c.l.b16 %v1456
      %v1493 = vunpack.c.l.b16 %v1457
      %v1494 = vunpack.c.l.b16 %v1458
      %v1495 = vunpack.c.l.b16 %v1459
      %v1496 = vunpack.c.l.b16 %v1460
      %v1497 = vunpack.c.l.b16 %v1461
      %v1498 = vunpack.c.l.b16 %v1462
      %v1499 = vunpack.c.l.b16 %v1463
      %v1500 = vunpack.c.l.b16 %v1464
      %v1501 = vunpack.c.l.b16 %v1465
      %v1502 = vunpack.c.l.b16 %v1466
      %v1503 = vunpack.c.l.b16 %v1467
      %v1504 = vunpack.c.l.b16 %v1468
      %v1505 = vunpack.c.l.b16 %v1469
      %v1506 = vunpack.c.l.b16 %v1470
      %v1507 = vpack.c.b16 %v1492, %v1491
      %v1508 = vpack.c.b16 %v1494, %v1493
      %v1509 = vpack.c.b16 %v1496, %v1495
      %v1510 = vpack.c.b16 %v1498, %v1497
      %v1511 = vpack.c.b16 %v1500, %v1499
      %v1512 = vpack.c.b16 %v1502, %v1501
      %v1513 = vpack.c.b16 %v1504, %v1503
      %v1514 = vpack.c.b16 %v1506, %v1505
      %1523 = vmatpush.bf16.msra.mxu0 %v1514
      %1524 = vmatpush.bf16.msra.mxu0 %v1513
      %1525 = vmatpush.bf16.msra.mxu0 %v1512
      %1526 = vmatpush.bf16.msra.mxu0 %v1511
      %1527 = vmatpush.bf16.msra.mxu0 %v1510
      %1528 = vmatpush.bf16.msra.mxu0 %v1509
      %1529 = vmatpush.bf16.msra.mxu0 %v1508
      %1530 = vmatpush.bf16.msra.mxu0 %v1507
      %1531 = vmatmul.bf16.gmra.mxu0 %v1453
      %v1532 = vpop.f32.mrf.mxu0
      %v1533 = vadd.f32 %v1473, %v1532
      %v1534 = vpop.f32.mrf.mxu0
      %v1535 = vadd.f32 %v1473, %v1534
      %1536 = vmatmul.bf16.gmra.mxu0 %v1454
      %v1537 = vpop.f32.mrf.mxu0
      %v1538 = vadd.f32 %v1473, %v1537
      %v1539 = vpop.f32.mrf.mxu0
      %v1540 = vadd.f32 %v1473, %v1539
      %1541 = vdwg.mxu0
      %v1542 = vadd.f32 %v862, %v1533
      %v1543 = vadd.f32 %v863, %v1535
      %v1544 = vadd.f32 %v864, %v1538
      %v1545 = vadd.f32 %v865, %v1540
      %v1546 = vld [vmem:[%s714] sm:$0x1]
      %v1547 = vld [vmem:[%s717] sm:$0x1]
      %1548 = vadd.xlane.f32.xlu0 %v1542
      %v1549 = vpop.xlane.xlu0 %1548
      %1550 = vadd.xlane.f32.xlu0 %v1543
      %v1551 = vpop.xlane.xlu0 %1550
      %1552 = vadd.xlane.f32.xlu0 %v1544
      %v1553 = vpop.xlane.xlu0 %1552
      %1554 = vadd.xlane.f32.xlu0 %v1545
      %v1555 = vpop.xlane.xlu0 %1554
      %v1556 = vrcp.pop 128.0
      %v1557 = vmul.f32 128.0, %v1556
      %v1558 = vsub.f32 1.0, %v1557
      %v1559 = vmul.f32 %v1556, %v1558
      %v1560 = vadd.f32 %v1556, %v1559
      %vm1561 = vweird.f32 %v1556
      %v1562 = vsel %vm1561, %v1556, %v1560
      %v1563 = vmul.f32 %v1549, %v1562
      %v1564 = vmul.f32 %v1551, %v1562
      %v1565 = vmul.f32 %v1553, %v1562
      %v1566 = vmul.f32 %v1555, %v1562
      %v1567 = vsub.f32 %v1542, %v1563
      %v1568 = vsub.f32 %v1543, %v1564
      %v1569 = vsub.f32 %v1544, %v1565
      %v1570 = vsub.f32 %v1545, %v1566
      %v1571 = vmul.f32 %v1567, %v1567
      %v1572 = vmul.f32 %v1568, %v1568
      %v1573 = vmul.f32 %v1569, %v1569
      %v1574 = vmul.f32 %v1570, %v1570
      %1575 = vadd.xlane.f32.xlu0 %v1571
      %v1576 = vpop.xlane.xlu0 %1575
      %1577 = vadd.xlane.f32.xlu0 %v1572
      %v1578 = vpop.xlane.xlu0 %1577
      %1579 = vadd.xlane.f32.xlu0 %v1573
      %v1580 = vpop.xlane.xlu0 %1579
      %1581 = vadd.xlane.f32.xlu0 %v1574
      %v1582 = vpop.xlane.xlu0 %1581
      %v1583 = vmul.f32 %v1576, %v1562
      %v1584 = vmul.f32 %v1578, %v1562
      %v1585 = vmul.f32 %v1580, %v1562
      %v1586 = vmul.f32 %v1582, %v1562
      %v1587 = vadd.f32 %v1583, 1e-12
      %v1588 = vadd.f32 %v1584, 1e-12
      %v1589 = vadd.f32 %v1585, 1e-12
      %v1590 = vadd.f32 %v1586, 1e-12
      %v1591 = vrsqrt.pop %v1587
      %v1592 = vmul.f32 %v1591, %v1587
      %v1593 = vmul.f32 %v1592, %v1591
      %v1594 = vmul.f32 0.5, %v1593
      %v1595 = vsub.f32 1.5, %v1594
      %v1596 = vmul.f32 %v1591, %v1595
      %vm1597 = vweird.f32 %v1587
      %vm1598 = vweird.f32 %v1591
      %vm1599 = vmor %vm1597, %vm1598
      %v1600 = vsel %vm1599, %v1591, %v1596
      %v1601 = vrsqrt.pop %v1588
      %v1602 = vmul.f32 %v1601, %v1588
      %v1603 = vmul.f32 %v1602, %v1601
      %v1604 = vmul.f32 0.5, %v1603
      %v1605 = vsub.f32 1.5, %v1604
      %v1606 = vmul.f32 %v1601, %v1605
      %vm1607 = vweird.f32 %v1588
      %vm1608 = vweird.f32 %v1601
      %vm1609 = vmor %vm1607, %vm1608
      %v1610 = vsel %vm1609, %v1601, %v1606
      %v1611 = vrsqrt.pop %v1589
      %v1612 = vmul.f32 %v1611, %v1589
      %v1613 = vmul.f32 %v1612, %v1611
      %v1614 = vmul.f32 0.5, %v1613
      %v1615 = vsub.f32 1.5, %v1614
      %v1616 = vmul.f32 %v1611, %v1615
      %vm1617 = vweird.f32 %v1589
      %vm1618 = vweird.f32 %v1611
      %vm1619 = vmor %vm1617, %vm1618
      %v1620 = vsel %vm1619, %v1611, %v1616
      %v1621 = vrsqrt.pop %v1590
      %v1622 = vmul.f32 %v1621, %v1590
      %v1623 = vmul.f32 %v1622, %v1621
      %v1624 = vmul.f32 0.5, %v1623
      %v1625 = vsub.f32 1.5, %v1624
      %v1626 = vmul.f32 %v1621, %v1625
      %vm1627 = vweird.f32 %v1590
      %vm1628 = vweird.f32 %v1621
      %vm1629 = vmor %vm1627, %vm1628
      %v1630 = vsel %vm1629, %v1621, %v1626
      %v1631 = vmul.f32 %v1567, %v1600
      %v1632 = vmul.f32 %v1568, %v1610
      %v1633 = vmul.f32 %v1569, %v1620
      %v1634 = vmul.f32 %v1570, %v1630
      %v1636 = vperm.slane %v1546, 0
      %v1638 = vmul.f32 %v1631, %v1636
      %v1639 = vmul.f32 %v1632, %v1636
      %v1640 = vmul.f32 %v1633, %v1636
      %v1641 = vmul.f32 %v1634, %v1636
      %v1643 = vperm.slane %v1547, 0
      %v1645 = vadd.f32 %v1638, %v1643
      %v1646 = vadd.f32 %v1639, %v1643
      %v1647 = vadd.f32 %v1640, %v1643
      %v1648 = vadd.f32 %v1641, %v1643
      %v1649 = vpack.c.bf16 %v1646, %v1645
      %v1650 = vpack.c.bf16 %v1648, %v1647
      %v1651 = vld [vmem:[%s722] sm:$0xff]
      %v1652 = vld [vmem:[%s722 + $0x8] sm:$0xff]
      %v1653 = vld [vmem:[%s722 + $0x10] sm:$0xff]
      %v1654 = vld [vmem:[%s722 + $0x18] sm:$0xff]
      %v1655 = vld [vmem:[%s722 + $0x20] sm:$0xff]
      %v1656 = vld [vmem:[%s722 + $0x28] sm:$0xff]
      %v1657 = vld [vmem:[%s722 + $0x30] sm:$0xff]
      %v1658 = vld [vmem:[%s722 + $0x38] sm:$0xff]
      %v1659 = vld [vmem:[%s722 + $0x40] sm:$0xff]
      %v1660 = vld [vmem:[%s722 + $0x48] sm:$0xff]
      %v1661 = vld [vmem:[%s722 + $0x50] sm:$0xff]
      %v1662 = vld [vmem:[%s722 + $0x58] sm:$0xff]
      %v1663 = vld [vmem:[%s722 + $0x60] sm:$0xff]
      %v1664 = vld [vmem:[%s722 + $0x68] sm:$0xff]
      %v1665 = vld [vmem:[%s722 + $0x70] sm:$0xff]
      %v1666 = vld [vmem:[%s722 + $0x78] sm:$0xff]
      %v1667 = vld [vmem:[%s726] sm:$0x3]
      %v1669 = vperm.slane %v1667, 0
      %v1670 = vperm.slane %v1667, 1
      %v1689 = vunpack.c.l.b16 %v1651
      %v1690 = vunpack.c.h.b16 %v1651
      %v1691 = vunpack.c.l.b16 %v1652
      %v1692 = vunpack.c.h.b16 %v1652
      %v1693 = vunpack.c.l.b16 %v1653
      %v1694 = vunpack.c.h.b16 %v1653
      %v1695 = vunpack.c.l.b16 %v1654
      %v1696 = vunpack.c.h.b16 %v1654
      %v1697 = vunpack.c.l.b16 %v1655
      %v1698 = vunpack.c.h.b16 %v1655
      %v1699 = vunpack.c.l.b16 %v1656
      %v1700 = vunpack.c.h.b16 %v1656
      %v1701 = vunpack.c.l.b16 %v1657
      %v1702 = vunpack.c.h.b16 %v1657
      %v1703 = vunpack.c.l.b16 %v1658
      %v1704 = vunpack.c.h.b16 %v1658
      %v1705 = vunpack.c.l.b16 %v1659
      %v1706 = vunpack.c.h.b16 %v1659
      %v1707 = vunpack.c.l.b16 %v1660
      %v1708 = vunpack.c.h.b16 %v1660
      %v1709 = vunpack.c.l.b16 %v1661
      %v1710 = vunpack.c.h.b16 %v1661
      %v1711 = vunpack.c.l.b16 %v1662
      %v1712 = vunpack.c.h.b16 %v1662
      %v1713 = vunpack.c.l.b16 %v1663
      %v1714 = vunpack.c.h.b16 %v1663
      %v1715 = vunpack.c.l.b16 %v1664
      %v1716 = vunpack.c.h.b16 %v1664
      %v1717 = vunpack.c.l.b16 %v1665
      %v1718 = vunpack.c.h.b16 %v1665
      %v1719 = vunpack.c.l.b16 %v1666
      %v1720 = vunpack.c.h.b16 %v1666
      %v1721 = vpack.c.b16 %v1691, %v1689
      %v1722 = vpack.c.b16 %v1692, %v1690
      %v1723 = vpack.c.b16 %v1695, %v1693
      %v1724 = vpack.c.b16 %v1696, %v1694
      %v1725 = vpack.c.b16 %v1699, %v1697
      %v1726 = vpack.c.b16 %v1700, %v1698
      %v1727 = vpack.c.b16 %v1703, %v1701
      %v1728 = vpack.c.b16 %v1704, %v1702
      %v1729 = vpack.c.b16 %v1707, %v1705
      %v1730 = vpack.c.b16 %v1708, %v1706
      %v1731 = vpack.c.b16 %v1711, %v1709
      %v1732 = vpack.c.b16 %v1712, %v1710
      %v1733 = vpack.c.b16 %v1715, %v1713
      %v1734 = vpack.c.b16 %v1716, %v1714
      %v1735 = vpack.c.b16 %v1719, %v1717
      %v1736 = vpack.c.b16 %v1720, %v1718
      %1753 = vmatpush.bf16.msra.mxu0 %v1735
      %1754 = vmatpush.bf16.msra.mxu0 %v1733
      %1755 = vmatpush.bf16.msra.mxu0 %v1731
      %1756 = vmatpush.bf16.msra.mxu0 %v1729
      %1757 = vmatpush.bf16.msra.mxu0 %v1727
      %1758 = vmatpush.bf16.msra.mxu0 %v1725
      %1759 = vmatpush.bf16.msra.mxu0 %v1723
      %1760 = vmatpush.bf16.msra.mxu0 %v1721
      %1761 = vmatmul.bf16.gmra.mxu0 %v1649
      %v1762 = vpop.f32.mrf.mxu0
      %v1763 = vadd.f32 %v1669, %v1762
      %v1764 = vpop.f32.mrf.mxu0
      %v1765 = vadd.f32 %v1669, %v1764
      %1766 = vmatmul.bf16.gmra.mxu0 %v1650
      %v1767 = vpop.f32.mrf.mxu0
      %v1768 = vadd.f32 %v1669, %v1767
      %v1769 = vpop.f32.mrf.mxu0
      %v1770 = vadd.f32 %v1669, %v1769
      %1771 = vdwg.mxu0
      %1772 = vmatpush.bf16.msra.mxu0 %v1736
      %1773 = vmatpush.bf16.msra.mxu0 %v1734
      %1774 = vmatpush.bf16.msra.mxu0 %v1732
      %1775 = vmatpush.bf16.msra.mxu0 %v1730
      %1776 = vmatpush.bf16.msra.mxu0 %v1728
      %1777 = vmatpush.bf16.msra.mxu0 %v1726
      %1778 = vmatpush.bf16.msra.mxu0 %v1724
      %1779 = vmatpush.bf16.msra.mxu0 %v1722
      %1780 = vmatmul.bf16.gmra.mxu0 %v1649
      %v1781 = vpop.f32.mrf.mxu0
      %v1782 = vadd.f32 %v1670, %v1781
      %v1783 = vpop.f32.mrf.mxu0
      %v1784 = vadd.f32 %v1670, %v1783
      %1785 = vmatmul.bf16.gmra.mxu0 %v1650
      %v1786 = vpop.f32.mrf.mxu0
      %v1787 = vadd.f32 %v1670, %v1786
      %v1788 = vpop.f32.mrf.mxu0
      %v1789 = vadd.f32 %v1670, %v1788
      %1790 = vdwg.mxu0
      %v1791 = vmul.f32 %v1763, 0.5
      %v1792 = vmul.f32 %v1782, 0.5
      %v1793 = vmul.f32 %v1765, 0.5
      %v1794 = vmul.f32 %v1784, 0.5
      %v1795 = vmul.f32 %v1768, 0.5
      %v1796 = vmul.f32 %v1787, 0.5
      %v1797 = vmul.f32 %v1770, 0.5
      %v1798 = vmul.f32 %v1789, 0.5
      %v1799 = vmul.f32 %v1763, 0.044715
      %v1800 = vmul.f32 %v1782, 0.044715
      %v1801 = vmul.f32 %v1765, 0.044715
      %v1802 = vmul.f32 %v1784, 0.044715
      %v1803 = vmul.f32 %v1768, 0.044715
      %v1804 = vmul.f32 %v1787, 0.044715
      %v1805 = vmul.f32 %v1770, 0.044715
      %v1806 = vmul.f32 %v1789, 0.044715
      %v1807 = vmul.f32 %v1799, %v1763
      %v1808 = vmul.f32 %v1800, %v1782
      %v1809 = vmul.f32 %v1801, %v1765
      %v1810 = vmul.f32 %v1802, %v1784
      %v1811 = vmul.f32 %v1803, %v1768
      %v1812 = vmul.f32 %v1804, %v1787
      %v1813 = vmul.f32 %v1805, %v1770
      %v1814 = vmul.f32 %v1806, %v1789
      %v1815 = vmul.f32 %v1807, %v1763
      %v1816 = vmul.f32 %v1808, %v1782
      %v1817 = vmul.f32 %v1809, %v1765
      %v1818 = vmul.f32 %v1810, %v1784
      %v1819 = vmul.f32 %v1811, %v1768
      %v1820 = vmul.f32 %v1812, %v1787
      %v1821 = vmul.f32 %v1813, %v1770
      %v1822 = vmul.f32 %v1814, %v1789
      %v1823 = vadd.f32 %v1763, %v1815
      %v1824 = vadd.f32 %v1782, %v1816
      %v1825 = vadd.f32 %v1765, %v1817
      %v1826 = vadd.f32 %v1784, %v1818
      %v1827 = vadd.f32 %v1768, %v1819
      %v1828 = vadd.f32 %v1787, %v1820
      %v1829 = vadd.f32 %v1770, %v1821
      %v1830 = vadd.f32 %v1789, %v1822
      %v1831 = vmul.f32 %v1823, 0.7978846
      %v1832 = vmul.f32 %v1824, 0.7978846
      %v1833 = vmul.f32 %v1825, 0.7978846
      %v1834 = vmul.f32 %v1826, 0.7978846
      %v1835 = vmul.f32 %v1827, 0.7978846
      %v1836 = vmul.f32 %v1828, 0.7978846
      %v1837 = vmul.f32 %v1829, 0.7978846
      %v1838 = vmul.f32 %v1830, 0.7978846
      %v1839 = vtanh.pop %v1831
      %v1840 = vtanh.pop %v1832
      %v1841 = vtanh.pop %v1833
      %v1842 = vtanh.pop %v1834
      %v1843 = vtanh.pop %v1835
      %v1844 = vtanh.pop %v1836
      %v1845 = vtanh.pop %v1837
      %v1846 = vtanh.pop %v1838
      %v1847 = vadd.f32 %v1839, 1.0
      %v1848 = vadd.f32 %v1840, 1.0
      %v1849 = vadd.f32 %v1841, 1.0
      %v1850 = vadd.f32 %v1842, 1.0
      %v1851 = vadd.f32 %v1843, 1.0
      %v1852 = vadd.f32 %v1844, 1.0
      %v1853 = vadd.f32 %v1845, 1.0
      %v1854 = vadd.f32 %v1846, 1.0
      %v1855 = vmul.f32 %v1791, %v1847
      %v1856 = vmul.f32 %v1792, %v1848
      %v1857 = vmul.f32 %v1793, %v1849
      %v1858 = vmul.f32 %v1794, %v1850
      %v1859 = vmul.f32 %v1795, %v1851
      %v1860 = vmul.f32 %v1796, %v1852
      %v1861 = vmul.f32 %v1797, %v1853
      %v1862 = vmul.f32 %v1798, %v1854
      %v1863 = vpack.c.bf16 %v1857, %v1855
      %v1864 = vpack.c.bf16 %v1858, %v1856
      %v1865 = vpack.c.bf16 %v1861, %v1859
      %v1866 = vpack.c.bf16 %v1862, %v1860
      %v1867 = vld [vmem:[%s731] sm:$0xf]
      %v1868 = vld [vmem:[%s731 + $0x4] sm:$0xf]
      %v1869 = vld [vmem:[%s731 + $0x8] sm:$0xf]
      %v1870 = vld [vmem:[%s731 + $0xc] sm:$0xf]
      %v1871 = vld [vmem:[%s731 + $0x10] sm:$0xf]
      %v1872 = vld [vmem:[%s731 + $0x14] sm:$0xf]
      %v1873 = vld [vmem:[%s731 + $0x18] sm:$0xf]
      %v1874 = vld [vmem:[%s731 + $0x1c] sm:$0xf]
      %v1875 = vld [vmem:[%s731 + $0x20] sm:$0xf]
      %v1876 = vld [vmem:[%s731 + $0x24] sm:$0xf]
      %v1877 = vld [vmem:[%s731 + $0x28] sm:$0xf]
      %v1878 = vld [vmem:[%s731 + $0x2c] sm:$0xf]
      %v1879 = vld [vmem:[%s731 + $0x30] sm:$0xf]
      %v1880 = vld [vmem:[%s731 + $0x34] sm:$0xf]
      %v1881 = vld [vmem:[%s731 + $0x38] sm:$0xf]
      %v1882 = vld [vmem:[%s731 + $0x3c] sm:$0xf]
      %v1883 = vld [vmem:[%s731 + $0x40] sm:$0xf]
      %v1884 = vld [vmem:[%s731 + $0x44] sm:$0xf]
      %v1885 = vld [vmem:[%s731 + $0x48] sm:$0xf]
      %v1886 = vld [vmem:[%s731 + $0x4c] sm:$0xf]
      %v1887 = vld [vmem:[%s731 + $0x50] sm:$0xf]
      %v1888 = vld [vmem:[%s731 + $0x54] sm:$0xf]
      %v1889 = vld [vmem:[%s731 + $0x58] sm:$0xf]
      %v1890 = vld [vmem:[%s731 + $0x5c] sm:$0xf]
      %v1891 = vld [vmem:[%s731 + $0x60] sm:$0xf]
      %v1892 = vld [vmem:[%s731 + $0x64] sm:$0xf]
      %v1893 = vld [vmem:[%s731 + $0x68] sm:$0xf]
      %v1894 = vld [vmem:[%s731 + $0x6c] sm:$0xf]
      %v1895 = vld [vmem:[%s731 + $0x70] sm:$0xf]
      %v1896 = vld [vmem:[%s731 + $0x74] sm:$0xf]
      %v1897 = vld [vmem:[%s731 + $0x78] sm:$0xf]
      %v1898 = vld [vmem:[%s731 + $0x7c] sm:$0xf]
      %v1899 = vld [vmem:[%s734] sm:$0x1]
      %v1901 = vperm.slane %v1899, 0
      %v1935 = vunpack.c.l.b16 %v1867
      %v1936 = vunpack.c.l.b16 %v1868
      %v1937 = vunpack.c.l.b16 %v1869
      %v1938 = vunpack.c.l.b16 %v1870
      %v1939 = vunpack.c.l.b16 %v1871
      %v1940 = vunpack.c.l.b16 %v1872
      %v1941 = vunpack.c.l.b16 %v1873
      %v1942 = vunpack.c.l.b16 %v1874
      %v1943 = vunpack.c.l.b16 %v1875
      %v1944 = vunpack.c.l.b16 %v1876
      %v1945 = vunpack.c.l.b16 %v1877
      %v1946 = vunpack.c.l.b16 %v1878
      %v1947 = vunpack.c.l.b16 %v1879
      %v1948 = vunpack.c.l.b16 %v1880
      %v1949 = vunpack.c.l.b16 %v1881
      %v1950 = vunpack.c.l.b16 %v1882
      %v1951 = vunpack.c.l.b16 %v1883
      %v1952 = vunpack.c.l.b16 %v1884
      %v1953 = vunpack.c.l.b16 %v1885
      %v1954 = vunpack.c.l.b16 %v1886
      %v1955 = vunpack.c.l.b16 %v1887
      %v1956 = vunpack.c.l.b16 %v1888
      %v1957 = vunpack.c.l.b16 %v1889
      %v1958 = vunpack.c.l.b16 %v1890
      %v1959 = vunpack.c.l.b16 %v1891
      %v1960 = vunpack.c.l.b16 %v1892
      %v1961 = vunpack.c.l.b16 %v1893
      %v1962 = vunpack.c.l.b16 %v1894
      %v1963 = vunpack.c.l.b16 %v1895
      %v1964 = vunpack.c.l.b16 %v1896
      %v1965 = vunpack.c.l.b16 %v1897
      %v1966 = vunpack.c.l.b16 %v1898
      %v1967 = vpack.c.b16 %v1936, %v1935
      %v1968 = vpack.c.b16 %v1938, %v1937
      %v1969 = vpack.c.b16 %v1940, %v1939
      %v1970 = vpack.c.b16 %v1942, %v1941
      %v1971 = vpack.c.b16 %v1944, %v1943
      %v1972 = vpack.c.b16 %v1946, %v1945
      %v1973 = vpack.c.b16 %v1948, %v1947
      %v1974 = vpack.c.b16 %v1950, %v1949
      %v1975 = vpack.c.b16 %v1952, %v1951
      %v1976 = vpack.c.b16 %v1954, %v1953
      %v1977 = vpack.c.b16 %v1956, %v1955
      %v1978 = vpack.c.b16 %v1958, %v1957
      %v1979 = vpack.c.b16 %v1960, %v1959
      %v1980 = vpack.c.b16 %v1962, %v1961
      %v1981 = vpack.c.b16 %v1964, %v1963
      %v1982 = vpack.c.b16 %v1966, %v1965
      %1999 = vmatpush.bf16.msra.mxu0 %v1974
      %2000 = vmatpush.bf16.msra.mxu0 %v1973
      %2001 = vmatpush.bf16.msra.mxu0 %v1972
      %2002 = vmatpush.bf16.msra.mxu0 %v1971
      %2003 = vmatpush.bf16.msra.mxu0 %v1970
      %2004 = vmatpush.bf16.msra.mxu0 %v1969
      %2005 = vmatpush.bf16.msra.mxu0 %v1968
      %2006 = vmatpush.bf16.msra.mxu0 %v1967
      %2007 = vmatmul.bf16.gmra.mxu0 %v1863
      %v2008 = vpop.f32.mrf.mxu0
      %v2009 = vadd.f32 %v1901, %v2008
      %v2010 = vpop.f32.mrf.mxu0
      %v2011 = vadd.f32 %v1901, %v2010
      %2012 = vmatmul.bf16.gmra.mxu0 %v1865
      %v2013 = vpop.f32.mrf.mxu0
      %v2014 = vadd.f32 %v1901, %v2013
      %v2015 = vpop.f32.mrf.mxu0
      %v2016 = vadd.f32 %v1901, %v2015
      %2017 = vdwg.mxu0
      %2018 = vmatpush.bf16.msra.mxu0 %v1982
      %2019 = vmatpush.bf16.msra.mxu0 %v1981
      %2020 = vmatpush.bf16.msra.mxu0 %v1980
      %2021 = vmatpush.bf16.msra.mxu0 %v1979
      %2022 = vmatpush.bf16.msra.mxu0 %v1978
      %2023 = vmatpush.bf16.msra.mxu0 %v1977
      %2024 = vmatpush.bf16.msra.mxu0 %v1976
      %2025 = vmatpush.bf16.msra.mxu0 %v1975
      %2026 = vmatmul.bf16.gmra.mxu0 %v1864
      %v2027 = vpop.f32.mrf.mxu0
      %v2028 = vadd.f32 %v2009, %v2027
      %v2029 = vpop.f32.mrf.mxu0
      %v2030 = vadd.f32 %v2011, %v2029
      %2031 = vmatmul.bf16.gmra.mxu0 %v1866
      %v2032 = vpop.f32.mrf.mxu0
      %v2033 = vadd.f32 %v2014, %v2032
      %v2034 = vpop.f32.mrf.mxu0
      %v2035 = vadd.f32 %v2016, %v2034
      %2036 = vdwg.mxu0
      %v2037 = vadd.f32 %v1645, %v2028
      %v2038 = vadd.f32 %v1646, %v2030
      %v2039 = vadd.f32 %v1647, %v2033
      %v2040 = vadd.f32 %v1648, %v2035
      %v2041 = vld [vmem:[%s737] sm:$0x1]
      %v2042 = vld [vmem:[%s740] sm:$0x1]
      %2043 = vadd.xlane.f32.xlu0 %v2037
      %v2044 = vpop.xlane.xlu0 %2043
      %2045 = vadd.xlane.f32.xlu0 %v2038
      %v2046 = vpop.xlane.xlu0 %2045
      %2047 = vadd.xlane.f32.xlu0 %v2039
      %v2048 = vpop.xlane.xlu0 %2047
      %2049 = vadd.xlane.f32.xlu0 %v2040
      %v2050 = vpop.xlane.xlu0 %2049
      %v2051 = vmul.f32 %v2044, %v1562
      %v2052 = vmul.f32 %v2046, %v1562
      %v2053 = vmul.f32 %v2048, %v1562
      %v2054 = vmul.f32 %v2050, %v1562
      %v2055 = vsub.f32 %v2037, %v2051
      %v2056 = vsub.f32 %v2038, %v2052
      %v2057 = vsub.f32 %v2039, %v2053
      %v2058 = vsub.f32 %v2040, %v2054
      %v2059 = vmul.f32 %v2055, %v2055
      %v2060 = vmul.f32 %v2056, %v2056
      %v2061 = vmul.f32 %v2057, %v2057
      %v2062 = vmul.f32 %v2058, %v2058
      %2063 = vadd.xlane.f32.xlu0 %v2059
      %v2064 = vpop.xlane.xlu0 %2063
      %2065 = vadd.xlane.f32.xlu0 %v2060
      %v2066 = vpop.xlane.xlu0 %2065
      %2067 = vadd.xlane.f32.xlu0 %v2061
      %v2068 = vpop.xlane.xlu0 %2067
      %2069 = vadd.xlane.f32.xlu0 %v2062
      %v2070 = vpop.xlane.xlu0 %2069
      %v2071 = vmul.f32 %v2064, %v1562
      %v2072 = vmul.f32 %v2066, %v1562
      %v2073 = vmul.f32 %v2068, %v1562
      %v2074 = vmul.f32 %v2070, %v1562
      %v2075 = vadd.f32 %v2071, 1e-12
      %v2076 = vadd.f32 %v2072, 1e-12
      %v2077 = vadd.f32 %v2073, 1e-12
      %v2078 = vadd.f32 %v2074, 1e-12
      %v2079 = vrsqrt.pop %v2075
      %v2080 = vmul.f32 %v2079, %v2075
      %v2081 = vmul.f32 %v2080, %v2079
      %v2082 = vmul.f32 0.5, %v2081
      %v2083 = vsub.f32 1.5, %v2082
      %v2084 = vmul.f32 %v2079, %v2083
      %vm2085 = vweird.f32 %v2075
      %vm2086 = vweird.f32 %v2079
      %vm2087 = vmor %vm2085, %vm2086
      %v2088 = vsel %vm2087, %v2079, %v2084
      %v2089 = vrsqrt.pop %v2076
      %v2090 = vmul.f32 %v2089, %v2076
      %v2091 = vmul.f32 %v2090, %v2089
      %v2092 = vmul.f32 0.5, %v2091
      %v2093 = vsub.f32 1.5, %v2092
      %v2094 = vmul.f32 %v2089, %v2093
      %vm2095 = vweird.f32 %v2076
      %vm2096 = vweird.f32 %v2089
      %vm2097 = vmor %vm2095, %vm2096
      %v2098 = vsel %vm2097, %v2089, %v2094
      %v2099 = vrsqrt.pop %v2077
      %v2100 = vmul.f32 %v2099, %v2077
      %v2101 = vmul.f32 %v2100, %v2099
      %v2102 = vmul.f32 0.5, %v2101
      %v2103 = vsub.f32 1.5, %v2102
      %v2104 = vmul.f32 %v2099, %v2103
      %vm2105 = vweird.f32 %v2077
      %vm2106 = vweird.f32 %v2099
      %vm2107 = vmor %vm2105, %vm2106
      %v2108 = vsel %vm2107, %v2099, %v2104
      %v2109 = vrsqrt.pop %v2078
      %v2110 = vmul.f32 %v2109, %v2078
      %v2111 = vmul.f32 %v2110, %v2109
      %v2112 = vmul.f32 0.5, %v2111
      %v2113 = vsub.f32 1.5, %v2112
      %v2114 = vmul.f32 %v2109, %v2113
      %vm2115 = vweird.f32 %v2078
      %vm2116 = vweird.f32 %v2109
      %vm2117 = vmor %vm2115, %vm2116
      %v2118 = vsel %vm2117, %v2109, %v2114
      %v2119 = vmul.f32 %v2055, %v2088
      %v2120 = vmul.f32 %v2056, %v2098
      %v2121 = vmul.f32 %v2057, %v2108
      %v2122 = vmul.f32 %v2058, %v2118
      %v2124 = vperm.slane %v2041, 0
      %v2126 = vmul.f32 %v2119, %v2124
      %v2127 = vmul.f32 %v2120, %v2124
      %v2128 = vmul.f32 %v2121, %v2124
      %v2129 = vmul.f32 %v2122, %v2124
      %v2131 = vperm.slane %v2042, 0
      %v2133 = vadd.f32 %v2126, %v2131
      %v2134 = vadd.f32 %v2127, %v2131
      %v2135 = vadd.f32 %v2128, %v2131
      %v2136 = vadd.f32 %v2129, %v2131
      %2137 = vst [vmem:[#allocation2] sm:$0xff] %v2133
      %2138 = vst [vmem:[#allocation2 + $0x8] sm:$0xff] %v2134
      %2139 = vst [vmem:[#allocation2 + $0x10] sm:$0xff] %v2135
      %2140 = vst [vmem:[#allocation2 + $0x18] sm:$0xff] %v2136
      %p2141 = scmp.eq.s32.totalorder %s32, 1
      // Predicated region
      $region89: #{three_dl_bert_forward.5} parent=83 // pred_check
        %p2142 = pneg %p2141
      $region90: #{three_dl_bert_forward.5} parent=83 // pred_check_branch
        %2144 = sbr.rel (%p2142) target = $region92
      $region91: #{three_dl_bert_forward.5} parent=83 // pred_region
        %2145 = vst [vmem:[%s745] sm:$0xff] %v2133
        %2146 = vst [vmem:[%s745 + $0x8] sm:$0xff] %v2134
        %2147 = vst [vmem:[%s745 + $0x10] sm:$0xff] %v2135
        %2148 = vst [vmem:[%s745 + $0x18] sm:$0xff] %v2136
      $region92: #{three_dl_bert_forward.5} parent=83 // pred_fallthru
        _
      %p2149 = scmp.lt.s32.totalorder %s31, 1
      %s2150 = scalar_select %p2149, %s31, 1
      %s2151 = smul.addr %s2150, 4
      %s2152 = smul.addr %s2151, 8
      %s2153 = scalar_lea.vmem %s16, %s2152
      // Predicated region
      $region93: #{three_dl_bert_forward.5} parent=83 // pred_check
        %p2154 = pneg %p463
      $region94: #{three_dl_bert_forward.5} parent=83 // pred_check_branch
        %2156 = sbr.rel (%p2154) target = $region96
      $region95: #{three_dl_bert_forward.5} parent=83 // pred_region
        _
      $region96: #{three_dl_bert_forward.5} parent=83 // pred_fallthru
        _
    $region84: #{three_dl_bert_forward.5} parent=5 // pred_fallthru
      _
    %p2157 = scmp.le.s32.totalorder 2, %s22
    // Predicated region
    $region97: #{three_dl_bert_forward.5} parent=5 // pred_check
      %p2158 = pneg %p2157
    $region98: #{three_dl_bert_forward.5} parent=5 // pred_check_branch
      %2160 = sbr.rel (%p2158) target = $region100
    $region99: #{three_dl_bert_forward.5} parent=5 // pred_region
      %s2161 = ssub.s32 %s22, 2
      // Predicated region
      $region101: #{three_dl_bert_forward.5} parent=99 // pred_check
        %p2162 = pneg %p469
      $region102: #{three_dl_bert_forward.5} parent=99 // pred_check_branch
        %2164 = sbr.rel (%p2162) target = $region104
      $region103: #{three_dl_bert_forward.5} parent=99 // pred_region
        %p2165 = scmp.lt.s32.totalorder %s33, 1
        %s2166 = scalar_select %p2165, %s33, 1
        %s2167 = smul.addr %s2166, 4
        %s2168 = smul.addr %s2167, 8
        %s2169 = scalar_lea.vmem %s16, %s2168
      $region104: #{three_dl_bert_forward.5} parent=99 // pred_fallthru
        _
    $region100: #{three_dl_bert_forward.5} parent=5 // pred_fallthru
      _
  $region6: #{three_dl_bert_forward.5} parent=0 // loop_footer
    %s26 = sadd.s32 1, %s22
  $region7: #{three_dl_bert_forward.5} parent=0 // loop_footer_branch
    %21 = sbr.rel target = $region3
  $region8: #{three_dl_bert_forward.5} parent=0 // loop_exit
    _

</llo_original>
